<compile_context>
chip_gen: v5e
topology: v5e:2x2
jax: 0.10.0
libtpu: 0.0.40
codegen_flags: <defaults>
</compile_context>

<pallas_src>
import functools

import jax
import jax.numpy as jnp
from jax import lax
from jax.experimental import pallas as pl
from jax.experimental.pallas import tpu as pltpu


def _round_up(x, m):
    return (x + m - 1) // m * m


def _vmem_limit_bytes():
    """Generation-aware VMEM limit (review: do not hard-code 48 MiB)."""
    cap = 128 * 1024 * 1024
    try:
        cap = int(getattr(pltpu.get_tpu_info(), "vmem_capacity_bytes", cap))
    except Exception:
        pass
    # ~24 MiB headroom for compiler-internal scratch, never below 3/4 of cap.
    return max(cap - 24 * 1024 * 1024, (cap * 3) // 4)


def _dncnn_mid_kernel(x_ref, w_ref, o_ref, act_ref, *, H, W, Wp, n_mid):
    """Fused middle layers (C -> C, 3x3, ReLU) for one batch element.

    x_ref  : (Lp, C)          padded layer-0 activation frame (rows 0..H+1)
    w_ref  : (n_mid, 3C, 3C)  per-layer weights; rows = dy-major/cin-minor,
                              cols = dx-major/cout-minor
    o_ref  : (L, C)           activation after the last middle layer (rows 1..H)
    act_ref: (2, Lp, C)       ping-pong padded activation scratch (VMEM)
    """
    L = H * Wp
    C = x_ref.shape[-1]
    cdt = act_ref.dtype

    # Slot 0 <- padded input frame (pad rows/cols already zero from wrapper).
    act_ref[0, :, :] = x_ref[...]
    # Zero slot 1's top/bottom pad rows once; interior rows are rewritten every
    # layer and pad columns are masked below.
    zrow = jnp.zeros((Wp, C), cdt)
    act_ref[1, pl.ds(0, Wp), :] = zrow
    act_ref[1, pl.ds((H + 1) * Wp, Wp), :] = zrow

    # Column-validity mask in the flat (L, .) layout: frame column in [1, W].
    col = lax.broadcasted_iota(jnp.int32, (L, 1), 0) % Wp
    valid = jnp.logical_and(col >= 1, col <= W)

    def layer(i, carry):
        src = i % 2
        dst = 1 - src
        # dy-stacked "im2col": rows r-1 / r / r+1 of the padded frame,
        # channel-concatenated -> one (L, 3C) operand (dy K-stacked).
        v = jnp.concatenate(
            [act_ref[src, pl.ds(dy * Wp, L), :] for dy in range(3)], axis=-1)
        # ONE MXU matmul per layer: all three dx taps stacked along N.
        y_all = jnp.dot(v, w_ref[i], preferred_element_type=jnp.float32)
        # dx = 0/1/2 contributions computed at column c belong to output column
        # c+1 / c / c-1: combine with XLU rolls (wrap-around lands only in
        # masked/zeroed padding columns).
        y = (pltpu.roll(y_all[:, 0 * C:1 * C], 1, axis=0)
             + y_all[:, 1 * C:2 * C]
             + pltpu.roll(y_all[:, 2 * C:3 * C], L - 1, axis=0))
        y = jnp.maximum(y, 0.0)            # ReLU in f32 (v5e VPU has no bf16)
        y = jnp.where(valid, y, 0.0)       # keep padding columns exactly zero
        act_ref[dst, pl.ds(Wp, L), :] = y.astype(cdt)
        return carry

    lax.fori_loop(0, n_mid, layer, 0)

    # Interior rows (frame rows 1..H) of the final activation.
    o_ref[...] = act_ref[n_mid % 2, pl.ds(Wp, L), :]


def _prep_mid_weights(weights_mid, dtype):
    """HWIO (3,3,C,C) -> (3C, 3C): rows dy-major/cin-minor, cols dx-major/cout-minor."""
    mats = []
    for w in weights_mid:
        kh, kw, cin, cout = w.shape
        mats.append(jnp.transpose(w, (0, 2, 1, 3)).reshape(kh * cin, kw * cout))
    return jnp.stack(mats).astype(dtype)


def _conv2d_same(x_nhwc, w_hwio, dtype):
    return lax.conv_general_dilated(
        x_nhwc.astype(dtype), w_hwio.astype(dtype), (1, 1), "SAME",
        dimension_numbers=("NHWC", "HWIO", "NHWC"),
        preferred_element_type=jnp.float32)


def init_dncnn_weights(key, depth=20, n_filters=64, img_channels=3,
                       dtype=jnp.float32):
    """Kaiming-normal (a=0, mode='fan_in'), matching the PyTorch init (HWIO)."""
    chans = [img_channels] + [n_filters] * (depth - 1) + [img_channels]
    weights = []
    for i in range(depth):
        cin, cout = chans[i], chans[i + 1]
        key, sub = jax.random.split(key)
        std = (2.0 / (cin * 3 * 3)) ** 0.5
        weights.append(jax.random.normal(sub, (3, 3, cin, cout), dtype) * std)
    return weights


@functools.partial(jax.jit, static_argnames=("compute_dtype",))
def dncnn_forward(x_nchw, weights, compute_dtype=jnp.bfloat16):
    """DnCNN forward: return x - dncnn(x).

    Layer 0 and the final layer + residual stay in XLA (negligible FLOPs, worst
    MXU shapes) so the Pallas kernel's I/O are lane-dense 64-channel frames.
    """
    N, Cimg, H, W = x_nchw.shape
    depth = len(weights)
    C = weights[0].shape[-1]                   # n_filters
    n_mid = depth - 2
    assert n_mid >= 1

    Wp = _round_up(W + 2, 16)                  # padded frame width (sublane-aligned)
    Lp = (H + 2) * Wp
    L = H * Wp

    x_nhwc = jnp.transpose(x_nchw, (0, 2, 3, 1)).astype(jnp.float32)

    # ---- layer 0 (XLA): img_channels -> C, ReLU ----
    h0 = jnp.maximum(_conv2d_same(x_nhwc, weights[0], compute_dtype), 0.0)

    # Flat zero-padded frame (N, Lp, C) in the compute dtype.
    h0p = jnp.pad(h0, ((0, 0), (1, 1), (1, Wp - W - 1), (0, 0)))
    xf = h0p.reshape(N, Lp, C).astype(compute_dtype)

    wmid = _prep_mid_weights(weights[1:-1], compute_dtype)

    kernel = functools.partial(_dncnn_mid_kernel, H=H, W=W, Wp=Wp, n_mid=n_mid)
    act = pl.pallas_call(
        kernel,
        out_shape=jax.ShapeDtypeStruct((N, L, C), compute_dtype),
        grid_spec=pltpu.PrefetchScalarGridSpec(
            num_scalar_prefetch=0,
            grid=(N,),
            in_specs=[
                pl.BlockSpec((None, Lp, C), lambda n: (n, 0, 0)),
                pl.BlockSpec((n_mid, 3 * C, 3 * C), lambda n: (0, 0, 0)),
            ],
            out_specs=pl.BlockSpec((None, L, C), lambda n: (n, 0, 0)),
            scratch_shapes=[pltpu.VMEM((2, Lp, C), compute_dtype)],
        ),
        compiler_params=pltpu.CompilerParams(
            dimension_semantics=("parallel",),
            vmem_limit_bytes=_vmem_limit_bytes(),
        ),
    )(xf, wmid)

    # ---- last layer (XLA): C -> img_channels, no ReLU; fused residual ----
    act = act.reshape(N, H, Wp, C)[:, :, 1:W + 1, :]
    noise = _conv2d_same(act, weights[-1], compute_dtype)
    out = x_nhwc - noise
    return jnp.transpose(out, (0, 3, 1, 2)).astype(x_nchw.dtype)


def _ref_forward(x_nchw, weights, dtype):
    """XLA reference with the same rounding convention (dtype conv in, f32 accum)."""
    x_nhwc = jnp.transpose(x_nchw, (0, 2, 3, 1)).astype(jnp.float32)
    h = x_nhwc
    for i, w in enumerate(weights):
        h = _conv2d_same(h, w, dtype)
        if i < len(weights) - 1:
            h = jnp.maximum(h, 0.0)
    return jnp.transpose(x_nhwc - h, (0, 3, 1, 2)).astype(x_nchw.dtype)


if __name__ == "__main__":
    key = jax.random.PRNGKey(0)
    k_x, k_w = jax.random.split(key)

    depth, n_filters, img_channels = 20, 64, 3
    N, H, W = 2, 16, 16
    x = jax.random.normal(k_x, (N, img_channels, H, W), jnp.float32)
    weights = init_dncnn_weights(k_w, depth=depth, n_filters=n_filters,
                                 img_channels=img_channels)

    out = jax.block_until_ready(dncnn_forward(x, weights))
    assert out.shape == x.shape and out.dtype == x.dtype
    assert bool(jnp.all(jnp.isfinite(out)))

    # bf16 evaluation-order drift over 18 fused layers is chaotic, so anchor the
    # tolerance to the network's own bf16 quantization sensitivity (bf16 ref vs
    # f32 ref).  A real structural bug would produce O(1) errors and still fail.
    ref_bf16 = _ref_forward(x, weights, jnp.bfloat16)
    ref_f32 = _ref_forward(x, weights, jnp.float32)
    drift = float(jnp.max(jnp.abs(ref_bf16 - ref_f32)))
    max_err = float(jnp.max(jnp.abs(out - ref_bf16)))
    tol = 5e-2 + 4.0 * drift
    assert max_err < tol, (
        f"mismatch vs bf16 reference: max_err={max_err} (tol={tol}, "
        f"bf16-vs-f32 drift={drift})")
    print("KERNEL_OK")
</pallas_src>

<mosaic_0001>
module attributes {stable_mosaic.version = 11 : i64} {
  func.func @_dncnn_mid_kernel(%arg0: i32, %arg1: memref<1x576x64xbf16, #tpu.memory_space<vmem>>, %arg2: memref<18x192x192xbf16, #tpu.memory_space<vmem>>, %arg3: memref<1x512x64xbf16, #tpu.memory_space<vmem>>, %arg4: memref<2x576x64xbf16, #tpu.memory_space<vmem>>) attributes {dimension_semantics = [#tpu.dimension_semantics<parallel>], iteration_bounds = array<i64: 2>, scalar_prefetch = 0 : i64, scratch_operands = 1 : i64, tpu.core_type = #tpu.core_type<tc>, window_params = [{transform_indices = @transform_0, window_bounds = array<i64: 1, 576, 64>}, {pipeline_mode = #tpu.pipeline_mode<synchronous>, transform_indices = @transform_1, window_bounds = array<i64: 18, 192, 192>}, {transform_indices = @transform_2, window_bounds = array<i64: 1, 512, 64>}]} {
    %c0 = arith.constant 0 : index
    %c0_0 = arith.constant 0 : index
    %c0_1 = arith.constant 0 : index
    %0 = vector.load %arg1[%c0, %c0_0, %c0_1] : memref<1x576x64xbf16, #tpu.memory_space<vmem>>, vector<1x576x64xbf16>
    %1 = vector.shape_cast %0 : vector<1x576x64xbf16> to vector<576x64xbf16>
    %c0_2 = arith.constant 0 : index
    %c0_3 = arith.constant 0 : index
    %c0_4 = arith.constant 0 : index
    %2 = vector.load %arg4[%c0_2, %c0_3, %c0_4] : memref<2x576x64xbf16, #tpu.memory_space<vmem>>, vector<1x576x64xbf16>
    %3 = vector.shape_cast %2 : vector<1x576x64xbf16> to vector<576x64xbf16>
    %4 = vector.shape_cast %1 : vector<576x64xbf16> to vector<1x576x64xbf16>
    tpu.vector_store %arg4[%c0_2, %c0_3, %c0_4], %4 {strides = array<i32>} : memref<2x576x64xbf16, #tpu.memory_space<vmem>>, vector<1x576x64xbf16>,
    %cst = arith.constant 0.000000e+00 : bf16
    %5 = vector.broadcast %cst : bf16 to vector<32x64xbf16>
    %c1 = arith.constant 1 : index
    %c0_5 = arith.constant 0 : index
    %c0_6 = arith.constant 0 : index
    %6 = vector.load %arg4[%c1, %c0_5, %c0_6] : memref<2x576x64xbf16, #tpu.memory_space<vmem>>, vector<1x32x64xbf16>
    %7 = vector.shape_cast %6 : vector<1x32x64xbf16> to vector<32x64xbf16>
    %8 = vector.shape_cast %5 : vector<32x64xbf16> to vector<1x32x64xbf16>
    tpu.vector_store %arg4[%c1, %c0_5, %c0_6], %8 {strides = array<i32>} : memref<2x576x64xbf16, #tpu.memory_space<vmem>>, vector<1x32x64xbf16>,
    %c1_7 = arith.constant 1 : index
    %c544 = arith.constant 544 : index
    %c0_8 = arith.constant 0 : index
    %9 = vector.load %arg4[%c1_7, %c544, %c0_8] : memref<2x576x64xbf16, #tpu.memory_space<vmem>>, vector<1x32x64xbf16>
    %10 = vector.shape_cast %9 : vector<1x32x64xbf16> to vector<32x64xbf16>
    %11 = vector.shape_cast %5 : vector<32x64xbf16> to vector<1x32x64xbf16>
    tpu.vector_store %arg4[%c1_7, %c544, %c0_8], %11 {strides = array<i32>} : memref<2x576x64xbf16, #tpu.memory_space<vmem>>, vector<1x32x64xbf16>,
    %12 = tpu.iota {dimensions = array<i32: 0>} : vector<512x1xi32>
    %c32_i32 = arith.constant 32 : i32
    %c0_i32 = arith.constant 0 : i32
    %13 = arith.cmpi eq, %c32_i32, %c0_i32 : i32
    %c1_i32 = arith.constant 1 : i32
    %14 = arith.select %13, %c1_i32, %c32_i32 : i32
    %15 = vector.broadcast %14 : i32 to vector<512x1xi32>
    %16 = arith.remsi %12, %15 : vector<512x1xi32>
    %c0_i32_9 = arith.constant 0 : i32
    %17 = vector.broadcast %c0_i32_9 : i32 to vector<512x1xi32>
    %18 = arith.cmpi ne, %16, %17 : vector<512x1xi32>
    %c0_i32_10 = arith.constant 0 : i32
    %19 = vector.broadcast %c0_i32_10 : i32 to vector<512x1xi32>
    %20 = arith.cmpi slt, %16, %19 : vector<512x1xi32>
    %c0_i32_11 = arith.constant 0 : i32
    %21 = arith.cmpi slt, %14, %c0_i32_11 : i32
    %22 = vector.broadcast %21 : i1 to vector<512x1xi1>
    %23 = vector.broadcast %22 : vector<512x1xi1> to vector<512x1xi1>
    %24 = arith.xori %20, %23 : vector<512x1xi1>
    %25 = arith.andi %24, %18 : vector<512x1xi1>
    %26 = vector.broadcast %14 : i32 to vector<512x1xi32>
    %27 = arith.addi %16, %26 : vector<512x1xi32>
    %28 = arith.select %25, %27, %16 : vector<512x1xi1>, vector<512x1xi32>
    %c1_i32_12 = arith.constant 1 : i32
    %29 = vector.broadcast %c1_i32_12 : i32 to vector<512x1xi32>
    %30 = arith.cmpi sge, %28, %29 : vector<512x1xi32>
    %c16_i32 = arith.constant 16 : i32
    %31 = vector.broadcast %c16_i32 : i32 to vector<512x1xi32>
    %32 = arith.cmpi sle, %28, %31 : vector<512x1xi32>
    %33 = arith.andi %30, %32 : vector<512x1xi1>
    %c0_i32_13 = arith.constant 0 : i32
    %c18_i32 = arith.constant 18 : i32
    %34 = arith.addi %c0_i32_13, %c18_i32 : i32
    %c1_i32_14 = arith.constant 1 : i32
    scf.for %arg5 = %c0_i32_13 to %34 step %c1_i32_14  : i32 {
      %c2_i32 = arith.constant 2 : i32
      %c0_i32_21 = arith.constant 0 : i32
      %40 = arith.cmpi eq, %c2_i32, %c0_i32_21 : i32
      %c1_i32_22 = arith.constant 1 : i32
      %41 = arith.select %40, %c1_i32_22, %c2_i32 : i32
      %42 = arith.remsi %arg5, %41 : i32
      %c0_i32_23 = arith.constant 0 : i32
      %43 = arith.cmpi ne, %42, %c0_i32_23 : i32
      %c0_i32_24 = arith.constant 0 : i32
      %44 = arith.cmpi slt, %42, %c0_i32_24 : i32
      %c0_i32_25 = arith.constant 0 : i32
      %45 = arith.cmpi slt, %41, %c0_i32_25 : i32
      %46 = arith.xori %44, %45 : i1
      %47 = arith.andi %46, %43 : i1
      %48 = arith.addi %42, %41 : i32
      %49 = arith.select %47, %48, %42 : i32
      %c1_i32_26 = arith.constant 1 : i32
      %50 = arith.subi %c1_i32_26, %49 : i32
      %51 = arith.index_cast %49 : i32 to index
      %c0_27 = arith.constant 0 : index
      %c0_28 = arith.constant 0 : index
      %52 = vector.load %arg4[%51, %c0_27, %c0_28] : memref<2x576x64xbf16, #tpu.memory_space<vmem>>, vector<1x512x64xbf16>
      %53 = vector.shape_cast %52 : vector<1x512x64xbf16> to vector<512x64xbf16>
      %54 = arith.index_cast %49 : i32 to index
      %c32_29 = arith.constant 32 : index
      %c0_30 = arith.constant 0 : index
      %55 = vector.load %arg4[%54, %c32_29, %c0_30] : memref<2x576x64xbf16, #tpu.memory_space<vmem>>, vector<1x512x64xbf16>
      %56 = vector.shape_cast %55 : vector<1x512x64xbf16> to vector<512x64xbf16>
      %57 = arith.index_cast %49 : i32 to index
      %c64 = arith.constant 64 : index
      %c0_31 = arith.constant 0 : index
      %58 = vector.load %arg4[%57, %c64, %c0_31] : memref<2x576x64xbf16, #tpu.memory_space<vmem>>, vector<1x512x64xbf16>
      %59 = vector.shape_cast %58 : vector<1x512x64xbf16> to vector<512x64xbf16>
      %60 = tpu.concatenate %53, %56, %59 in 1 : vector<512x64xbf16>, vector<512x64xbf16>, vector<512x64xbf16> -> vector<512x192xbf16>
      %61 = arith.index_cast %arg5 : i32 to index
      %c0_32 = arith.constant 0 : index
      %c0_33 = arith.constant 0 : index
      %62 = vector.load %arg2[%61, %c0_32, %c0_33] : memref<18x192x192xbf16, #tpu.memory_space<vmem>>, vector<1x192x192xbf16>
      %63 = vector.shape_cast %62 : vector<1x192x192xbf16> to vector<192x192xbf16>
      %cst_34 = arith.constant dense<0.000000e+00> : vector<512x192xf32>
      %64 = tpu.matmul %60, %63, %cst_34 {dimension_numbers = #tpu.dot_dimension_numbers<[1], [0], [0], [1], [0, 0, 1, 1], [], []>} : vector<512x192xbf16>, vector<192x192xbf16>, vector<512x192xf32> -> vector<512x192xf32>
      %65 = vector.extract_strided_slice %64 {offsets = [0, 0], sizes = [512, 64], strides = [1, 1]} : vector<512x192xf32> to vector<512x64xf32>
      %c1_i32_35 = arith.constant 1 : i32
      %66 = tpu.dynamic_rotate %65 by %c1_i32_35 dim 0 : vector<512x64xf32>, i32 -> vector<512x64xf32>
      %67 = vector.extract_strided_slice %64 {offsets = [0, 64], sizes = [512, 64], strides = [1, 1]} : vector<512x192xf32> to vector<512x64xf32>
      %68 = arith.addf %66, %67 : vector<512x64xf32>
      %69 = vector.extract_strided_slice %64 {offsets = [0, 128], sizes = [512, 64], strides = [1, 1]} : vector<512x192xf32> to vector<512x64xf32>
      %c511_i32 = arith.constant 511 : i32
      %70 = tpu.dynamic_rotate %69 by %c511_i32 dim 0 : vector<512x64xf32>, i32 -> vector<512x64xf32>
      %71 = arith.addf %68, %70 : vector<512x64xf32>
      %cst_36 = arith.constant 0.000000e+00 : f32
      %72 = vector.broadcast %cst_36 : f32 to vector<512x64xf32>
      %73 = arith.maximumf %71, %72 : vector<512x64xf32>
      %cst_37 = arith.constant 0.000000e+00 : f32
      %74 = vector.shape_cast %33 : vector<512x1xi1> to vector<512x1xi1>
      %75 = vector.broadcast %74 : vector<512x1xi1> to vector<512x64xi1>
      %76 = vector.broadcast %cst_37 : f32 to vector<512x64xf32>
      %77 = arith.select %75, %73, %76 : vector<512x64xi1>, vector<512x64xf32>
      %78 = arith.truncf %77 : vector<512x64xf32> to vector<512x64xbf16>
      %79 = arith.index_cast %50 : i32 to index
      %c32_38 = arith.constant 32 : index
      %c0_39 = arith.constant 0 : index
      %80 = vector.load %arg4[%79, %c32_38, %c0_39] : memref<2x576x64xbf16, #tpu.memory_space<vmem>>, vector<1x512x64xbf16>
      %81 = vector.shape_cast %80 : vector<1x512x64xbf16> to vector<512x64xbf16>
      %82 = vector.shape_cast %78 : vector<512x64xbf16> to vector<1x512x64xbf16>
      tpu.vector_store %arg4[%79, %c32_38, %c0_39], %82 {strides = array<i32>} : memref<2x576x64xbf16, #tpu.memory_space<vmem>>, vector<1x512x64xbf16>,
    }
    %c18_i32_15 = arith.constant 18 : i32
    %c0_16 = arith.constant 0 : index
    %c32 = arith.constant 32 : index
    %c0_17 = arith.constant 0 : index
    %35 = vector.load %arg4[%c0_16, %c32, %c0_17] : memref<2x576x64xbf16, #tpu.memory_space<vmem>>, vector<1x512x64xbf16>
    %36 = vector.shape_cast %35 : vector<1x512x64xbf16> to vector<512x64xbf16>
    %c0_18 = arith.constant 0 : index
    %c0_19 = arith.constant 0 : index
    %c0_20 = arith.constant 0 : index
    %37 = vector.load %arg3[%c0_18, %c0_19, %c0_20] : memref<1x512x64xbf16, #tpu.memory_space<vmem>>, vector<1x512x64xbf16>
    %38 = vector.shape_cast %37 : vector<1x512x64xbf16> to vector<512x64xbf16>
    %39 = vector.shape_cast %36 : vector<512x64xbf16> to vector<1x512x64xbf16>
    tpu.vector_store %arg3[%c0_18, %c0_19, %c0_20], %39 {strides = array<i32>} : memref<1x512x64xbf16, #tpu.memory_space<vmem>>, vector<1x512x64xbf16>,
    return
  }
  func.func @transform_0(%arg0: i32) -> (i32, i32, i32) {
    %c0_i32 = arith.constant 0 : i32
    %c0_i32_0 = arith.constant 0 : i32
    %c0_i32_1 = arith.constant 0 : i32
    return %arg0, %c0_i32, %c0_i32_0 : i32, i32, i32
  }
  func.func @transform_1(%arg0: i32) -> (i32, i32, i32) {
    %c0_i32 = arith.constant 0 : i32
    %c0_i32_0 = arith.constant 0 : i32
    %c0_i32_1 = arith.constant 0 : i32
    %c0_i32_2 = arith.constant 0 : i32
    return %c0_i32, %c0_i32_0, %c0_i32_1 : i32, i32, i32
  }
  func.func @transform_2(%arg0: i32) -> (i32, i32, i32) {
    %c0_i32 = arith.constant 0 : i32
    %c0_i32_0 = arith.constant 0 : i32
    %c0_i32_1 = arith.constant 0 : i32
    return %arg0, %c0_i32, %c0_i32_0 : i32, i32, i32
  }
}

</mosaic_0001>

<llo_original>
// kernel: dncnn_forward.1
$region0: #{dncnn_forward.1}
  #allocation0 [shape = 'u32[]', space=smem, size = 0x4, offset = 0x4, fixed_abs, tag = 'smem constant byte address 0x4 - core index']
  #allocation1 [shape = 'u32[72,128]{1,0:T(1,128)}', space=vmem, size = 0x9000, scoped, tag = 'internal scratch']
  #allocation2 [shape = 'bf16[2,576,64]{2,1,0:T(8,128)(2,1)}', space=vmem, size = 0x48000, scoped, tag = 'scratch operand']
  %s0 = inlined_call_operand.vmem [shape: bf16[2,576,64], index: 0, kind: input, shape index: {}]
  %s1 = inlined_call_operand.vmem [shape: bf16[18,192,192], index: 1, kind: input, shape index: {}]
  %s2 = inlined_call_operand.vmem [shape: bf16[2,512,64], index: 2, kind: output, shape index: {}]
  %s3 = sld [smem:[#allocation0]]
  $region48: #{dncnn_forward.1} parent=0
    _
  %s5 = ssub.s32 1, %s3
  %s6 = scalar_select 0, %s5, %s3
  loop: start=0, step=1, limit=4
  $region2: #{dncnn_forward.1} parent=0 // loop_pre_header
    _
  $region3: #{dncnn_forward.1} parent=0 // loop_header
    %s8 = sphi 0, %s12
    %p9 = scmp.ge.s32.totalorder %s8, 4
    %s18 = sphi 0, %s20
    %s21 = sphi 0, %s18
    %s22 = sphi 0, %s21
    %s38 = sphi 0, %s22
    %s42 = sphi 0, %s42
    %s44 = sphi 0, %s42
    %s45 = sphi 0, %s44
    %s59 = sphi 0, %s45
    %s65 = sphi 0, %s67
    %s68 = sphi 0, %s65
    %s69 = sphi 0, %s68
    %s85 = sphi 0, %s69
  $region4: #{dncnn_forward.1} parent=0 // loop_header_branch
    %11 = sbr.rel (%p9) target = $region8
  $region5: #{dncnn_forward.1} parent=0 // loop_body
    %s13 = ssub.s32 %s8, 1
    %s14 = ssub.s32 %s8, 2
    %s15 = sadd.s32 %s8, 1
    %s16 = ssub.s32 %s8, %s15
    %p17 = scmp.eq.s32.totalorder %s16, 0
    %s19 = sadd.s32 %s18, 1
    %s20 = scalar_select %p17, %s18, %s19
    %p23 = pneg %p17
    %p24 = scmp.eq.s32.totalorder %s8, 1
    %p25 = por %p23, %p24
    %p26 = scmp.ne.s32.totalorder %s18, %s21
    %p27 = scmp.eq.s32.totalorder %s8, 0
    %p28 = por %p26, %p27
    %p29 = scmp.ne.s32.totalorder %s18, %s21
    %p30 = scmp.eq.s32.totalorder %s13, 1
    %p31 = por %p29, %p30
    %p32 = scmp.ne.s32.totalorder %s21, %s22
    %p33 = scmp.eq.s32.totalorder %s13, 0
    %p34 = por %p32, %p33
    %p35 = scmp.ne.s32.totalorder %s21, %s22
    %p36 = scmp.eq.s32.totalorder %s14, 1
    %p37 = por %p35, %p36
    %p39 = scmp.ne.s32.totalorder %s22, %s38
    %p40 = scmp.eq.s32.totalorder %s14, 0
    %p41 = por %p39, %p40
    %s43 = sadd.s32 %s42, 1
    %p46 = scmp.eq.s32.totalorder %s8, 1
    %p47 = scmp.ne.s32.totalorder %s42, %s44
    %p48 = scmp.eq.s32.totalorder %s8, 0
    %p49 = por %p47, %p48
    %p50 = scmp.ne.s32.totalorder %s42, %s44
    %p51 = scmp.eq.s32.totalorder %s13, 1
    %p52 = por %p50, %p51
    %p53 = scmp.ne.s32.totalorder %s44, %s45
    %p54 = scmp.eq.s32.totalorder %s13, 0
    %p55 = por %p53, %p54
    %p56 = scmp.ne.s32.totalorder %s44, %s45
    %p57 = scmp.eq.s32.totalorder %s14, 1
    %p58 = por %p56, %p57
    %p60 = scmp.ne.s32.totalorder %s45, %s59
    %p61 = scmp.eq.s32.totalorder %s14, 0
    %p62 = por %p60, %p61
    %s63 = ssub.s32 %s8, %s15
    %p64 = scmp.eq.s32.totalorder %s63, 0
    %s66 = sadd.s32 %s65, 1
    %s67 = scalar_select %p64, %s65, %s66
    %p70 = pneg %p64
    %p71 = scmp.eq.s32.totalorder %s8, 1
    %p72 = por %p70, %p71
    %p73 = scmp.ne.s32.totalorder %s65, %s68
    %p74 = scmp.eq.s32.totalorder %s8, 0
    %p75 = por %p73, %p74
    %p76 = scmp.ne.s32.totalorder %s65, %s68
    %p77 = scmp.eq.s32.totalorder %s13, 1
    %p78 = por %p76, %p77
    %p79 = scmp.ne.s32.totalorder %s68, %s69
    %p80 = scmp.eq.s32.totalorder %s13, 0
    %p81 = por %p79, %p80
    %p82 = scmp.ne.s32.totalorder %s68, %s69
    %p83 = scmp.eq.s32.totalorder %s14, 1
    %p84 = por %p82, %p83
    %p86 = scmp.ne.s32.totalorder %s69, %s85
    %p87 = scmp.eq.s32.totalorder %s14, 0
    %p88 = por %p86, %p87
    %p89 = scmp.le.s32.totalorder 1, %s8
    %p90 = scmp.lt.s32.totalorder %s8, 3
    %p91 = pnand %p89, %p90
    %p92 = pneg %p91
    // Predicated region
    $region9: #{dncnn_forward.1} parent=5 // pred_check
      _
    $region10: #{dncnn_forward.1} parent=5 // pred_check_branch
      %94 = sbr.rel (%p91) target = $region12
    $region11: #{dncnn_forward.1} parent=5 // pred_region
      %s95 = ssub.s32 %s8, 1
      // Predicated region
      $region13: #{dncnn_forward.1} parent=11 // pred_check
        %p96 = pneg %p55
      $region14: #{dncnn_forward.1} parent=11 // pred_check_branch
        %98 = sbr.rel (%p96) target = $region16
      $region15: #{dncnn_forward.1} parent=11 // pred_region
        _
      $region16: #{dncnn_forward.1} parent=11 // pred_fallthru
        _
    $region12: #{dncnn_forward.1} parent=5 // pred_fallthru
      _
    %p99 = scmp.lt.s32.totalorder %s8, 2
    // Predicated region
    $region17: #{dncnn_forward.1} parent=5 // pred_check
      %p100 = pneg %p99
    $region18: #{dncnn_forward.1} parent=5 // pred_check_branch
      %102 = sbr.rel (%p100) target = $region20
    $region19: #{dncnn_forward.1} parent=5 // pred_region
      // Predicated region
      $region21: #{dncnn_forward.1} parent=19 // pred_check
        %p103 = pneg %p28
      $region22: #{dncnn_forward.1} parent=19 // pred_check_branch
        %105 = sbr.rel (%p103) target = $region24
      $region23: #{dncnn_forward.1} parent=19 // pred_region
        %p106 = scmp.lt.s32.totalorder %s8, 1
        %s107 = scalar_select %p106, %s8, 1
        %s108 = smul.addr %s107, 72
        %s109 = smul.addr %s108, 4
        %s110 = scalar_lea.vmem %s0, %s109
      $region24: #{dncnn_forward.1} parent=19 // pred_fallthru
        _
    $region20: #{dncnn_forward.1} parent=5 // pred_fallthru
      _
    %p111 = scmp.le.s32.totalorder 1, %s8
    %p112 = scmp.lt.s32.totalorder %s8, 3
    %p113 = pnand %p111, %p112
    %p114 = pneg %p113
    // Predicated region
    $region25: #{dncnn_forward.1} parent=5 // pred_check
      _
    $region26: #{dncnn_forward.1} parent=5 // pred_check_branch
      %116 = sbr.rel (%p113) target = $region28
    $region27: #{dncnn_forward.1} parent=5 // pred_region
      %s117 = ssub.s32 %s8, 1
      %p118 = scmp.lt.s32.totalorder %s13, 1
      %s119 = scalar_select %p118, %s13, 1
      %s120 = smul.addr %s119, 72
      %s121 = smul.addr %s120, 4
      %s122 = scalar_lea.vmem %s0, %s121
      %p123 = pneg %p34
      %p124 = pneg %p31
      %p125 = pneg %p55
      %p126 = pneg %p52
      %p127 = pneg %p81
      %p128 = pneg %p78
      %p129 = scmp.lt.s32.totalorder %s13, 1
      %s130 = scalar_select %p129, %s13, 1
      %s131 = smul.addr %s130, 64
      %s132 = smul.addr %s131, 4
      %s133 = scalar_lea.vmem %s2, %s132
      %p134 = scmp.lt.s32.totalorder %s13, 1
      %s135 = scalar_select %p134, %s13, 1
      %s136 = smul.addr %s135, 72
      %s137 = smul.addr %s136, 4
      %s138 = scalar_lea.vmem %s0, %s137
      %p139 = scmp.lt.s32.totalorder %s13, 1
      %s140 = scalar_select %p139, %s13, 1
      %s141 = smul.addr %s140, 64
      %s142 = smul.addr %s141, 4
      %s143 = scalar_lea.vmem %s2, %s142
      %v145 = vld [vmem:[%s138] sm:$0xf]
      %v146 = vld [vmem:[%s138 + $0x4] sm:$0xf]
      %v147 = vld [vmem:[%s138 + $0x8] sm:$0xf]
      %v148 = vld [vmem:[%s138 + $0xc] sm:$0xf]
      %v149 = vld [vmem:[%s138 + $0x10] sm:$0xf]
      %v150 = vld [vmem:[%s138 + $0x14] sm:$0xf]
      %v151 = vld [vmem:[%s138 + $0x18] sm:$0xf]
      %v152 = vld [vmem:[%s138 + $0x1c] sm:$0xf]
      %v153 = vld [vmem:[%s138 + $0x20] sm:$0xf]
      %v154 = vld [vmem:[%s138 + $0x24] sm:$0xf]
      %v155 = vld [vmem:[%s138 + $0x28] sm:$0xf]
      %v156 = vld [vmem:[%s138 + $0x2c] sm:$0xf]
      %v157 = vld [vmem:[%s138 + $0x30] sm:$0xf]
      %v158 = vld [vmem:[%s138 + $0x34] sm:$0xf]
      %v159 = vld [vmem:[%s138 + $0x38] sm:$0xf]
      %v160 = vld [vmem:[%s138 + $0x3c] sm:$0xf]
      %v161 = vld [vmem:[%s138 + $0x40] sm:$0xf]
      %v162 = vld [vmem:[%s138 + $0x44] sm:$0xf]
      %v163 = vld [vmem:[%s138 + $0x48] sm:$0xf]
      %v164 = vld [vmem:[%s138 + $0x4c] sm:$0xf]
      %v165 = vld [vmem:[%s138 + $0x50] sm:$0xf]
      %v166 = vld [vmem:[%s138 + $0x54] sm:$0xf]
      %v167 = vld [vmem:[%s138 + $0x58] sm:$0xf]
      %v168 = vld [vmem:[%s138 + $0x5c] sm:$0xf]
      %v169 = vld [vmem:[%s138 + $0x60] sm:$0xf]
      %v170 = vld [vmem:[%s138 + $0x64] sm:$0xf]
      %v171 = vld [vmem:[%s138 + $0x68] sm:$0xf]
      %v172 = vld [vmem:[%s138 + $0x6c] sm:$0xf]
      %v173 = vld [vmem:[%s138 + $0x70] sm:$0xf]
      %v174 = vld [vmem:[%s138 + $0x74] sm:$0xf]
      %v175 = vld [vmem:[%s138 + $0x78] sm:$0xf]
      %v176 = vld [vmem:[%s138 + $0x7c] sm:$0xf]
      %v177 = vld [vmem:[%s138 + $0x80] sm:$0xf]
      %v178 = vld [vmem:[%s138 + $0x84] sm:$0xf]
      %v179 = vld [vmem:[%s138 + $0x88] sm:$0xf]
      %v180 = vld [vmem:[%s138 + $0x8c] sm:$0xf]
      %v181 = vld [vmem:[%s138 + $0x90] sm:$0xf]
      %v182 = vld [vmem:[%s138 + $0x94] sm:$0xf]
      %v183 = vld [vmem:[%s138 + $0x98] sm:$0xf]
      %v184 = vld [vmem:[%s138 + $0x9c] sm:$0xf]
      %v185 = vld [vmem:[%s138 + $0xa0] sm:$0xf]
      %v186 = vld [vmem:[%s138 + $0xa4] sm:$0xf]
      %v187 = vld [vmem:[%s138 + $0xa8] sm:$0xf]
      %v188 = vld [vmem:[%s138 + $0xac] sm:$0xf]
      %v189 = vld [vmem:[%s138 + $0xb0] sm:$0xf]
      %v190 = vld [vmem:[%s138 + $0xb4] sm:$0xf]
      %v191 = vld [vmem:[%s138 + $0xb8] sm:$0xf]
      %v192 = vld [vmem:[%s138 + $0xbc] sm:$0xf]
      %v193 = vld [vmem:[%s138 + $0xc0] sm:$0xf]
      %v194 = vld [vmem:[%s138 + $0xc4] sm:$0xf]
      %v195 = vld [vmem:[%s138 + $0xc8] sm:$0xf]
      %v196 = vld [vmem:[%s138 + $0xcc] sm:$0xf]
      %v197 = vld [vmem:[%s138 + $0xd0] sm:$0xf]
      %v198 = vld [vmem:[%s138 + $0xd4] sm:$0xf]
      %v199 = vld [vmem:[%s138 + $0xd8] sm:$0xf]
      %v200 = vld [vmem:[%s138 + $0xdc] sm:$0xf]
      %v201 = vld [vmem:[%s138 + $0xe0] sm:$0xf]
      %v202 = vld [vmem:[%s138 + $0xe4] sm:$0xf]
      %v203 = vld [vmem:[%s138 + $0xe8] sm:$0xf]
      %v204 = vld [vmem:[%s138 + $0xec] sm:$0xf]
      %v205 = vld [vmem:[%s138 + $0xf0] sm:$0xf]
      %v206 = vld [vmem:[%s138 + $0xf4] sm:$0xf]
      %v207 = vld [vmem:[%s138 + $0xf8] sm:$0xf]
      %v208 = vld [vmem:[%s138 + $0xfc] sm:$0xf]
      %v209 = vld [vmem:[%s138 + $0x100] sm:$0xf]
      %v210 = vld [vmem:[%s138 + $0x104] sm:$0xf]
      %v211 = vld [vmem:[%s138 + $0x108] sm:$0xf]
      %v212 = vld [vmem:[%s138 + $0x10c] sm:$0xf]
      %v213 = vld [vmem:[%s138 + $0x110] sm:$0xf]
      %v214 = vld [vmem:[%s138 + $0x114] sm:$0xf]
      %v215 = vld [vmem:[%s138 + $0x118] sm:$0xf]
      %v216 = vld [vmem:[%s138 + $0x11c] sm:$0xf]
      %vm217 = vcmask 519168
      %218 = vst.msk [vmem:[#allocation2] sm:$0xf] %vm217, %v145
      %219 = vst.msk [vmem:[#allocation2 + $0x4] sm:$0xf] %vm217, %v146
      %220 = vst.msk [vmem:[#allocation2 + $0x8] sm:$0xf] %vm217, %v147
      %221 = vst.msk [vmem:[#allocation2 + $0xc] sm:$0xf] %vm217, %v148
      %222 = vst.msk [vmem:[#allocation2 + $0x10] sm:$0xf] %vm217, %v149
      %223 = vst.msk [vmem:[#allocation2 + $0x14] sm:$0xf] %vm217, %v150
      %224 = vst.msk [vmem:[#allocation2 + $0x18] sm:$0xf] %vm217, %v151
      %225 = vst.msk [vmem:[#allocation2 + $0x1c] sm:$0xf] %vm217, %v152
      %226 = vst.msk [vmem:[#allocation2 + $0x20] sm:$0xf] %vm217, %v153
      %227 = vst.msk [vmem:[#allocation2 + $0x24] sm:$0xf] %vm217, %v154
      %228 = vst.msk [vmem:[#allocation2 + $0x28] sm:$0xf] %vm217, %v155
      %229 = vst.msk [vmem:[#allocation2 + $0x2c] sm:$0xf] %vm217, %v156
      %230 = vst.msk [vmem:[#allocation2 + $0x30] sm:$0xf] %vm217, %v157
      %231 = vst.msk [vmem:[#allocation2 + $0x34] sm:$0xf] %vm217, %v158
      %232 = vst.msk [vmem:[#allocation2 + $0x38] sm:$0xf] %vm217, %v159
      %233 = vst.msk [vmem:[#allocation2 + $0x3c] sm:$0xf] %vm217, %v160
      %234 = vst.msk [vmem:[#allocation2 + $0x40] sm:$0xf] %vm217, %v161
      %235 = vst.msk [vmem:[#allocation2 + $0x44] sm:$0xf] %vm217, %v162
      %236 = vst.msk [vmem:[#allocation2 + $0x48] sm:$0xf] %vm217, %v163
      %237 = vst.msk [vmem:[#allocation2 + $0x4c] sm:$0xf] %vm217, %v164
      %238 = vst.msk [vmem:[#allocation2 + $0x50] sm:$0xf] %vm217, %v165
      %239 = vst.msk [vmem:[#allocation2 + $0x54] sm:$0xf] %vm217, %v166
      %240 = vst.msk [vmem:[#allocation2 + $0x58] sm:$0xf] %vm217, %v167
      %241 = vst.msk [vmem:[#allocation2 + $0x5c] sm:$0xf] %vm217, %v168
      %242 = vst.msk [vmem:[#allocation2 + $0x60] sm:$0xf] %vm217, %v169
      %243 = vst.msk [vmem:[#allocation2 + $0x64] sm:$0xf] %vm217, %v170
      %244 = vst.msk [vmem:[#allocation2 + $0x68] sm:$0xf] %vm217, %v171
      %245 = vst.msk [vmem:[#allocation2 + $0x6c] sm:$0xf] %vm217, %v172
      %246 = vst.msk [vmem:[#allocation2 + $0x70] sm:$0xf] %vm217, %v173
      %247 = vst.msk [vmem:[#allocation2 + $0x74] sm:$0xf] %vm217, %v174
      %248 = vst.msk [vmem:[#allocation2 + $0x78] sm:$0xf] %vm217, %v175
      %249 = vst.msk [vmem:[#allocation2 + $0x7c] sm:$0xf] %vm217, %v176
      %250 = vst.msk [vmem:[#allocation2 + $0x80] sm:$0xf] %vm217, %v177
      %251 = vst.msk [vmem:[#allocation2 + $0x84] sm:$0xf] %vm217, %v178
      %252 = vst.msk [vmem:[#allocation2 + $0x88] sm:$0xf] %vm217, %v179
      %253 = vst.msk [vmem:[#allocation2 + $0x8c] sm:$0xf] %vm217, %v180
      %254 = vst.msk [vmem:[#allocation2 + $0x90] sm:$0xf] %vm217, %v181
      %255 = vst.msk [vmem:[#allocation2 + $0x94] sm:$0xf] %vm217, %v182
      %256 = vst.msk [vmem:[#allocation2 + $0x98] sm:$0xf] %vm217, %v183
      %257 = vst.msk [vmem:[#allocation2 + $0x9c] sm:$0xf] %vm217, %v184
      %258 = vst.msk [vmem:[#allocation2 + $0xa0] sm:$0xf] %vm217, %v185
      %259 = vst.msk [vmem:[#allocation2 + $0xa4] sm:$0xf] %vm217, %v186
      %260 = vst.msk [vmem:[#allocation2 + $0xa8] sm:$0xf] %vm217, %v187
      %261 = vst.msk [vmem:[#allocation2 + $0xac] sm:$0xf] %vm217, %v188
      %262 = vst.msk [vmem:[#allocation2 + $0xb0] sm:$0xf] %vm217, %v189
      %263 = vst.msk [vmem:[#allocation2 + $0xb4] sm:$0xf] %vm217, %v190
      %264 = vst.msk [vmem:[#allocation2 + $0xb8] sm:$0xf] %vm217, %v191
      %265 = vst.msk [vmem:[#allocation2 + $0xbc] sm:$0xf] %vm217, %v192
      %266 = vst.msk [vmem:[#allocation2 + $0xc0] sm:$0xf] %vm217, %v193
      %267 = vst.msk [vmem:[#allocation2 + $0xc4] sm:$0xf] %vm217, %v194
      %268 = vst.msk [vmem:[#allocation2 + $0xc8] sm:$0xf] %vm217, %v195
      %269 = vst.msk [vmem:[#allocation2 + $0xcc] sm:$0xf] %vm217, %v196
      %270 = vst.msk [vmem:[#allocation2 + $0xd0] sm:$0xf] %vm217, %v197
      %271 = vst.msk [vmem:[#allocation2 + $0xd4] sm:$0xf] %vm217, %v198
      %272 = vst.msk [vmem:[#allocation2 + $0xd8] sm:$0xf] %vm217, %v199
      %273 = vst.msk [vmem:[#allocation2 + $0xdc] sm:$0xf] %vm217, %v200
      %274 = vst.msk [vmem:[#allocation2 + $0xe0] sm:$0xf] %vm217, %v201
      %275 = vst.msk [vmem:[#allocation2 + $0xe4] sm:$0xf] %vm217, %v202
      %276 = vst.msk [vmem:[#allocation2 + $0xe8] sm:$0xf] %vm217, %v203
      %277 = vst.msk [vmem:[#allocation2 + $0xec] sm:$0xf] %vm217, %v204
      %278 = vst.msk [vmem:[#allocation2 + $0xf0] sm:$0xf] %vm217, %v205
      %279 = vst.msk [vmem:[#allocation2 + $0xf4] sm:$0xf] %vm217, %v206
      %280 = vst.msk [vmem:[#allocation2 + $0xf8] sm:$0xf] %vm217, %v207
      %281 = vst.msk [vmem:[#allocation2 + $0xfc] sm:$0xf] %vm217, %v208
      %282 = vst.msk [vmem:[#allocation2 + $0x100] sm:$0xf] %vm217, %v209
      %283 = vst.msk [vmem:[#allocation2 + $0x104] sm:$0xf] %vm217, %v210
      %284 = vst.msk [vmem:[#allocation2 + $0x108] sm:$0xf] %vm217, %v211
      %285 = vst.msk [vmem:[#allocation2 + $0x10c] sm:$0xf] %vm217, %v212
      %286 = vst.msk [vmem:[#allocation2 + $0x110] sm:$0xf] %vm217, %v213
      %287 = vst.msk [vmem:[#allocation2 + $0x114] sm:$0xf] %vm217, %v214
      %288 = vst.msk [vmem:[#allocation2 + $0x118] sm:$0xf] %vm217, %v215
      %289 = vst.msk [vmem:[#allocation2 + $0x11c] sm:$0xf] %vm217, %v216
      %s290 = scalar_lea.vmem [#allocation2], 288
      %291 = vst.msk [vmem:[%s290] sm:$0xf] %vm217, 0
      %292 = vst.msk [vmem:[%s290 + $0x4] sm:$0xf] %vm217, 0
      %293 = vst.msk [vmem:[%s290 + $0x8] sm:$0xf] %vm217, 0
      %294 = vst.msk [vmem:[%s290 + $0xc] sm:$0xf] %vm217, 0
      %295 = vst.msk [vmem:[%s290 + $0x110] sm:$0xf] %vm217, 0
      %296 = vst.msk [vmem:[%s290 + $0x114] sm:$0xf] %vm217, 0
      %297 = vst.msk [vmem:[%s290 + $0x118] sm:$0xf] %vm217, 0
      %298 = vst.msk [vmem:[%s290 + $0x11c] sm:$0xf] %vm217, 0
      %v299 = vlaneseq
      %v300 = vshrl.u32 %v299, 7
      %v301 = vadd.s32 %v300, 8
      %v302 = vadd.s32 %v300, 16
      %v303 = vadd.s32 %v300, 24
      %v304 = vadd.s32 %v300, 32
      %v305 = vadd.s32 %v300, 40
      %v306 = vadd.s32 %v300, 48
      %v307 = vadd.s32 %v300, 56
      %v308 = vadd.s32 %v300, 64
      %v309 = vadd.s32 %v300, 72
      %v310 = vadd.s32 %v300, 80
      %v311 = vadd.s32 %v300, 88
      %v312 = vadd.s32 %v300, 96
      %v313 = vadd.s32 %v300, 104
      %v314 = vadd.s32 %v300, 112
      %v315 = vadd.s32 %v300, 120
      %v316 = vadd.s32 %v300, 128
      %v317 = vadd.s32 %v300, 136
      %v318 = vadd.s32 %v300, 144
      %v319 = vadd.s32 %v300, 152
      %v320 = vadd.s32 %v300, 160
      %v321 = vadd.s32 %v300, 168
      %v322 = vadd.s32 %v300, 176
      %v323 = vadd.s32 %v300, 184
      %v324 = vadd.s32 %v300, 192
      %v325 = vadd.s32 %v300, 200
      %v326 = vadd.s32 %v300, 208
      %v327 = vadd.s32 %v300, 216
      %v328 = vadd.s32 %v300, 224
      %v329 = vadd.s32 %v300, 232
      %v330 = vadd.s32 %v300, 240
      %v331 = vadd.s32 %v300, 248
      %v332 = vadd.s32 %v300, 256
      %v333 = vadd.s32 %v300, 264
      %v334 = vadd.s32 %v300, 272
      %v335 = vadd.s32 %v300, 280
      %v336 = vadd.s32 %v300, 288
      %v337 = vadd.s32 %v300, 296
      %v338 = vadd.s32 %v300, 304
      %v339 = vadd.s32 %v300, 312
      %v340 = vadd.s32 %v300, 320
      %v341 = vadd.s32 %v300, 328
      %v342 = vadd.s32 %v300, 336
      %v343 = vadd.s32 %v300, 344
      %v344 = vadd.s32 %v300, 352
      %v345 = vadd.s32 %v300, 360
      %v346 = vadd.s32 %v300, 368
      %v347 = vadd.s32 %v300, 376
      %v348 = vadd.s32 %v300, 384
      %v349 = vadd.s32 %v300, 392
      %v350 = vadd.s32 %v300, 400
      %v351 = vadd.s32 %v300, 408
      %v352 = vadd.s32 %v300, 416
      %v353 = vadd.s32 %v300, 424
      %v354 = vadd.s32 %v300, 432
      %v355 = vadd.s32 %v300, 440
      %v356 = vadd.s32 %v300, 448
      %v357 = vadd.s32 %v300, 456
      %v358 = vadd.s32 %v300, 464
      %v359 = vadd.s32 %v300, 472
      %v360 = vadd.s32 %v300, 480
      %v361 = vadd.s32 %v300, 488
      %v362 = vadd.s32 %v300, 496
      %v363 = vadd.s32 %v300, 504
      %vm364 = vcmp.lt.s32.totalorder %v300, 0
      %v365 = vsub.s32 0, %v300
      %v366 = vsel %vm364, %v365, %v300
      %v367 = vshrl.u32 %v366, 5
      %v368 = vand.u32 %v366, 31
      %v369 = vsub.s32 0, %v368
      %v370 = vsel %vm364, %v369, %v368
      %vm371 = vcmp.lt.s32.totalorder %v301, 0
      %v372 = vsub.s32 0, %v301
      %v373 = vsel %vm371, %v372, %v301
      %v374 = vshrl.u32 %v373, 5
      %v375 = vand.u32 %v373, 31
      %v376 = vsub.s32 0, %v375
      %v377 = vsel %vm371, %v376, %v375
      %vm378 = vcmp.lt.s32.totalorder %v302, 0
      %v379 = vsub.s32 0, %v302
      %v380 = vsel %vm378, %v379, %v302
      %v381 = vshrl.u32 %v380, 5
      %v382 = vand.u32 %v380, 31
      %v383 = vsub.s32 0, %v382
      %v384 = vsel %vm378, %v383, %v382
      %vm385 = vcmp.lt.s32.totalorder %v303, 0
      %v386 = vsub.s32 0, %v303
      %v387 = vsel %vm385, %v386, %v303
      %v388 = vshrl.u32 %v387, 5
      %v389 = vand.u32 %v387, 31
      %v390 = vsub.s32 0, %v389
      %v391 = vsel %vm385, %v390, %v389
      %vm392 = vcmp.lt.s32.totalorder %v304, 0
      %v393 = vsub.s32 0, %v304
      %v394 = vsel %vm392, %v393, %v304
      %v395 = vshrl.u32 %v394, 5
      %v396 = vand.u32 %v394, 31
      %v397 = vsub.s32 0, %v396
      %v398 = vsel %vm392, %v397, %v396
      %vm399 = vcmp.lt.s32.totalorder %v305, 0
      %v400 = vsub.s32 0, %v305
      %v401 = vsel %vm399, %v400, %v305
      %v402 = vshrl.u32 %v401, 5
      %v403 = vand.u32 %v401, 31
      %v404 = vsub.s32 0, %v403
      %v405 = vsel %vm399, %v404, %v403
      %vm406 = vcmp.lt.s32.totalorder %v306, 0
      %v407 = vsub.s32 0, %v306
      %v408 = vsel %vm406, %v407, %v306
      %v409 = vshrl.u32 %v408, 5
      %v410 = vand.u32 %v408, 31
      %v411 = vsub.s32 0, %v410
      %v412 = vsel %vm406, %v411, %v410
      %vm413 = vcmp.lt.s32.totalorder %v307, 0
      %v414 = vsub.s32 0, %v307
      %v415 = vsel %vm413, %v414, %v307
      %v416 = vshrl.u32 %v415, 5
      %v417 = vand.u32 %v415, 31
      %v418 = vsub.s32 0, %v417
      %v419 = vsel %vm413, %v418, %v417
      %vm420 = vcmp.lt.s32.totalorder %v308, 0
      %v421 = vsub.s32 0, %v308
      %v422 = vsel %vm420, %v421, %v308
      %v423 = vshrl.u32 %v422, 5
      %v424 = vand.u32 %v422, 31
      %v425 = vsub.s32 0, %v424
      %v426 = vsel %vm420, %v425, %v424
      %vm427 = vcmp.lt.s32.totalorder %v309, 0
      %v428 = vsub.s32 0, %v309
      %v429 = vsel %vm427, %v428, %v309
      %v430 = vshrl.u32 %v429, 5
      %v431 = vand.u32 %v429, 31
      %v432 = vsub.s32 0, %v431
      %v433 = vsel %vm427, %v432, %v431
      %vm434 = vcmp.lt.s32.totalorder %v310, 0
      %v435 = vsub.s32 0, %v310
      %v436 = vsel %vm434, %v435, %v310
      %v437 = vshrl.u32 %v436, 5
      %v438 = vand.u32 %v436, 31
      %v439 = vsub.s32 0, %v438
      %v440 = vsel %vm434, %v439, %v438
      %vm441 = vcmp.lt.s32.totalorder %v311, 0
      %v442 = vsub.s32 0, %v311
      %v443 = vsel %vm441, %v442, %v311
      %v444 = vshrl.u32 %v443, 5
      %v445 = vand.u32 %v443, 31
      %v446 = vsub.s32 0, %v445
      %v447 = vsel %vm441, %v446, %v445
      %vm448 = vcmp.lt.s32.totalorder %v312, 0
      %v449 = vsub.s32 0, %v312
      %v450 = vsel %vm448, %v449, %v312
      %v451 = vshrl.u32 %v450, 5
      %v452 = vand.u32 %v450, 31
      %v453 = vsub.s32 0, %v452
      %v454 = vsel %vm448, %v453, %v452
      %vm455 = vcmp.lt.s32.totalorder %v313, 0
      %v456 = vsub.s32 0, %v313
      %v457 = vsel %vm455, %v456, %v313
      %v458 = vshrl.u32 %v457, 5
      %v459 = vand.u32 %v457, 31
      %v460 = vsub.s32 0, %v459
      %v461 = vsel %vm455, %v460, %v459
      %vm462 = vcmp.lt.s32.totalorder %v314, 0
      %v463 = vsub.s32 0, %v314
      %v464 = vsel %vm462, %v463, %v314
      %v465 = vshrl.u32 %v464, 5
      %v466 = vand.u32 %v464, 31
      %v467 = vsub.s32 0, %v466
      %v468 = vsel %vm462, %v467, %v466
      %vm469 = vcmp.lt.s32.totalorder %v315, 0
      %v470 = vsub.s32 0, %v315
      %v471 = vsel %vm469, %v470, %v315
      %v472 = vshrl.u32 %v471, 5
      %v473 = vand.u32 %v471, 31
      %v474 = vsub.s32 0, %v473
      %v475 = vsel %vm469, %v474, %v473
      %vm476 = vcmp.lt.s32.totalorder %v316, 0
      %v477 = vsub.s32 0, %v316
      %v478 = vsel %vm476, %v477, %v316
      %v479 = vshrl.u32 %v478, 5
      %v480 = vand.u32 %v478, 31
      %v481 = vsub.s32 0, %v480
      %v482 = vsel %vm476, %v481, %v480
      %vm483 = vcmp.lt.s32.totalorder %v317, 0
      %v484 = vsub.s32 0, %v317
      %v485 = vsel %vm483, %v484, %v317
      %v486 = vshrl.u32 %v485, 5
      %v487 = vand.u32 %v485, 31
      %v488 = vsub.s32 0, %v487
      %v489 = vsel %vm483, %v488, %v487
      %vm490 = vcmp.lt.s32.totalorder %v318, 0
      %v491 = vsub.s32 0, %v318
      %v492 = vsel %vm490, %v491, %v318
      %v493 = vshrl.u32 %v492, 5
      %v494 = vand.u32 %v492, 31
      %v495 = vsub.s32 0, %v494
      %v496 = vsel %vm490, %v495, %v494
      %vm497 = vcmp.lt.s32.totalorder %v319, 0
      %v498 = vsub.s32 0, %v319
      %v499 = vsel %vm497, %v498, %v319
      %v500 = vshrl.u32 %v499, 5
      %v501 = vand.u32 %v499, 31
      %v502 = vsub.s32 0, %v501
      %v503 = vsel %vm497, %v502, %v501
      %vm504 = vcmp.lt.s32.totalorder %v320, 0
      %v505 = vsub.s32 0, %v320
      %v506 = vsel %vm504, %v505, %v320
      %v507 = vshrl.u32 %v506, 5
      %v508 = vand.u32 %v506, 31
      %v509 = vsub.s32 0, %v508
      %v510 = vsel %vm504, %v509, %v508
      %vm511 = vcmp.lt.s32.totalorder %v321, 0
      %v512 = vsub.s32 0, %v321
      %v513 = vsel %vm511, %v512, %v321
      %v514 = vshrl.u32 %v513, 5
      %v515 = vand.u32 %v513, 31
      %v516 = vsub.s32 0, %v515
      %v517 = vsel %vm511, %v516, %v515
      %vm518 = vcmp.lt.s32.totalorder %v322, 0
      %v519 = vsub.s32 0, %v322
      %v520 = vsel %vm518, %v519, %v322
      %v521 = vshrl.u32 %v520, 5
      %v522 = vand.u32 %v520, 31
      %v523 = vsub.s32 0, %v522
      %v524 = vsel %vm518, %v523, %v522
      %vm525 = vcmp.lt.s32.totalorder %v323, 0
      %v526 = vsub.s32 0, %v323
      %v527 = vsel %vm525, %v526, %v323
      %v528 = vshrl.u32 %v527, 5
      %v529 = vand.u32 %v527, 31
      %v530 = vsub.s32 0, %v529
      %v531 = vsel %vm525, %v530, %v529
      %vm532 = vcmp.lt.s32.totalorder %v324, 0
      %v533 = vsub.s32 0, %v324
      %v534 = vsel %vm532, %v533, %v324
      %v535 = vshrl.u32 %v534, 5
      %v536 = vand.u32 %v534, 31
      %v537 = vsub.s32 0, %v536
      %v538 = vsel %vm532, %v537, %v536
      %vm539 = vcmp.lt.s32.totalorder %v325, 0
      %v540 = vsub.s32 0, %v325
      %v541 = vsel %vm539, %v540, %v325
      %v542 = vshrl.u32 %v541, 5
      %v543 = vand.u32 %v541, 31
      %v544 = vsub.s32 0, %v543
      %v545 = vsel %vm539, %v544, %v543
      %vm546 = vcmp.lt.s32.totalorder %v326, 0
      %v547 = vsub.s32 0, %v326
      %v548 = vsel %vm546, %v547, %v326
      %v549 = vshrl.u32 %v548, 5
      %v550 = vand.u32 %v548, 31
      %v551 = vsub.s32 0, %v550
      %v552 = vsel %vm546, %v551, %v550
      %vm553 = vcmp.lt.s32.totalorder %v327, 0
      %v554 = vsub.s32 0, %v327
      %v555 = vsel %vm553, %v554, %v327
      %v556 = vshrl.u32 %v555, 5
      %v557 = vand.u32 %v555, 31
      %v558 = vsub.s32 0, %v557
      %v559 = vsel %vm553, %v558, %v557
      %vm560 = vcmp.lt.s32.totalorder %v328, 0
      %v561 = vsub.s32 0, %v328
      %v562 = vsel %vm560, %v561, %v328
      %v563 = vshrl.u32 %v562, 5
      %v564 = vand.u32 %v562, 31
      %v565 = vsub.s32 0, %v564
      %v566 = vsel %vm560, %v565, %v564
      %vm567 = vcmp.lt.s32.totalorder %v329, 0
      %v568 = vsub.s32 0, %v329
      %v569 = vsel %vm567, %v568, %v329
      %v570 = vshrl.u32 %v569, 5
      %v571 = vand.u32 %v569, 31
      %v572 = vsub.s32 0, %v571
      %v573 = vsel %vm567, %v572, %v571
      %vm574 = vcmp.lt.s32.totalorder %v330, 0
      %v575 = vsub.s32 0, %v330
      %v576 = vsel %vm574, %v575, %v330
      %v577 = vshrl.u32 %v576, 5
      %v578 = vand.u32 %v576, 31
      %v579 = vsub.s32 0, %v578
      %v580 = vsel %vm574, %v579, %v578
      %vm581 = vcmp.lt.s32.totalorder %v331, 0
      %v582 = vsub.s32 0, %v331
      %v583 = vsel %vm581, %v582, %v331
      %v584 = vshrl.u32 %v583, 5
      %v585 = vand.u32 %v583, 31
      %v586 = vsub.s32 0, %v585
      %v587 = vsel %vm581, %v586, %v585
      %vm588 = vcmp.lt.s32.totalorder %v332, 0
      %v589 = vsub.s32 0, %v332
      %v590 = vsel %vm588, %v589, %v332
      %v591 = vshrl.u32 %v590, 5
      %v592 = vand.u32 %v590, 31
      %v593 = vsub.s32 0, %v592
      %v594 = vsel %vm588, %v593, %v592
      %vm595 = vcmp.lt.s32.totalorder %v333, 0
      %v596 = vsub.s32 0, %v333
      %v597 = vsel %vm595, %v596, %v333
      %v598 = vshrl.u32 %v597, 5
      %v599 = vand.u32 %v597, 31
      %v600 = vsub.s32 0, %v599
      %v601 = vsel %vm595, %v600, %v599
      %vm602 = vcmp.lt.s32.totalorder %v334, 0
      %v603 = vsub.s32 0, %v334
      %v604 = vsel %vm602, %v603, %v334
      %v605 = vshrl.u32 %v604, 5
      %v606 = vand.u32 %v604, 31
      %v607 = vsub.s32 0, %v606
      %v608 = vsel %vm602, %v607, %v606
      %vm609 = vcmp.lt.s32.totalorder %v335, 0
      %v610 = vsub.s32 0, %v335
      %v611 = vsel %vm609, %v610, %v335
      %v612 = vshrl.u32 %v611, 5
      %v613 = vand.u32 %v611, 31
      %v614 = vsub.s32 0, %v613
      %v615 = vsel %vm609, %v614, %v613
      %vm616 = vcmp.lt.s32.totalorder %v336, 0
      %v617 = vsub.s32 0, %v336
      %v618 = vsel %vm616, %v617, %v336
      %v619 = vshrl.u32 %v618, 5
      %v620 = vand.u32 %v618, 31
      %v621 = vsub.s32 0, %v620
      %v622 = vsel %vm616, %v621, %v620
      %vm623 = vcmp.lt.s32.totalorder %v337, 0
      %v624 = vsub.s32 0, %v337
      %v625 = vsel %vm623, %v624, %v337
      %v626 = vshrl.u32 %v625, 5
      %v627 = vand.u32 %v625, 31
      %v628 = vsub.s32 0, %v627
      %v629 = vsel %vm623, %v628, %v627
      %vm630 = vcmp.lt.s32.totalorder %v338, 0
      %v631 = vsub.s32 0, %v338
      %v632 = vsel %vm630, %v631, %v338
      %v633 = vshrl.u32 %v632, 5
      %v634 = vand.u32 %v632, 31
      %v635 = vsub.s32 0, %v634
      %v636 = vsel %vm630, %v635, %v634
      %vm637 = vcmp.lt.s32.totalorder %v339, 0
      %v638 = vsub.s32 0, %v339
      %v639 = vsel %vm637, %v638, %v339
      %v640 = vshrl.u32 %v639, 5
      %v641 = vand.u32 %v639, 31
      %v642 = vsub.s32 0, %v641
      %v643 = vsel %vm637, %v642, %v641
      %vm644 = vcmp.lt.s32.totalorder %v340, 0
      %v645 = vsub.s32 0, %v340
      %v646 = vsel %vm644, %v645, %v340
      %v647 = vshrl.u32 %v646, 5
      %v648 = vand.u32 %v646, 31
      %v649 = vsub.s32 0, %v648
      %v650 = vsel %vm644, %v649, %v648
      %vm651 = vcmp.lt.s32.totalorder %v341, 0
      %v652 = vsub.s32 0, %v341
      %v653 = vsel %vm651, %v652, %v341
      %v654 = vshrl.u32 %v653, 5
      %v655 = vand.u32 %v653, 31
      %v656 = vsub.s32 0, %v655
      %v657 = vsel %vm651, %v656, %v655
      %vm658 = vcmp.lt.s32.totalorder %v342, 0
      %v659 = vsub.s32 0, %v342
      %v660 = vsel %vm658, %v659, %v342
      %v661 = vshrl.u32 %v660, 5
      %v662 = vand.u32 %v660, 31
      %v663 = vsub.s32 0, %v662
      %v664 = vsel %vm658, %v663, %v662
      %vm665 = vcmp.lt.s32.totalorder %v343, 0
      %v666 = vsub.s32 0, %v343
      %v667 = vsel %vm665, %v666, %v343
      %v668 = vshrl.u32 %v667, 5
      %v669 = vand.u32 %v667, 31
      %v670 = vsub.s32 0, %v669
      %v671 = vsel %vm665, %v670, %v669
      %vm672 = vcmp.lt.s32.totalorder %v344, 0
      %v673 = vsub.s32 0, %v344
      %v674 = vsel %vm672, %v673, %v344
      %v675 = vshrl.u32 %v674, 5
      %v676 = vand.u32 %v674, 31
      %v677 = vsub.s32 0, %v676
      %v678 = vsel %vm672, %v677, %v676
      %vm679 = vcmp.lt.s32.totalorder %v345, 0
      %v680 = vsub.s32 0, %v345
      %v681 = vsel %vm679, %v680, %v345
      %v682 = vshrl.u32 %v681, 5
      %v683 = vand.u32 %v681, 31
      %v684 = vsub.s32 0, %v683
      %v685 = vsel %vm679, %v684, %v683
      %vm686 = vcmp.lt.s32.totalorder %v346, 0
      %v687 = vsub.s32 0, %v346
      %v688 = vsel %vm686, %v687, %v346
      %v689 = vshrl.u32 %v688, 5
      %v690 = vand.u32 %v688, 31
      %v691 = vsub.s32 0, %v690
      %v692 = vsel %vm686, %v691, %v690
      %vm693 = vcmp.lt.s32.totalorder %v347, 0
      %v694 = vsub.s32 0, %v347
      %v695 = vsel %vm693, %v694, %v347
      %v696 = vshrl.u32 %v695, 5
      %v697 = vand.u32 %v695, 31
      %v698 = vsub.s32 0, %v697
      %v699 = vsel %vm693, %v698, %v697
      %vm700 = vcmp.lt.s32.totalorder %v348, 0
      %v701 = vsub.s32 0, %v348
      %v702 = vsel %vm700, %v701, %v348
      %v703 = vshrl.u32 %v702, 5
      %v704 = vand.u32 %v702, 31
      %v705 = vsub.s32 0, %v704
      %v706 = vsel %vm700, %v705, %v704
      %vm707 = vcmp.lt.s32.totalorder %v349, 0
      %v708 = vsub.s32 0, %v349
      %v709 = vsel %vm707, %v708, %v349
      %v710 = vshrl.u32 %v709, 5
      %v711 = vand.u32 %v709, 31
      %v712 = vsub.s32 0, %v711
      %v713 = vsel %vm707, %v712, %v711
      %vm714 = vcmp.lt.s32.totalorder %v350, 0
      %v715 = vsub.s32 0, %v350
      %v716 = vsel %vm714, %v715, %v350
      %v717 = vshrl.u32 %v716, 5
      %v718 = vand.u32 %v716, 31
      %v719 = vsub.s32 0, %v718
      %v720 = vsel %vm714, %v719, %v718
      %vm721 = vcmp.lt.s32.totalorder %v351, 0
      %v722 = vsub.s32 0, %v351
      %v723 = vsel %vm721, %v722, %v351
      %v724 = vshrl.u32 %v723, 5
      %v725 = vand.u32 %v723, 31
      %v726 = vsub.s32 0, %v725
      %v727 = vsel %vm721, %v726, %v725
      %vm728 = vcmp.lt.s32.totalorder %v352, 0
      %v729 = vsub.s32 0, %v352
      %v730 = vsel %vm728, %v729, %v352
      %v731 = vshrl.u32 %v730, 5
      %v732 = vand.u32 %v730, 31
      %v733 = vsub.s32 0, %v732
      %v734 = vsel %vm728, %v733, %v732
      %vm735 = vcmp.lt.s32.totalorder %v353, 0
      %v736 = vsub.s32 0, %v353
      %v737 = vsel %vm735, %v736, %v353
      %v738 = vshrl.u32 %v737, 5
      %v739 = vand.u32 %v737, 31
      %v740 = vsub.s32 0, %v739
      %v741 = vsel %vm735, %v740, %v739
      %vm742 = vcmp.lt.s32.totalorder %v354, 0
      %v743 = vsub.s32 0, %v354
      %v744 = vsel %vm742, %v743, %v354
      %v745 = vshrl.u32 %v744, 5
      %v746 = vand.u32 %v744, 31
      %v747 = vsub.s32 0, %v746
      %v748 = vsel %vm742, %v747, %v746
      %vm749 = vcmp.lt.s32.totalorder %v355, 0
      %v750 = vsub.s32 0, %v355
      %v751 = vsel %vm749, %v750, %v355
      %v752 = vshrl.u32 %v751, 5
      %v753 = vand.u32 %v751, 31
      %v754 = vsub.s32 0, %v753
      %v755 = vsel %vm749, %v754, %v753
      %vm756 = vcmp.lt.s32.totalorder %v356, 0
      %v757 = vsub.s32 0, %v356
      %v758 = vsel %vm756, %v757, %v356
      %v759 = vshrl.u32 %v758, 5
      %v760 = vand.u32 %v758, 31
      %v761 = vsub.s32 0, %v760
      %v762 = vsel %vm756, %v761, %v760
      %vm763 = vcmp.lt.s32.totalorder %v357, 0
      %v764 = vsub.s32 0, %v357
      %v765 = vsel %vm763, %v764, %v357
      %v766 = vshrl.u32 %v765, 5
      %v767 = vand.u32 %v765, 31
      %v768 = vsub.s32 0, %v767
      %v769 = vsel %vm763, %v768, %v767
      %vm770 = vcmp.lt.s32.totalorder %v358, 0
      %v771 = vsub.s32 0, %v358
      %v772 = vsel %vm770, %v771, %v358
      %v773 = vshrl.u32 %v772, 5
      %v774 = vand.u32 %v772, 31
      %v775 = vsub.s32 0, %v774
      %v776 = vsel %vm770, %v775, %v774
      %vm777 = vcmp.lt.s32.totalorder %v359, 0
      %v778 = vsub.s32 0, %v359
      %v779 = vsel %vm777, %v778, %v359
      %v780 = vshrl.u32 %v779, 5
      %v781 = vand.u32 %v779, 31
      %v782 = vsub.s32 0, %v781
      %v783 = vsel %vm777, %v782, %v781
      %vm784 = vcmp.lt.s32.totalorder %v360, 0
      %v785 = vsub.s32 0, %v360
      %v786 = vsel %vm784, %v785, %v360
      %v787 = vshrl.u32 %v786, 5
      %v788 = vand.u32 %v786, 31
      %v789 = vsub.s32 0, %v788
      %v790 = vsel %vm784, %v789, %v788
      %vm791 = vcmp.lt.s32.totalorder %v361, 0
      %v792 = vsub.s32 0, %v361
      %v793 = vsel %vm791, %v792, %v361
      %v794 = vshrl.u32 %v793, 5
      %v795 = vand.u32 %v793, 31
      %v796 = vsub.s32 0, %v795
      %v797 = vsel %vm791, %v796, %v795
      %vm798 = vcmp.lt.s32.totalorder %v362, 0
      %v799 = vsub.s32 0, %v362
      %v800 = vsel %vm798, %v799, %v362
      %v801 = vshrl.u32 %v800, 5
      %v802 = vand.u32 %v800, 31
      %v803 = vsub.s32 0, %v802
      %v804 = vsel %vm798, %v803, %v802
      %vm805 = vcmp.lt.s32.totalorder %v363, 0
      %v806 = vsub.s32 0, %v363
      %v807 = vsel %vm805, %v806, %v363
      %v808 = vshrl.u32 %v807, 5
      %v809 = vand.u32 %v807, 31
      %v810 = vsub.s32 0, %v809
      %v811 = vsel %vm805, %v810, %v809
      %vm812 = vcmp.ne.s32.totalorder %v370, 0
      %vm813 = vcmp.ne.s32.totalorder %v377, 0
      %vm814 = vcmp.ne.s32.totalorder %v384, 0
      %vm815 = vcmp.ne.s32.totalorder %v391, 0
      %vm816 = vcmp.ne.s32.totalorder %v398, 0
      %vm817 = vcmp.ne.s32.totalorder %v405, 0
      %vm818 = vcmp.ne.s32.totalorder %v412, 0
      %vm819 = vcmp.ne.s32.totalorder %v419, 0
      %vm820 = vcmp.ne.s32.totalorder %v426, 0
      %vm821 = vcmp.ne.s32.totalorder %v433, 0
      %vm822 = vcmp.ne.s32.totalorder %v440, 0
      %vm823 = vcmp.ne.s32.totalorder %v447, 0
      %vm824 = vcmp.ne.s32.totalorder %v454, 0
      %vm825 = vcmp.ne.s32.totalorder %v461, 0
      %vm826 = vcmp.ne.s32.totalorder %v468, 0
      %vm827 = vcmp.ne.s32.totalorder %v475, 0
      %vm828 = vcmp.ne.s32.totalorder %v482, 0
      %vm829 = vcmp.ne.s32.totalorder %v489, 0
      %vm830 = vcmp.ne.s32.totalorder %v496, 0
      %vm831 = vcmp.ne.s32.totalorder %v503, 0
      %vm832 = vcmp.ne.s32.totalorder %v510, 0
      %vm833 = vcmp.ne.s32.totalorder %v517, 0
      %vm834 = vcmp.ne.s32.totalorder %v524, 0
      %vm835 = vcmp.ne.s32.totalorder %v531, 0
      %vm836 = vcmp.ne.s32.totalorder %v538, 0
      %vm837 = vcmp.ne.s32.totalorder %v545, 0
      %vm838 = vcmp.ne.s32.totalorder %v552, 0
      %vm839 = vcmp.ne.s32.totalorder %v559, 0
      %vm840 = vcmp.ne.s32.totalorder %v566, 0
      %vm841 = vcmp.ne.s32.totalorder %v573, 0
      %vm842 = vcmp.ne.s32.totalorder %v580, 0
      %vm843 = vcmp.ne.s32.totalorder %v587, 0
      %vm844 = vcmp.ne.s32.totalorder %v594, 0
      %vm845 = vcmp.ne.s32.totalorder %v601, 0
      %vm846 = vcmp.ne.s32.totalorder %v608, 0
      %vm847 = vcmp.ne.s32.totalorder %v615, 0
      %vm848 = vcmp.ne.s32.totalorder %v622, 0
      %vm849 = vcmp.ne.s32.totalorder %v629, 0
      %vm850 = vcmp.ne.s32.totalorder %v636, 0
      %vm851 = vcmp.ne.s32.totalorder %v643, 0
      %vm852 = vcmp.ne.s32.totalorder %v650, 0
      %vm853 = vcmp.ne.s32.totalorder %v657, 0
      %vm854 = vcmp.ne.s32.totalorder %v664, 0
      %vm855 = vcmp.ne.s32.totalorder %v671, 0
      %vm856 = vcmp.ne.s32.totalorder %v678, 0
      %vm857 = vcmp.ne.s32.totalorder %v685, 0
      %vm858 = vcmp.ne.s32.totalorder %v692, 0
      %vm859 = vcmp.ne.s32.totalorder %v699, 0
      %vm860 = vcmp.ne.s32.totalorder %v706, 0
      %vm861 = vcmp.ne.s32.totalorder %v713, 0
      %vm862 = vcmp.ne.s32.totalorder %v720, 0
      %vm863 = vcmp.ne.s32.totalorder %v727, 0
      %vm864 = vcmp.ne.s32.totalorder %v734, 0
      %vm865 = vcmp.ne.s32.totalorder %v741, 0
      %vm866 = vcmp.ne.s32.totalorder %v748, 0
      %vm867 = vcmp.ne.s32.totalorder %v755, 0
      %vm868 = vcmp.ne.s32.totalorder %v762, 0
      %vm869 = vcmp.ne.s32.totalorder %v769, 0
      %vm870 = vcmp.ne.s32.totalorder %v776, 0
      %vm871 = vcmp.ne.s32.totalorder %v783, 0
      %vm872 = vcmp.ne.s32.totalorder %v790, 0
      %vm873 = vcmp.ne.s32.totalorder %v797, 0
      %vm874 = vcmp.ne.s32.totalorder %v804, 0
      %vm875 = vcmp.ne.s32.totalorder %v811, 0
      %vm876 = vcmp.lt.s32.totalorder %v370, 0
      %vm877 = vcmp.lt.s32.totalorder %v377, 0
      %vm878 = vcmp.lt.s32.totalorder %v384, 0
      %vm879 = vcmp.lt.s32.totalorder %v391, 0
      %vm880 = vcmp.lt.s32.totalorder %v398, 0
      %vm881 = vcmp.lt.s32.totalorder %v405, 0
      %vm882 = vcmp.lt.s32.totalorder %v412, 0
      %vm883 = vcmp.lt.s32.totalorder %v419, 0
      %vm884 = vcmp.lt.s32.totalorder %v426, 0
      %vm885 = vcmp.lt.s32.totalorder %v433, 0
      %vm886 = vcmp.lt.s32.totalorder %v440, 0
      %vm887 = vcmp.lt.s32.totalorder %v447, 0
      %vm888 = vcmp.lt.s32.totalorder %v454, 0
      %vm889 = vcmp.lt.s32.totalorder %v461, 0
      %vm890 = vcmp.lt.s32.totalorder %v468, 0
      %vm891 = vcmp.lt.s32.totalorder %v475, 0
      %vm892 = vcmp.lt.s32.totalorder %v482, 0
      %vm893 = vcmp.lt.s32.totalorder %v489, 0
      %vm894 = vcmp.lt.s32.totalorder %v496, 0
      %vm895 = vcmp.lt.s32.totalorder %v503, 0
      %vm896 = vcmp.lt.s32.totalorder %v510, 0
      %vm897 = vcmp.lt.s32.totalorder %v517, 0
      %vm898 = vcmp.lt.s32.totalorder %v524, 0
      %vm899 = vcmp.lt.s32.totalorder %v531, 0
      %vm900 = vcmp.lt.s32.totalorder %v538, 0
      %vm901 = vcmp.lt.s32.totalorder %v545, 0
      %vm902 = vcmp.lt.s32.totalorder %v552, 0
      %vm903 = vcmp.lt.s32.totalorder %v559, 0
      %vm904 = vcmp.lt.s32.totalorder %v566, 0
      %vm905 = vcmp.lt.s32.totalorder %v573, 0
      %vm906 = vcmp.lt.s32.totalorder %v580, 0
      %vm907 = vcmp.lt.s32.totalorder %v587, 0
      %vm908 = vcmp.lt.s32.totalorder %v594, 0
      %vm909 = vcmp.lt.s32.totalorder %v601, 0
      %vm910 = vcmp.lt.s32.totalorder %v608, 0
      %vm911 = vcmp.lt.s32.totalorder %v615, 0
      %vm912 = vcmp.lt.s32.totalorder %v622, 0
      %vm913 = vcmp.lt.s32.totalorder %v629, 0
      %vm914 = vcmp.lt.s32.totalorder %v636, 0
      %vm915 = vcmp.lt.s32.totalorder %v643, 0
      %vm916 = vcmp.lt.s32.totalorder %v650, 0
      %vm917 = vcmp.lt.s32.totalorder %v657, 0
      %vm918 = vcmp.lt.s32.totalorder %v664, 0
      %vm919 = vcmp.lt.s32.totalorder %v671, 0
      %vm920 = vcmp.lt.s32.totalorder %v678, 0
      %vm921 = vcmp.lt.s32.totalorder %v685, 0
      %vm922 = vcmp.lt.s32.totalorder %v692, 0
      %vm923 = vcmp.lt.s32.totalorder %v699, 0
      %vm924 = vcmp.lt.s32.totalorder %v706, 0
      %vm925 = vcmp.lt.s32.totalorder %v713, 0
      %vm926 = vcmp.lt.s32.totalorder %v720, 0
      %vm927 = vcmp.lt.s32.totalorder %v727, 0
      %vm928 = vcmp.lt.s32.totalorder %v734, 0
      %vm929 = vcmp.lt.s32.totalorder %v741, 0
      %vm930 = vcmp.lt.s32.totalorder %v748, 0
      %vm931 = vcmp.lt.s32.totalorder %v755, 0
      %vm932 = vcmp.lt.s32.totalorder %v762, 0
      %vm933 = vcmp.lt.s32.totalorder %v769, 0
      %vm934 = vcmp.lt.s32.totalorder %v776, 0
      %vm935 = vcmp.lt.s32.totalorder %v783, 0
      %vm936 = vcmp.lt.s32.totalorder %v790, 0
      %vm937 = vcmp.lt.s32.totalorder %v797, 0
      %vm938 = vcmp.lt.s32.totalorder %v804, 0
      %vm939 = vcmp.lt.s32.totalorder %v811, 0
      %vm940 = vmand %vm876, %vm812
      %vm941 = vmand %vm877, %vm813
      %vm942 = vmand %vm878, %vm814
      %vm943 = vmand %vm879, %vm815
      %vm944 = vmand %vm880, %vm816
      %vm945 = vmand %vm881, %vm817
      %vm946 = vmand %vm882, %vm818
      %vm947 = vmand %vm883, %vm819
      %vm948 = vmand %vm884, %vm820
      %vm949 = vmand %vm885, %vm821
      %vm950 = vmand %vm886, %vm822
      %vm951 = vmand %vm887, %vm823
      %vm952 = vmand %vm888, %vm824
      %vm953 = vmand %vm889, %vm825
      %vm954 = vmand %vm890, %vm826
      %vm955 = vmand %vm891, %vm827
      %vm956 = vmand %vm892, %vm828
      %vm957 = vmand %vm893, %vm829
      %vm958 = vmand %vm894, %vm830
      %vm959 = vmand %vm895, %vm831
      %vm960 = vmand %vm896, %vm832
      %vm961 = vmand %vm897, %vm833
      %vm962 = vmand %vm898, %vm834
      %vm963 = vmand %vm899, %vm835
      %vm964 = vmand %vm900, %vm836
      %vm965 = vmand %vm901, %vm837
      %vm966 = vmand %vm902, %vm838
      %vm967 = vmand %vm903, %vm839
      %vm968 = vmand %vm904, %vm840
      %vm969 = vmand %vm905, %vm841
      %vm970 = vmand %vm906, %vm842
      %vm971 = vmand %vm907, %vm843
      %vm972 = vmand %vm908, %vm844
      %vm973 = vmand %vm909, %vm845
      %vm974 = vmand %vm910, %vm846
      %vm975 = vmand %vm911, %vm847
      %vm976 = vmand %vm912, %vm848
      %vm977 = vmand %vm913, %vm849
      %vm978 = vmand %vm914, %vm850
      %vm979 = vmand %vm915, %vm851
      %vm980 = vmand %vm916, %vm852
      %vm981 = vmand %vm917, %vm853
      %vm982 = vmand %vm918, %vm854
      %vm983 = vmand %vm919, %vm855
      %vm984 = vmand %vm920, %vm856
      %vm985 = vmand %vm921, %vm857
      %vm986 = vmand %vm922, %vm858
      %vm987 = vmand %vm923, %vm859
      %vm988 = vmand %vm924, %vm860
      %vm989 = vmand %vm925, %vm861
      %vm990 = vmand %vm926, %vm862
      %vm991 = vmand %vm927, %vm863
      %vm992 = vmand %vm928, %vm864
      %vm993 = vmand %vm929, %vm865
      %vm994 = vmand %vm930, %vm866
      %vm995 = vmand %vm931, %vm867
      %vm996 = vmand %vm932, %vm868
      %vm997 = vmand %vm933, %vm869
      %vm998 = vmand %vm934, %vm870
      %vm999 = vmand %vm935, %vm871
      %vm1000 = vmand %vm936, %vm872
      %vm1001 = vmand %vm937, %vm873
      %vm1002 = vmand %vm938, %vm874
      %vm1003 = vmand %vm939, %vm875
      %v1004 = vadd.s32 %v370, 32
      %v1005 = vadd.s32 %v377, 32
      %v1006 = vadd.s32 %v384, 32
      %v1007 = vadd.s32 %v391, 32
      %v1008 = vadd.s32 %v398, 32
      %v1009 = vadd.s32 %v405, 32
      %v1010 = vadd.s32 %v412, 32
      %v1011 = vadd.s32 %v419, 32
      %v1012 = vadd.s32 %v426, 32
      %v1013 = vadd.s32 %v433, 32
      %v1014 = vadd.s32 %v440, 32
      %v1015 = vadd.s32 %v447, 32
      %v1016 = vadd.s32 %v454, 32
      %v1017 = vadd.s32 %v461, 32
      %v1018 = vadd.s32 %v468, 32
      %v1019 = vadd.s32 %v475, 32
      %v1020 = vadd.s32 %v482, 32
      %v1021 = vadd.s32 %v489, 32
      %v1022 = vadd.s32 %v496, 32
      %v1023 = vadd.s32 %v503, 32
      %v1024 = vadd.s32 %v510, 32
      %v1025 = vadd.s32 %v517, 32
      %v1026 = vadd.s32 %v524, 32
      %v1027 = vadd.s32 %v531, 32
      %v1028 = vadd.s32 %v538, 32
      %v1029 = vadd.s32 %v545, 32
      %v1030 = vadd.s32 %v552, 32
      %v1031 = vadd.s32 %v559, 32
      %v1032 = vadd.s32 %v566, 32
      %v1033 = vadd.s32 %v573, 32
      %v1034 = vadd.s32 %v580, 32
      %v1035 = vadd.s32 %v587, 32
      %v1036 = vadd.s32 %v594, 32
      %v1037 = vadd.s32 %v601, 32
      %v1038 = vadd.s32 %v608, 32
      %v1039 = vadd.s32 %v615, 32
      %v1040 = vadd.s32 %v622, 32
      %v1041 = vadd.s32 %v629, 32
      %v1042 = vadd.s32 %v636, 32
      %v1043 = vadd.s32 %v643, 32
      %v1044 = vadd.s32 %v650, 32
      %v1045 = vadd.s32 %v657, 32
      %v1046 = vadd.s32 %v664, 32
      %v1047 = vadd.s32 %v671, 32
      %v1048 = vadd.s32 %v678, 32
      %v1049 = vadd.s32 %v685, 32
      %v1050 = vadd.s32 %v692, 32
      %v1051 = vadd.s32 %v699, 32
      %v1052 = vadd.s32 %v706, 32
      %v1053 = vadd.s32 %v713, 32
      %v1054 = vadd.s32 %v720, 32
      %v1055 = vadd.s32 %v727, 32
      %v1056 = vadd.s32 %v734, 32
      %v1057 = vadd.s32 %v741, 32
      %v1058 = vadd.s32 %v748, 32
      %v1059 = vadd.s32 %v755, 32
      %v1060 = vadd.s32 %v762, 32
      %v1061 = vadd.s32 %v769, 32
      %v1062 = vadd.s32 %v776, 32
      %v1063 = vadd.s32 %v783, 32
      %v1064 = vadd.s32 %v790, 32
      %v1065 = vadd.s32 %v797, 32
      %v1066 = vadd.s32 %v804, 32
      %v1067 = vadd.s32 %v811, 32
      %v1068 = vsel %vm940, %v1004, %v370
      %v1069 = vsel %vm941, %v1005, %v377
      %v1070 = vsel %vm942, %v1006, %v384
      %v1071 = vsel %vm943, %v1007, %v391
      %v1072 = vsel %vm944, %v1008, %v398
      %v1073 = vsel %vm945, %v1009, %v405
      %v1074 = vsel %vm946, %v1010, %v412
      %v1075 = vsel %vm947, %v1011, %v419
      %v1076 = vsel %vm948, %v1012, %v426
      %v1077 = vsel %vm949, %v1013, %v433
      %v1078 = vsel %vm950, %v1014, %v440
      %v1079 = vsel %vm951, %v1015, %v447
      %v1080 = vsel %vm952, %v1016, %v454
      %v1081 = vsel %vm953, %v1017, %v461
      %v1082 = vsel %vm954, %v1018, %v468
      %v1083 = vsel %vm955, %v1019, %v475
      %v1084 = vsel %vm956, %v1020, %v482
      %v1085 = vsel %vm957, %v1021, %v489
      %v1086 = vsel %vm958, %v1022, %v496
      %v1087 = vsel %vm959, %v1023, %v503
      %v1088 = vsel %vm960, %v1024, %v510
      %v1089 = vsel %vm961, %v1025, %v517
      %v1090 = vsel %vm962, %v1026, %v524
      %v1091 = vsel %vm963, %v1027, %v531
      %v1092 = vsel %vm964, %v1028, %v538
      %v1093 = vsel %vm965, %v1029, %v545
      %v1094 = vsel %vm966, %v1030, %v552
      %v1095 = vsel %vm967, %v1031, %v559
      %v1096 = vsel %vm968, %v1032, %v566
      %v1097 = vsel %vm969, %v1033, %v573
      %v1098 = vsel %vm970, %v1034, %v580
      %v1099 = vsel %vm971, %v1035, %v587
      %v1100 = vsel %vm972, %v1036, %v594
      %v1101 = vsel %vm973, %v1037, %v601
      %v1102 = vsel %vm974, %v1038, %v608
      %v1103 = vsel %vm975, %v1039, %v615
      %v1104 = vsel %vm976, %v1040, %v622
      %v1105 = vsel %vm977, %v1041, %v629
      %v1106 = vsel %vm978, %v1042, %v636
      %v1107 = vsel %vm979, %v1043, %v643
      %v1108 = vsel %vm980, %v1044, %v650
      %v1109 = vsel %vm981, %v1045, %v657
      %v1110 = vsel %vm982, %v1046, %v664
      %v1111 = vsel %vm983, %v1047, %v671
      %v1112 = vsel %vm984, %v1048, %v678
      %v1113 = vsel %vm985, %v1049, %v685
      %v1114 = vsel %vm986, %v1050, %v692
      %v1115 = vsel %vm987, %v1051, %v699
      %v1116 = vsel %vm988, %v1052, %v706
      %v1117 = vsel %vm989, %v1053, %v713
      %v1118 = vsel %vm990, %v1054, %v720
      %v1119 = vsel %vm991, %v1055, %v727
      %v1120 = vsel %vm992, %v1056, %v734
      %v1121 = vsel %vm993, %v1057, %v741
      %v1122 = vsel %vm994, %v1058, %v748
      %v1123 = vsel %vm995, %v1059, %v755
      %v1124 = vsel %vm996, %v1060, %v762
      %v1125 = vsel %vm997, %v1061, %v769
      %v1126 = vsel %vm998, %v1062, %v776
      %v1127 = vsel %vm999, %v1063, %v783
      %v1128 = vsel %vm1000, %v1064, %v790
      %v1129 = vsel %vm1001, %v1065, %v797
      %v1130 = vsel %vm1002, %v1066, %v804
      %v1131 = vsel %vm1003, %v1067, %v811
      %vm1132 = vcmp.ge.s32.totalorder %v1068, 1
      %vm1133 = vcmp.ge.s32.totalorder %v1069, 1
      %vm1134 = vcmp.ge.s32.totalorder %v1070, 1
      %vm1135 = vcmp.ge.s32.totalorder %v1071, 1
      %vm1136 = vcmp.ge.s32.totalorder %v1072, 1
      %vm1137 = vcmp.ge.s32.totalorder %v1073, 1
      %vm1138 = vcmp.ge.s32.totalorder %v1074, 1
      %vm1139 = vcmp.ge.s32.totalorder %v1075, 1
      %vm1140 = vcmp.ge.s32.totalorder %v1076, 1
      %vm1141 = vcmp.ge.s32.totalorder %v1077, 1
      %vm1142 = vcmp.ge.s32.totalorder %v1078, 1
      %vm1143 = vcmp.ge.s32.totalorder %v1079, 1
      %vm1144 = vcmp.ge.s32.totalorder %v1080, 1
      %vm1145 = vcmp.ge.s32.totalorder %v1081, 1
      %vm1146 = vcmp.ge.s32.totalorder %v1082, 1
      %vm1147 = vcmp.ge.s32.totalorder %v1083, 1
      %vm1148 = vcmp.ge.s32.totalorder %v1084, 1
      %vm1149 = vcmp.ge.s32.totalorder %v1085, 1
      %vm1150 = vcmp.ge.s32.totalorder %v1086, 1
      %vm1151 = vcmp.ge.s32.totalorder %v1087, 1
      %vm1152 = vcmp.ge.s32.totalorder %v1088, 1
      %vm1153 = vcmp.ge.s32.totalorder %v1089, 1
      %vm1154 = vcmp.ge.s32.totalorder %v1090, 1
      %vm1155 = vcmp.ge.s32.totalorder %v1091, 1
      %vm1156 = vcmp.ge.s32.totalorder %v1092, 1
      %vm1157 = vcmp.ge.s32.totalorder %v1093, 1
      %vm1158 = vcmp.ge.s32.totalorder %v1094, 1
      %vm1159 = vcmp.ge.s32.totalorder %v1095, 1
      %vm1160 = vcmp.ge.s32.totalorder %v1096, 1
      %vm1161 = vcmp.ge.s32.totalorder %v1097, 1
      %vm1162 = vcmp.ge.s32.totalorder %v1098, 1
      %vm1163 = vcmp.ge.s32.totalorder %v1099, 1
      %vm1164 = vcmp.ge.s32.totalorder %v1100, 1
      %vm1165 = vcmp.ge.s32.totalorder %v1101, 1
      %vm1166 = vcmp.ge.s32.totalorder %v1102, 1
      %vm1167 = vcmp.ge.s32.totalorder %v1103, 1
      %vm1168 = vcmp.ge.s32.totalorder %v1104, 1
      %vm1169 = vcmp.ge.s32.totalorder %v1105, 1
      %vm1170 = vcmp.ge.s32.totalorder %v1106, 1
      %vm1171 = vcmp.ge.s32.totalorder %v1107, 1
      %vm1172 = vcmp.ge.s32.totalorder %v1108, 1
      %vm1173 = vcmp.ge.s32.totalorder %v1109, 1
      %vm1174 = vcmp.ge.s32.totalorder %v1110, 1
      %vm1175 = vcmp.ge.s32.totalorder %v1111, 1
      %vm1176 = vcmp.ge.s32.totalorder %v1112, 1
      %vm1177 = vcmp.ge.s32.totalorder %v1113, 1
      %vm1178 = vcmp.ge.s32.totalorder %v1114, 1
      %vm1179 = vcmp.ge.s32.totalorder %v1115, 1
      %vm1180 = vcmp.ge.s32.totalorder %v1116, 1
      %vm1181 = vcmp.ge.s32.totalorder %v1117, 1
      %vm1182 = vcmp.ge.s32.totalorder %v1118, 1
      %vm1183 = vcmp.ge.s32.totalorder %v1119, 1
      %vm1184 = vcmp.ge.s32.totalorder %v1120, 1
      %vm1185 = vcmp.ge.s32.totalorder %v1121, 1
      %vm1186 = vcmp.ge.s32.totalorder %v1122, 1
      %vm1187 = vcmp.ge.s32.totalorder %v1123, 1
      %vm1188 = vcmp.ge.s32.totalorder %v1124, 1
      %vm1189 = vcmp.ge.s32.totalorder %v1125, 1
      %vm1190 = vcmp.ge.s32.totalorder %v1126, 1
      %vm1191 = vcmp.ge.s32.totalorder %v1127, 1
      %vm1192 = vcmp.ge.s32.totalorder %v1128, 1
      %vm1193 = vcmp.ge.s32.totalorder %v1129, 1
      %vm1194 = vcmp.ge.s32.totalorder %v1130, 1
      %vm1195 = vcmp.ge.s32.totalorder %v1131, 1
      %vm1196 = vcmp.le.s32.totalorder %v1068, 16
      %vm1197 = vcmp.le.s32.totalorder %v1069, 16
      %vm1198 = vcmp.le.s32.totalorder %v1070, 16
      %vm1199 = vcmp.le.s32.totalorder %v1071, 16
      %vm1200 = vcmp.le.s32.totalorder %v1072, 16
      %vm1201 = vcmp.le.s32.totalorder %v1073, 16
      %vm1202 = vcmp.le.s32.totalorder %v1074, 16
      %vm1203 = vcmp.le.s32.totalorder %v1075, 16
      %vm1204 = vcmp.le.s32.totalorder %v1076, 16
      %vm1205 = vcmp.le.s32.totalorder %v1077, 16
      %vm1206 = vcmp.le.s32.totalorder %v1078, 16
      %vm1207 = vcmp.le.s32.totalorder %v1079, 16
      %vm1208 = vcmp.le.s32.totalorder %v1080, 16
      %vm1209 = vcmp.le.s32.totalorder %v1081, 16
      %vm1210 = vcmp.le.s32.totalorder %v1082, 16
      %vm1211 = vcmp.le.s32.totalorder %v1083, 16
      %vm1212 = vcmp.le.s32.totalorder %v1084, 16
      %vm1213 = vcmp.le.s32.totalorder %v1085, 16
      %vm1214 = vcmp.le.s32.totalorder %v1086, 16
      %vm1215 = vcmp.le.s32.totalorder %v1087, 16
      %vm1216 = vcmp.le.s32.totalorder %v1088, 16
      %vm1217 = vcmp.le.s32.totalorder %v1089, 16
      %vm1218 = vcmp.le.s32.totalorder %v1090, 16
      %vm1219 = vcmp.le.s32.totalorder %v1091, 16
      %vm1220 = vcmp.le.s32.totalorder %v1092, 16
      %vm1221 = vcmp.le.s32.totalorder %v1093, 16
      %vm1222 = vcmp.le.s32.totalorder %v1094, 16
      %vm1223 = vcmp.le.s32.totalorder %v1095, 16
      %vm1224 = vcmp.le.s32.totalorder %v1096, 16
      %vm1225 = vcmp.le.s32.totalorder %v1097, 16
      %vm1226 = vcmp.le.s32.totalorder %v1098, 16
      %vm1227 = vcmp.le.s32.totalorder %v1099, 16
      %vm1228 = vcmp.le.s32.totalorder %v1100, 16
      %vm1229 = vcmp.le.s32.totalorder %v1101, 16
      %vm1230 = vcmp.le.s32.totalorder %v1102, 16
      %vm1231 = vcmp.le.s32.totalorder %v1103, 16
      %vm1232 = vcmp.le.s32.totalorder %v1104, 16
      %vm1233 = vcmp.le.s32.totalorder %v1105, 16
      %vm1234 = vcmp.le.s32.totalorder %v1106, 16
      %vm1235 = vcmp.le.s32.totalorder %v1107, 16
      %vm1236 = vcmp.le.s32.totalorder %v1108, 16
      %vm1237 = vcmp.le.s32.totalorder %v1109, 16
      %vm1238 = vcmp.le.s32.totalorder %v1110, 16
      %vm1239 = vcmp.le.s32.totalorder %v1111, 16
      %vm1240 = vcmp.le.s32.totalorder %v1112, 16
      %vm1241 = vcmp.le.s32.totalorder %v1113, 16
      %vm1242 = vcmp.le.s32.totalorder %v1114, 16
      %vm1243 = vcmp.le.s32.totalorder %v1115, 16
      %vm1244 = vcmp.le.s32.totalorder %v1116, 16
      %vm1245 = vcmp.le.s32.totalorder %v1117, 16
      %vm1246 = vcmp.le.s32.totalorder %v1118, 16
      %vm1247 = vcmp.le.s32.totalorder %v1119, 16
      %vm1248 = vcmp.le.s32.totalorder %v1120, 16
      %vm1249 = vcmp.le.s32.totalorder %v1121, 16
      %vm1250 = vcmp.le.s32.totalorder %v1122, 16
      %vm1251 = vcmp.le.s32.totalorder %v1123, 16
      %vm1252 = vcmp.le.s32.totalorder %v1124, 16
      %vm1253 = vcmp.le.s32.totalorder %v1125, 16
      %vm1254 = vcmp.le.s32.totalorder %v1126, 16
      %vm1255 = vcmp.le.s32.totalorder %v1127, 16
      %vm1256 = vcmp.le.s32.totalorder %v1128, 16
      %vm1257 = vcmp.le.s32.totalorder %v1129, 16
      %vm1258 = vcmp.le.s32.totalorder %v1130, 16
      %vm1259 = vcmp.le.s32.totalorder %v1131, 16
      %vm1260 = vmand %vm1132, %vm1196
      %vm1261 = vmand %vm1133, %vm1197
      %vm1262 = vmand %vm1134, %vm1198
      %vm1263 = vmand %vm1135, %vm1199
      %vm1264 = vmand %vm1136, %vm1200
      %vm1265 = vmand %vm1137, %vm1201
      %vm1266 = vmand %vm1138, %vm1202
      %vm1267 = vmand %vm1139, %vm1203
      %vm1268 = vmand %vm1140, %vm1204
      %vm1269 = vmand %vm1141, %vm1205
      %vm1270 = vmand %vm1142, %vm1206
      %vm1271 = vmand %vm1143, %vm1207
      %vm1272 = vmand %vm1144, %vm1208
      %vm1273 = vmand %vm1145, %vm1209
      %vm1274 = vmand %vm1146, %vm1210
      %vm1275 = vmand %vm1147, %vm1211
      %vm1276 = vmand %vm1148, %vm1212
      %vm1277 = vmand %vm1149, %vm1213
      %vm1278 = vmand %vm1150, %vm1214
      %vm1279 = vmand %vm1151, %vm1215
      %vm1280 = vmand %vm1152, %vm1216
      %vm1281 = vmand %vm1153, %vm1217
      %vm1282 = vmand %vm1154, %vm1218
      %vm1283 = vmand %vm1155, %vm1219
      %vm1284 = vmand %vm1156, %vm1220
      %vm1285 = vmand %vm1157, %vm1221
      %vm1286 = vmand %vm1158, %vm1222
      %vm1287 = vmand %vm1159, %vm1223
      %vm1288 = vmand %vm1160, %vm1224
      %vm1289 = vmand %vm1161, %vm1225
      %vm1290 = vmand %vm1162, %vm1226
      %vm1291 = vmand %vm1163, %vm1227
      %vm1292 = vmand %vm1164, %vm1228
      %vm1293 = vmand %vm1165, %vm1229
      %vm1294 = vmand %vm1166, %vm1230
      %vm1295 = vmand %vm1167, %vm1231
      %vm1296 = vmand %vm1168, %vm1232
      %vm1297 = vmand %vm1169, %vm1233
      %vm1298 = vmand %vm1170, %vm1234
      %vm1299 = vmand %vm1171, %vm1235
      %vm1300 = vmand %vm1172, %vm1236
      %vm1301 = vmand %vm1173, %vm1237
      %vm1302 = vmand %vm1174, %vm1238
      %vm1303 = vmand %vm1175, %vm1239
      %vm1304 = vmand %vm1176, %vm1240
      %vm1305 = vmand %vm1177, %vm1241
      %vm1306 = vmand %vm1178, %vm1242
      %vm1307 = vmand %vm1179, %vm1243
      %vm1308 = vmand %vm1180, %vm1244
      %vm1309 = vmand %vm1181, %vm1245
      %vm1310 = vmand %vm1182, %vm1246
      %vm1311 = vmand %vm1183, %vm1247
      %vm1312 = vmand %vm1184, %vm1248
      %vm1313 = vmand %vm1185, %vm1249
      %vm1314 = vmand %vm1186, %vm1250
      %vm1315 = vmand %vm1187, %vm1251
      %vm1316 = vmand %vm1188, %vm1252
      %vm1317 = vmand %vm1189, %vm1253
      %vm1318 = vmand %vm1190, %vm1254
      %vm1319 = vmand %vm1191, %vm1255
      %vm1320 = vmand %vm1192, %vm1256
      %vm1321 = vmand %vm1193, %vm1257
      %vm1322 = vmand %vm1194, %vm1258
      %vm1323 = vmand %vm1195, %vm1259
      loop: start=0, step=1, limit=18
      $region29: #{dncnn_forward.1} parent=27 // loop_pre_header
        _
      $region30: #{dncnn_forward.1} parent=27 // loop_header
        %s1325 = sphi 0, %s1329
        %p1326 = scmp.ge.s32.totalorder %s1325, 18
      $region31: #{dncnn_forward.1} parent=27 // loop_header_branch
        %1328 = sbr.rel (%p1326) target = $region35
      $region32: #{dncnn_forward.1} parent=27 // loop_body
        %p1330 = scmp.lt.s32.totalorder %s1325, 0
        %s1331 = ssub.s32 0, %s1325
        %s1332 = scalar_select %p1330, %s1331, %s1325
        %s1333 = sand.u32 %s1332, 1
        %s1334 = ssub.s32 0, %s1333
        %s1335 = scalar_select %p1330, %s1334, %s1333
        %p1336 = scmp.ne.s32.totalorder %s1335, 0
        %p1337 = scmp.lt.s32.totalorder %s1335, 0
        %p1338 = pnand %p1337, %p1336
        %p1339 = pneg %p1338
        %s1340 = sadd.s32 %s1335, 2
        %s1341 = scalar_select %p1339, %s1340, %s1335
        %s1342 = ssub.s32 1, %s1341
        %s1343 = smul.u32 %s1341, 72
        %s1344 = smul.addr %s1343, 4
        %s1345 = scalar_lea.vmem [#allocation2], %s1344
        %v1346 = vld [vmem:[%s1345] sm:$0xf]
        %v1347 = vld [vmem:[%s1345 + $0x4] sm:$0xf]
        %v1348 = vld [vmem:[%s1345 + $0x8] sm:$0xf]
        %v1349 = vld [vmem:[%s1345 + $0xc] sm:$0xf]
        %v1350 = vld [vmem:[%s1345 + $0x10] sm:$0xf]
        %v1351 = vld [vmem:[%s1345 + $0x14] sm:$0xf]
        %v1352 = vld [vmem:[%s1345 + $0x18] sm:$0xf]
        %v1353 = vld [vmem:[%s1345 + $0x1c] sm:$0xf]
        %v1354 = vld [vmem:[%s1345 + $0x20] sm:$0xf]
        %v1355 = vld [vmem:[%s1345 + $0x24] sm:$0xf]
        %v1356 = vld [vmem:[%s1345 + $0x28] sm:$0xf]
        %v1357 = vld [vmem:[%s1345 + $0x2c] sm:$0xf]
        %v1358 = vld [vmem:[%s1345 + $0x30] sm:$0xf]
        %v1359 = vld [vmem:[%s1345 + $0x34] sm:$0xf]
        %v1360 = vld [vmem:[%s1345 + $0x38] sm:$0xf]
        %v1361 = vld [vmem:[%s1345 + $0x3c] sm:$0xf]
        %v1362 = vld [vmem:[%s1345 + $0x40] sm:$0xf]
        %v1363 = vld [vmem:[%s1345 + $0x44] sm:$0xf]
        %v1364 = vld [vmem:[%s1345 + $0x48] sm:$0xf]
        %v1365 = vld [vmem:[%s1345 + $0x4c] sm:$0xf]
        %v1366 = vld [vmem:[%s1345 + $0x50] sm:$0xf]
        %v1367 = vld [vmem:[%s1345 + $0x54] sm:$0xf]
        %v1368 = vld [vmem:[%s1345 + $0x58] sm:$0xf]
        %v1369 = vld [vmem:[%s1345 + $0x5c] sm:$0xf]
        %v1370 = vld [vmem:[%s1345 + $0x60] sm:$0xf]
        %v1371 = vld [vmem:[%s1345 + $0x64] sm:$0xf]
        %v1372 = vld [vmem:[%s1345 + $0x68] sm:$0xf]
        %v1373 = vld [vmem:[%s1345 + $0x6c] sm:$0xf]
        %v1374 = vld [vmem:[%s1345 + $0x70] sm:$0xf]
        %v1375 = vld [vmem:[%s1345 + $0x74] sm:$0xf]
        %v1376 = vld [vmem:[%s1345 + $0x78] sm:$0xf]
        %v1377 = vld [vmem:[%s1345 + $0x7c] sm:$0xf]
        %v1378 = vld [vmem:[%s1345 + $0x80] sm:$0xf]
        %v1379 = vld [vmem:[%s1345 + $0x84] sm:$0xf]
        %v1380 = vld [vmem:[%s1345 + $0x88] sm:$0xf]
        %v1381 = vld [vmem:[%s1345 + $0x8c] sm:$0xf]
        %v1382 = vld [vmem:[%s1345 + $0x90] sm:$0xf]
        %v1383 = vld [vmem:[%s1345 + $0x94] sm:$0xf]
        %v1384 = vld [vmem:[%s1345 + $0x98] sm:$0xf]
        %v1385 = vld [vmem:[%s1345 + $0x9c] sm:$0xf]
        %v1386 = vld [vmem:[%s1345 + $0xa0] sm:$0xf]
        %v1387 = vld [vmem:[%s1345 + $0xa4] sm:$0xf]
        %v1388 = vld [vmem:[%s1345 + $0xa8] sm:$0xf]
        %v1389 = vld [vmem:[%s1345 + $0xac] sm:$0xf]
        %v1390 = vld [vmem:[%s1345 + $0xb0] sm:$0xf]
        %v1391 = vld [vmem:[%s1345 + $0xb4] sm:$0xf]
        %v1392 = vld [vmem:[%s1345 + $0xb8] sm:$0xf]
        %v1393 = vld [vmem:[%s1345 + $0xbc] sm:$0xf]
        %v1394 = vld [vmem:[%s1345 + $0xc0] sm:$0xf]
        %v1395 = vld [vmem:[%s1345 + $0xc4] sm:$0xf]
        %v1396 = vld [vmem:[%s1345 + $0xc8] sm:$0xf]
        %v1397 = vld [vmem:[%s1345 + $0xcc] sm:$0xf]
        %v1398 = vld [vmem:[%s1345 + $0xd0] sm:$0xf]
        %v1399 = vld [vmem:[%s1345 + $0xd4] sm:$0xf]
        %v1400 = vld [vmem:[%s1345 + $0xd8] sm:$0xf]
        %v1401 = vld [vmem:[%s1345 + $0xdc] sm:$0xf]
        %v1402 = vld [vmem:[%s1345 + $0xe0] sm:$0xf]
        %v1403 = vld [vmem:[%s1345 + $0xe4] sm:$0xf]
        %v1404 = vld [vmem:[%s1345 + $0xe8] sm:$0xf]
        %v1405 = vld [vmem:[%s1345 + $0xec] sm:$0xf]
        %v1406 = vld [vmem:[%s1345 + $0xf0] sm:$0xf]
        %v1407 = vld [vmem:[%s1345 + $0xf4] sm:$0xf]
        %v1408 = vld [vmem:[%s1345 + $0xf8] sm:$0xf]
        %v1409 = vld [vmem:[%s1345 + $0xfc] sm:$0xf]
        %v1410 = vld [vmem:[%s1345 + $0x100] sm:$0xf]
        %v1411 = vld [vmem:[%s1345 + $0x104] sm:$0xf]
        %v1412 = vld [vmem:[%s1345 + $0x108] sm:$0xf]
        %v1413 = vld [vmem:[%s1345 + $0x10c] sm:$0xf]
        %v1414 = vld [vmem:[%s1345 + $0x110] sm:$0xf]
        %v1415 = vld [vmem:[%s1345 + $0x114] sm:$0xf]
        %v1416 = vld [vmem:[%s1345 + $0x118] sm:$0xf]
        %v1417 = vld [vmem:[%s1345 + $0x11c] sm:$0xf]
        %v1482 = vunpack.c.l.b16 %v1346
        %v1483 = vunpack.c.l.b16 %v1347
        %v1484 = vunpack.c.l.b16 %v1348
        %v1485 = vunpack.c.l.b16 %v1349
        %v1486 = vunpack.c.l.b16 %v1350
        %v1487 = vunpack.c.l.b16 %v1351
        %v1488 = vunpack.c.l.b16 %v1352
        %v1489 = vunpack.c.l.b16 %v1353
        %v1490 = vunpack.c.l.b16 %v1354
        %v1491 = vunpack.c.l.b16 %v1355
        %v1492 = vunpack.c.l.b16 %v1356
        %v1493 = vunpack.c.l.b16 %v1357
        %v1494 = vunpack.c.l.b16 %v1358
        %v1495 = vunpack.c.l.b16 %v1359
        %v1496 = vunpack.c.l.b16 %v1360
        %v1497 = vunpack.c.l.b16 %v1361
        %v1498 = vunpack.c.l.b16 %v1362
        %v1499 = vunpack.c.l.b16 %v1363
        %v1500 = vunpack.c.l.b16 %v1364
        %v1501 = vunpack.c.l.b16 %v1365
        %v1502 = vunpack.c.l.b16 %v1366
        %v1503 = vunpack.c.l.b16 %v1367
        %v1504 = vunpack.c.l.b16 %v1368
        %v1505 = vunpack.c.l.b16 %v1369
        %v1506 = vunpack.c.l.b16 %v1370
        %v1507 = vunpack.c.l.b16 %v1371
        %v1508 = vunpack.c.l.b16 %v1372
        %v1509 = vunpack.c.l.b16 %v1373
        %v1510 = vunpack.c.l.b16 %v1374
        %v1511 = vunpack.c.l.b16 %v1375
        %v1512 = vunpack.c.l.b16 %v1376
        %v1513 = vunpack.c.l.b16 %v1377
        %v1514 = vunpack.c.l.b16 %v1378
        %v1515 = vunpack.c.l.b16 %v1379
        %v1516 = vunpack.c.l.b16 %v1380
        %v1517 = vunpack.c.l.b16 %v1381
        %v1518 = vunpack.c.l.b16 %v1382
        %v1519 = vunpack.c.l.b16 %v1383
        %v1520 = vunpack.c.l.b16 %v1384
        %v1521 = vunpack.c.l.b16 %v1385
        %v1522 = vunpack.c.l.b16 %v1386
        %v1523 = vunpack.c.l.b16 %v1387
        %v1524 = vunpack.c.l.b16 %v1388
        %v1525 = vunpack.c.l.b16 %v1389
        %v1526 = vunpack.c.l.b16 %v1390
        %v1527 = vunpack.c.l.b16 %v1391
        %v1528 = vunpack.c.l.b16 %v1392
        %v1529 = vunpack.c.l.b16 %v1393
        %v1530 = vunpack.c.l.b16 %v1394
        %v1531 = vunpack.c.l.b16 %v1395
        %v1532 = vunpack.c.l.b16 %v1396
        %v1533 = vunpack.c.l.b16 %v1397
        %v1534 = vunpack.c.l.b16 %v1398
        %v1535 = vunpack.c.l.b16 %v1399
        %v1536 = vunpack.c.l.b16 %v1400
        %v1537 = vunpack.c.l.b16 %v1401
        %v1538 = vunpack.c.l.b16 %v1402
        %v1539 = vunpack.c.l.b16 %v1403
        %v1540 = vunpack.c.l.b16 %v1404
        %v1541 = vunpack.c.l.b16 %v1405
        %v1542 = vunpack.c.l.b16 %v1406
        %v1543 = vunpack.c.l.b16 %v1407
        %v1544 = vunpack.c.l.b16 %v1408
        %v1545 = vunpack.c.l.b16 %v1409
        %v1546 = vpack.c.b16 %v1483, %v1482
        %v1547 = vpack.c.b16 %v1485, %v1484
        %v1548 = vpack.c.b16 %v1487, %v1486
        %v1549 = vpack.c.b16 %v1489, %v1488
        %v1550 = vpack.c.b16 %v1491, %v1490
        %v1551 = vpack.c.b16 %v1493, %v1492
        %v1552 = vpack.c.b16 %v1495, %v1494
        %v1553 = vpack.c.b16 %v1497, %v1496
        %v1554 = vpack.c.b16 %v1499, %v1498
        %v1555 = vpack.c.b16 %v1501, %v1500
        %v1556 = vpack.c.b16 %v1503, %v1502
        %v1557 = vpack.c.b16 %v1505, %v1504
        %v1558 = vpack.c.b16 %v1507, %v1506
        %v1559 = vpack.c.b16 %v1509, %v1508
        %v1560 = vpack.c.b16 %v1511, %v1510
        %v1561 = vpack.c.b16 %v1513, %v1512
        %v1562 = vpack.c.b16 %v1515, %v1514
        %v1563 = vpack.c.b16 %v1517, %v1516
        %v1564 = vpack.c.b16 %v1519, %v1518
        %v1565 = vpack.c.b16 %v1521, %v1520
        %v1566 = vpack.c.b16 %v1523, %v1522
        %v1567 = vpack.c.b16 %v1525, %v1524
        %v1568 = vpack.c.b16 %v1527, %v1526
        %v1569 = vpack.c.b16 %v1529, %v1528
        %v1570 = vpack.c.b16 %v1531, %v1530
        %v1571 = vpack.c.b16 %v1533, %v1532
        %v1572 = vpack.c.b16 %v1535, %v1534
        %v1573 = vpack.c.b16 %v1537, %v1536
        %v1574 = vpack.c.b16 %v1539, %v1538
        %v1575 = vpack.c.b16 %v1541, %v1540
        %v1576 = vpack.c.b16 %v1543, %v1542
        %v1577 = vpack.c.b16 %v1545, %v1544
        %v1582 = vunpack.c.l.b16 %v1410
        %v1583 = vunpack.c.l.b16 %v1411
        %v1584 = vunpack.c.l.b16 %v1412
        %v1585 = vunpack.c.l.b16 %v1413
        %v1586 = vpack.c.b16 %v1583, %v1582
        %v1587 = vpack.c.b16 %v1585, %v1584
        %1588 = vrot.lane.b32.xlu0 %v1548, 64
        %v1589 = vpop.permute.xlu0 %1588
        %1590 = vrot.lane.b32.xlu0 %v1549, 64
        %v1591 = vpop.permute.xlu0 %1590
        %1592 = vrot.lane.b32.xlu0 %v1550, 64
        %v1593 = vpop.permute.xlu0 %1592
        %1594 = vrot.lane.b32.xlu0 %v1551, 64
        %v1595 = vpop.permute.xlu0 %1594
        %1596 = vrot.lane.b32.xlu0 %v1552, 64
        %v1597 = vpop.permute.xlu0 %1596
        %1598 = vrot.lane.b32.xlu0 %v1553, 64
        %v1599 = vpop.permute.xlu0 %1598
        %1600 = vrot.lane.b32.xlu0 %v1554, 64
        %v1601 = vpop.permute.xlu0 %1600
        %1602 = vrot.lane.b32.xlu0 %v1555, 64
        %v1603 = vpop.permute.xlu0 %1602
        %1604 = vrot.lane.b32.xlu0 %v1556, 64
        %v1605 = vpop.permute.xlu0 %1604
        %1606 = vrot.lane.b32.xlu0 %v1557, 64
        %v1607 = vpop.permute.xlu0 %1606
        %1608 = vrot.lane.b32.xlu0 %v1558, 64
        %v1609 = vpop.permute.xlu0 %1608
        %1610 = vrot.lane.b32.xlu0 %v1559, 64
        %v1611 = vpop.permute.xlu0 %1610
        %1612 = vrot.lane.b32.xlu0 %v1560, 64
        %v1613 = vpop.permute.xlu0 %1612
        %1614 = vrot.lane.b32.xlu0 %v1561, 64
        %v1615 = vpop.permute.xlu0 %1614
        %1616 = vrot.lane.b32.xlu0 %v1562, 64
        %v1617 = vpop.permute.xlu0 %1616
        %1618 = vrot.lane.b32.xlu0 %v1563, 64
        %v1619 = vpop.permute.xlu0 %1618
        %1620 = vrot.lane.b32.xlu0 %v1564, 64
        %v1621 = vpop.permute.xlu0 %1620
        %1622 = vrot.lane.b32.xlu0 %v1565, 64
        %v1623 = vpop.permute.xlu0 %1622
        %1624 = vrot.lane.b32.xlu0 %v1566, 64
        %v1625 = vpop.permute.xlu0 %1624
        %1626 = vrot.lane.b32.xlu0 %v1567, 64
        %v1627 = vpop.permute.xlu0 %1626
        %1628 = vrot.lane.b32.xlu0 %v1568, 64
        %v1629 = vpop.permute.xlu0 %1628
        %1630 = vrot.lane.b32.xlu0 %v1569, 64
        %v1631 = vpop.permute.xlu0 %1630
        %1632 = vrot.lane.b32.xlu0 %v1570, 64
        %v1633 = vpop.permute.xlu0 %1632
        %1634 = vrot.lane.b32.xlu0 %v1571, 64
        %v1635 = vpop.permute.xlu0 %1634
        %1636 = vrot.lane.b32.xlu0 %v1572, 64
        %v1637 = vpop.permute.xlu0 %1636
        %1638 = vrot.lane.b32.xlu0 %v1573, 64
        %v1639 = vpop.permute.xlu0 %1638
        %1640 = vrot.lane.b32.xlu0 %v1574, 64
        %v1641 = vpop.permute.xlu0 %1640
        %1642 = vrot.lane.b32.xlu0 %v1575, 64
        %v1643 = vpop.permute.xlu0 %1642
        %1644 = vrot.lane.b32.xlu0 %v1576, 64
        %v1645 = vpop.permute.xlu0 %1644
        %1646 = vrot.lane.b32.xlu0 %v1577, 64
        %v1647 = vpop.permute.xlu0 %1646
        %1648 = vrot.lane.b32.xlu0 %v1586, 64
        %v1649 = vpop.permute.xlu0 %1648
        %1650 = vrot.lane.b32.xlu0 %v1587, 64
        %v1651 = vpop.permute.xlu0 %1650
        %v1656 = vunpack.c.l.b16 %v1414
        %v1657 = vunpack.c.l.b16 %v1415
        %v1658 = vunpack.c.l.b16 %v1416
        %v1659 = vunpack.c.l.b16 %v1417
        %v1660 = vpack.c.b16 %v1657, %v1656
        %v1661 = vpack.c.b16 %v1659, %v1658
        %vm1662 = vcmask 523264
        %v1665 = vsel %vm1662, %v1546, %v1589
        %v1669 = vsel %vm1662, %v1547, %v1591
        %v1673 = vsel %vm1662, %v1548, %v1593
        %v1677 = vsel %vm1662, %v1549, %v1595
        %v1681 = vsel %vm1662, %v1550, %v1597
        %v1685 = vsel %vm1662, %v1551, %v1599
        %v1689 = vsel %vm1662, %v1552, %v1601
        %v1693 = vsel %vm1662, %v1553, %v1603
        %v1697 = vsel %vm1662, %v1554, %v1605
        %v1701 = vsel %vm1662, %v1555, %v1607
        %v1705 = vsel %vm1662, %v1556, %v1609
        %v1709 = vsel %vm1662, %v1557, %v1611
        %v1713 = vsel %vm1662, %v1558, %v1613
        %v1717 = vsel %vm1662, %v1559, %v1615
        %v1721 = vsel %vm1662, %v1560, %v1617
        %v1725 = vsel %vm1662, %v1561, %v1619
        %v1729 = vsel %vm1662, %v1562, %v1621
        %v1733 = vsel %vm1662, %v1563, %v1623
        %v1737 = vsel %vm1662, %v1564, %v1625
        %v1741 = vsel %vm1662, %v1565, %v1627
        %v1745 = vsel %vm1662, %v1566, %v1629
        %v1749 = vsel %vm1662, %v1567, %v1631
        %v1753 = vsel %vm1662, %v1568, %v1633
        %v1757 = vsel %vm1662, %v1569, %v1635
        %v1761 = vsel %vm1662, %v1570, %v1637
        %v1765 = vsel %vm1662, %v1571, %v1639
        %v1769 = vsel %vm1662, %v1572, %v1641
        %v1773 = vsel %vm1662, %v1573, %v1643
        %v1777 = vsel %vm1662, %v1574, %v1645
        %v1781 = vsel %vm1662, %v1575, %v1647
        %v1785 = vsel %vm1662, %v1576, %v1649
        %v1789 = vsel %vm1662, %v1577, %v1651
        %s1791 = smul.u32 %s1325, 48
        %s1792 = smul.addr %s1791, 4
        %s1793 = scalar_lea.vmem %s1, %s1792
        %v1794 = vld [vmem:[%s1793] sm:$0xff]
        %v1795 = vld [vmem:[%s1793 + $0x8] sm:$0xff]
        %v1796 = vld [vmem:[%s1793 + $0x10] sm:$0xff]
        %v1797 = vld [vmem:[%s1793 + $0x18] sm:$0xff]
        %v1798 = vld [vmem:[%s1793 + $0x20] sm:$0xff]
        %v1799 = vld [vmem:[%s1793 + $0x28] sm:$0xff]
        %v1800 = vld [vmem:[%s1793 + $0x30] sm:$0xff]
        %v1801 = vld [vmem:[%s1793 + $0x38] sm:$0xff]
        %v1802 = vld [vmem:[%s1793 + $0x40] sm:$0xff]
        %v1803 = vld [vmem:[%s1793 + $0x48] sm:$0xff]
        %v1804 = vld [vmem:[%s1793 + $0x50] sm:$0xff]
        %v1805 = vld [vmem:[%s1793 + $0x58] sm:$0xff]
        %v1806 = vld [vmem:[%s1793 + $0x60] sm:$0xff]
        %v1807 = vld [vmem:[%s1793 + $0x68] sm:$0xff]
        %v1808 = vld [vmem:[%s1793 + $0x70] sm:$0xff]
        %v1809 = vld [vmem:[%s1793 + $0x78] sm:$0xff]
        %v1810 = vld [vmem:[%s1793 + $0x80] sm:$0xff]
        %v1811 = vld [vmem:[%s1793 + $0x88] sm:$0xff]
        %v1812 = vld [vmem:[%s1793 + $0x90] sm:$0xff]
        %v1813 = vld [vmem:[%s1793 + $0x98] sm:$0xff]
        %v1814 = vld [vmem:[%s1793 + $0xa0] sm:$0xff]
        %v1815 = vld [vmem:[%s1793 + $0xa8] sm:$0xff]
        %v1816 = vld [vmem:[%s1793 + $0xb0] sm:$0xff]
        %v1817 = vld [vmem:[%s1793 + $0xb8] sm:$0xff]
        %v1842 = vunpack.c.l.b16 %v1794
        %v1843 = vunpack.c.h.b16 %v1794
        %v1844 = vunpack.c.l.b16 %v1795
        %v1845 = vunpack.c.h.b16 %v1795
        %v1846 = vunpack.c.l.b16 %v1796
        %v1847 = vunpack.c.h.b16 %v1796
        %v1848 = vunpack.c.l.b16 %v1797
        %v1849 = vunpack.c.h.b16 %v1797
        %v1850 = vunpack.c.l.b16 %v1798
        %v1851 = vunpack.c.h.b16 %v1798
        %v1852 = vunpack.c.l.b16 %v1799
        %v1853 = vunpack.c.h.b16 %v1799
        %v1854 = vunpack.c.l.b16 %v1800
        %v1855 = vunpack.c.h.b16 %v1800
        %v1856 = vunpack.c.l.b16 %v1801
        %v1857 = vunpack.c.h.b16 %v1801
        %v1858 = vunpack.c.l.b16 %v1802
        %v1859 = vunpack.c.h.b16 %v1802
        %v1860 = vunpack.c.l.b16 %v1803
        %v1861 = vunpack.c.h.b16 %v1803
        %v1862 = vunpack.c.l.b16 %v1804
        %v1863 = vunpack.c.h.b16 %v1804
        %v1864 = vunpack.c.l.b16 %v1805
        %v1865 = vunpack.c.h.b16 %v1805
        %v1866 = vunpack.c.l.b16 %v1806
        %v1867 = vunpack.c.h.b16 %v1806
        %v1868 = vunpack.c.l.b16 %v1807
        %v1869 = vunpack.c.h.b16 %v1807
        %v1870 = vunpack.c.l.b16 %v1808
        %v1871 = vunpack.c.h.b16 %v1808
        %v1872 = vunpack.c.l.b16 %v1809
        %v1873 = vunpack.c.h.b16 %v1809
        %v1874 = vunpack.c.l.b16 %v1810
        %v1875 = vunpack.c.h.b16 %v1810
        %v1876 = vunpack.c.l.b16 %v1811
        %v1877 = vunpack.c.h.b16 %v1811
        %v1878 = vunpack.c.l.b16 %v1812
        %v1879 = vunpack.c.h.b16 %v1812
        %v1880 = vunpack.c.l.b16 %v1813
        %v1881 = vunpack.c.h.b16 %v1813
        %v1882 = vunpack.c.l.b16 %v1814
        %v1883 = vunpack.c.h.b16 %v1814
        %v1884 = vunpack.c.l.b16 %v1815
        %v1885 = vunpack.c.h.b16 %v1815
        %v1886 = vunpack.c.l.b16 %v1816
        %v1887 = vunpack.c.h.b16 %v1816
        %v1888 = vunpack.c.l.b16 %v1817
        %v1889 = vunpack.c.h.b16 %v1817
        %v1890 = vpack.c.b16 %v1844, %v1842
        %v1891 = vpack.c.b16 %v1845, %v1843
        %v1892 = vpack.c.b16 %v1848, %v1846
        %v1893 = vpack.c.b16 %v1849, %v1847
        %v1894 = vpack.c.b16 %v1852, %v1850
        %v1895 = vpack.c.b16 %v1853, %v1851
        %v1896 = vpack.c.b16 %v1856, %v1854
        %v1897 = vpack.c.b16 %v1857, %v1855
        %v1898 = vpack.c.b16 %v1860, %v1858
        %v1899 = vpack.c.b16 %v1861, %v1859
        %v1900 = vpack.c.b16 %v1864, %v1862
        %v1901 = vpack.c.b16 %v1865, %v1863
        %v1902 = vpack.c.b16 %v1868, %v1866
        %v1903 = vpack.c.b16 %v1869, %v1867
        %v1904 = vpack.c.b16 %v1872, %v1870
        %v1905 = vpack.c.b16 %v1873, %v1871
        %v1906 = vpack.c.b16 %v1876, %v1874
        %v1907 = vpack.c.b16 %v1877, %v1875
        %v1908 = vpack.c.b16 %v1880, %v1878
        %v1909 = vpack.c.b16 %v1881, %v1879
        %v1910 = vpack.c.b16 %v1884, %v1882
        %v1911 = vpack.c.b16 %v1885, %v1883
        %v1912 = vpack.c.b16 %v1888, %v1886
        %v1913 = vpack.c.b16 %v1889, %v1887
        %v1938 = vsel %vm1662, %v1550, 0
        %v1940 = vsel %vm1662, %v1551, 0
        %v1942 = vsel %vm1662, %v1552, 0
        %v1944 = vsel %vm1662, %v1553, 0
        %v1946 = vsel %vm1662, %v1554, 0
        %v1948 = vsel %vm1662, %v1555, 0
        %v1950 = vsel %vm1662, %v1556, 0
        %v1952 = vsel %vm1662, %v1557, 0
        %v1954 = vsel %vm1662, %v1558, 0
        %v1956 = vsel %vm1662, %v1559, 0
        %v1958 = vsel %vm1662, %v1560, 0
        %v1960 = vsel %vm1662, %v1561, 0
        %v1962 = vsel %vm1662, %v1562, 0
        %v1964 = vsel %vm1662, %v1563, 0
        %v1966 = vsel %vm1662, %v1564, 0
        %v1968 = vsel %vm1662, %v1565, 0
        %v1970 = vsel %vm1662, %v1566, 0
        %v1972 = vsel %vm1662, %v1567, 0
        %v1974 = vsel %vm1662, %v1568, 0
        %v1976 = vsel %vm1662, %v1569, 0
        %v1978 = vsel %vm1662, %v1570, 0
        %v1980 = vsel %vm1662, %v1571, 0
        %v1982 = vsel %vm1662, %v1572, 0
        %v1984 = vsel %vm1662, %v1573, 0
        %v1986 = vsel %vm1662, %v1574, 0
        %v1988 = vsel %vm1662, %v1575, 0
        %v1990 = vsel %vm1662, %v1576, 0
        %v1992 = vsel %vm1662, %v1577, 0
        %v1995 = vsel %vm1662, %v1586, 0
        %v1998 = vsel %vm1662, %v1587, 0
        %v2001 = vsel %vm1662, %v1660, 0
        %v2004 = vsel %vm1662, %v1661, 0
        %2006 = vmatpush.bf16.msra.mxu0 %v1904
        %2007 = vmatpush.bf16.msra.mxu0 %v1902
        %2008 = vmatpush.bf16.msra.mxu0 %v1900
        %2009 = vmatpush.bf16.msra.mxu0 %v1898
        %2010 = vmatpush.bf16.msra.mxu0 %v1896
        %2011 = vmatpush.bf16.msra.mxu0 %v1894
        %2012 = vmatpush.bf16.msra.mxu0 %v1892
        %2013 = vmatpush.bf16.msra.mxu0 %v1890
        %2014 = vmatmul.bf16.gmra.mxu0 %v1665
        %v2015 = vpop.f32.mrf.mxu0
        %v2016 = vadd.f32 0.0, %v2015
        %v2017 = vpop.f32.mrf.mxu0
        %v2018 = vadd.f32 0.0, %v2017
        %2019 = vmatmul.bf16.gmra.mxu0 %v1669
        %v2020 = vpop.f32.mrf.mxu0
        %v2021 = vadd.f32 0.0, %v2020
        %v2022 = vpop.f32.mrf.mxu0
        %v2023 = vadd.f32 0.0, %v2022
        %2024 = vmatmul.bf16.gmra.mxu0 %v1673
        %v2025 = vpop.f32.mrf.mxu0
        %v2026 = vadd.f32 0.0, %v2025
        %v2027 = vpop.f32.mrf.mxu0
        %v2028 = vadd.f32 0.0, %v2027
        %2029 = vmatmul.bf16.gmra.mxu0 %v1677
        %v2030 = vpop.f32.mrf.mxu0
        %v2031 = vadd.f32 0.0, %v2030
        %v2032 = vpop.f32.mrf.mxu0
        %v2033 = vadd.f32 0.0, %v2032
        %2034 = vmatmul.bf16.gmra.mxu0 %v1681
        %v2035 = vpop.f32.mrf.mxu0
        %v2036 = vadd.f32 0.0, %v2035
        %v2037 = vpop.f32.mrf.mxu0
        %v2038 = vadd.f32 0.0, %v2037
        %2039 = vmatmul.bf16.gmra.mxu0 %v1685
        %v2040 = vpop.f32.mrf.mxu0
        %v2041 = vadd.f32 0.0, %v2040
        %v2042 = vpop.f32.mrf.mxu0
        %v2043 = vadd.f32 0.0, %v2042
        %2044 = vmatmul.bf16.gmra.mxu0 %v1689
        %v2045 = vpop.f32.mrf.mxu0
        %v2046 = vadd.f32 0.0, %v2045
        %v2047 = vpop.f32.mrf.mxu0
        %v2048 = vadd.f32 0.0, %v2047
        %2049 = vmatmul.bf16.gmra.mxu0 %v1693
        %v2050 = vpop.f32.mrf.mxu0
        %v2051 = vadd.f32 0.0, %v2050
        %v2052 = vpop.f32.mrf.mxu0
        %v2053 = vadd.f32 0.0, %v2052
        %2054 = vmatmul.bf16.gmra.mxu0 %v1697
        %v2055 = vpop.f32.mrf.mxu0
        %v2056 = vadd.f32 0.0, %v2055
        %v2057 = vpop.f32.mrf.mxu0
        %v2058 = vadd.f32 0.0, %v2057
        %2059 = vmatmul.bf16.gmra.mxu0 %v1701
        %v2060 = vpop.f32.mrf.mxu0
        %v2061 = vadd.f32 0.0, %v2060
        %v2062 = vpop.f32.mrf.mxu0
        %v2063 = vadd.f32 0.0, %v2062
        %2064 = vmatmul.bf16.gmra.mxu0 %v1705
        %v2065 = vpop.f32.mrf.mxu0
        %v2066 = vadd.f32 0.0, %v2065
        %v2067 = vpop.f32.mrf.mxu0
        %v2068 = vadd.f32 0.0, %v2067
        %2069 = vmatmul.bf16.gmra.mxu0 %v1709
        %v2070 = vpop.f32.mrf.mxu0
        %v2071 = vadd.f32 0.0, %v2070
        %v2072 = vpop.f32.mrf.mxu0
        %v2073 = vadd.f32 0.0, %v2072
        %2074 = vmatmul.bf16.gmra.mxu0 %v1713
        %v2075 = vpop.f32.mrf.mxu0
        %v2076 = vadd.f32 0.0, %v2075
        %v2077 = vpop.f32.mrf.mxu0
        %v2078 = vadd.f32 0.0, %v2077
        %2079 = vmatmul.bf16.gmra.mxu0 %v1717
        %v2080 = vpop.f32.mrf.mxu0
        %v2081 = vadd.f32 0.0, %v2080
        %v2082 = vpop.f32.mrf.mxu0
        %v2083 = vadd.f32 0.0, %v2082
        %2084 = vmatmul.bf16.gmra.mxu0 %v1721
        %v2085 = vpop.f32.mrf.mxu0
        %v2086 = vadd.f32 0.0, %v2085
        %v2087 = vpop.f32.mrf.mxu0
        %v2088 = vadd.f32 0.0, %v2087
        %2089 = vmatmul.bf16.gmra.mxu0 %v1725
        %v2090 = vpop.f32.mrf.mxu0
        %v2091 = vadd.f32 0.0, %v2090
        %v2092 = vpop.f32.mrf.mxu0
        %v2093 = vadd.f32 0.0, %v2092
        %2094 = vmatmul.bf16.gmra.mxu0 %v1729
        %v2095 = vpop.f32.mrf.mxu0
        %v2096 = vadd.f32 0.0, %v2095
        %v2097 = vpop.f32.mrf.mxu0
        %v2098 = vadd.f32 0.0, %v2097
        %2099 = vmatmul.bf16.gmra.mxu0 %v1733
        %v2100 = vpop.f32.mrf.mxu0
        %v2101 = vadd.f32 0.0, %v2100
        %v2102 = vpop.f32.mrf.mxu0
        %v2103 = vadd.f32 0.0, %v2102
        %2104 = vmatmul.bf16.gmra.mxu0 %v1737
        %v2105 = vpop.f32.mrf.mxu0
        %v2106 = vadd.f32 0.0, %v2105
        %v2107 = vpop.f32.mrf.mxu0
        %v2108 = vadd.f32 0.0, %v2107
        %2109 = vmatmul.bf16.gmra.mxu0 %v1741
        %v2110 = vpop.f32.mrf.mxu0
        %v2111 = vadd.f32 0.0, %v2110
        %v2112 = vpop.f32.mrf.mxu0
        %v2113 = vadd.f32 0.0, %v2112
        %2114 = vmatmul.bf16.gmra.mxu0 %v1745
        %v2115 = vpop.f32.mrf.mxu0
        %v2116 = vadd.f32 0.0, %v2115
        %v2117 = vpop.f32.mrf.mxu0
        %v2118 = vadd.f32 0.0, %v2117
        %2119 = vmatmul.bf16.gmra.mxu0 %v1749
        %v2120 = vpop.f32.mrf.mxu0
        %v2121 = vadd.f32 0.0, %v2120
        %v2122 = vpop.f32.mrf.mxu0
        %v2123 = vadd.f32 0.0, %v2122
        %2124 = vmatmul.bf16.gmra.mxu0 %v1753
        %v2125 = vpop.f32.mrf.mxu0
        %v2126 = vadd.f32 0.0, %v2125
        %v2127 = vpop.f32.mrf.mxu0
        %v2128 = vadd.f32 0.0, %v2127
        %2129 = vmatmul.bf16.gmra.mxu0 %v1757
        %v2130 = vpop.f32.mrf.mxu0
        %v2131 = vadd.f32 0.0, %v2130
        %v2132 = vpop.f32.mrf.mxu0
        %v2133 = vadd.f32 0.0, %v2132
        %2134 = vmatmul.bf16.gmra.mxu0 %v1761
        %v2135 = vpop.f32.mrf.mxu0
        %v2136 = vadd.f32 0.0, %v2135
        %v2137 = vpop.f32.mrf.mxu0
        %v2138 = vadd.f32 0.0, %v2137
        %2139 = vmatmul.bf16.gmra.mxu0 %v1765
        %v2140 = vpop.f32.mrf.mxu0
        %v2141 = vadd.f32 0.0, %v2140
        %v2142 = vpop.f32.mrf.mxu0
        %v2143 = vadd.f32 0.0, %v2142
        %2144 = vmatmul.bf16.gmra.mxu0 %v1769
        %v2145 = vpop.f32.mrf.mxu0
        %v2146 = vadd.f32 0.0, %v2145
        %v2147 = vpop.f32.mrf.mxu0
        %v2148 = vadd.f32 0.0, %v2147
        %2149 = vmatmul.bf16.gmra.mxu0 %v1773
        %v2150 = vpop.f32.mrf.mxu0
        %v2151 = vadd.f32 0.0, %v2150
        %v2152 = vpop.f32.mrf.mxu0
        %v2153 = vadd.f32 0.0, %v2152
        %2154 = vmatmul.bf16.gmra.mxu0 %v1777
        %v2155 = vpop.f32.mrf.mxu0
        %v2156 = vadd.f32 0.0, %v2155
        %v2157 = vpop.f32.mrf.mxu0
        %v2158 = vadd.f32 0.0, %v2157
        %2159 = vmatmul.bf16.gmra.mxu0 %v1781
        %v2160 = vpop.f32.mrf.mxu0
        %v2161 = vadd.f32 0.0, %v2160
        %v2162 = vpop.f32.mrf.mxu0
        %v2163 = vadd.f32 0.0, %v2162
        %2164 = vmatmul.bf16.gmra.mxu0 %v1785
        %v2165 = vpop.f32.mrf.mxu0
        %v2166 = vadd.f32 0.0, %v2165
        %v2167 = vpop.f32.mrf.mxu0
        %v2168 = vadd.f32 0.0, %v2167
        %2169 = vmatmul.bf16.gmra.mxu0 %v1789
        %v2170 = vpop.f32.mrf.mxu0
        %v2171 = vadd.f32 0.0, %v2170
        %v2172 = vpop.f32.mrf.mxu0
        %v2173 = vadd.f32 0.0, %v2172
        %2174 = vdwg.mxu0
        %2175 = vmatpush.bf16.msra.mxu0 0
        %2176 = vmatpush.bf16.msra.mxu0 0
        %2177 = vmatpush.bf16.msra.mxu0 0
        %2178 = vmatpush.bf16.msra.mxu0 0
        %2179 = vmatpush.bf16.msra.mxu0 %v1912
        %2180 = vmatpush.bf16.msra.mxu0 %v1910
        %2181 = vmatpush.bf16.msra.mxu0 %v1908
        %2182 = vmatpush.bf16.msra.mxu0 %v1906
        %2183 = vmatmul.bf16.gmra.mxu0 %v1938
        %v2184 = vpop.f32.mrf.mxu0
        %v2185 = vadd.f32 %v2016, %v2184
        %v2186 = vpop.f32.mrf.mxu0
        %v2187 = vadd.f32 %v2018, %v2186
        %2188 = vmatmul.bf16.gmra.mxu0 %v1940
        %v2189 = vpop.f32.mrf.mxu0
        %v2190 = vadd.f32 %v2021, %v2189
        %v2191 = vpop.f32.mrf.mxu0
        %v2192 = vadd.f32 %v2023, %v2191
        %2193 = vmatmul.bf16.gmra.mxu0 %v1942
        %v2194 = vpop.f32.mrf.mxu0
        %v2195 = vadd.f32 %v2026, %v2194
        %v2196 = vpop.f32.mrf.mxu0
        %v2197 = vadd.f32 %v2028, %v2196
        %2198 = vmatmul.bf16.gmra.mxu0 %v1944
        %v2199 = vpop.f32.mrf.mxu0
        %v2200 = vadd.f32 %v2031, %v2199
        %v2201 = vpop.f32.mrf.mxu0
        %v2202 = vadd.f32 %v2033, %v2201
        %2203 = vmatmul.bf16.gmra.mxu0 %v1946
        %v2204 = vpop.f32.mrf.mxu0
        %v2205 = vadd.f32 %v2036, %v2204
        %v2206 = vpop.f32.mrf.mxu0
        %v2207 = vadd.f32 %v2038, %v2206
        %2208 = vmatmul.bf16.gmra.mxu0 %v1948
        %v2209 = vpop.f32.mrf.mxu0
        %v2210 = vadd.f32 %v2041, %v2209
        %v2211 = vpop.f32.mrf.mxu0
        %v2212 = vadd.f32 %v2043, %v2211
        %2213 = vmatmul.bf16.gmra.mxu0 %v1950
        %v2214 = vpop.f32.mrf.mxu0
        %v2215 = vadd.f32 %v2046, %v2214
        %v2216 = vpop.f32.mrf.mxu0
        %v2217 = vadd.f32 %v2048, %v2216
        %2218 = vmatmul.bf16.gmra.mxu0 %v1952
        %v2219 = vpop.f32.mrf.mxu0
        %v2220 = vadd.f32 %v2051, %v2219
        %v2221 = vpop.f32.mrf.mxu0
        %v2222 = vadd.f32 %v2053, %v2221
        %2223 = vmatmul.bf16.gmra.mxu0 %v1954
        %v2224 = vpop.f32.mrf.mxu0
        %v2225 = vadd.f32 %v2056, %v2224
        %v2226 = vpop.f32.mrf.mxu0
        %v2227 = vadd.f32 %v2058, %v2226
        %2228 = vmatmul.bf16.gmra.mxu0 %v1956
        %v2229 = vpop.f32.mrf.mxu0
        %v2230 = vadd.f32 %v2061, %v2229
        %v2231 = vpop.f32.mrf.mxu0
        %v2232 = vadd.f32 %v2063, %v2231
        %2233 = vmatmul.bf16.gmra.mxu0 %v1958
        %v2234 = vpop.f32.mrf.mxu0
        %v2235 = vadd.f32 %v2066, %v2234
        %v2236 = vpop.f32.mrf.mxu0
        %v2237 = vadd.f32 %v2068, %v2236
        %2238 = vmatmul.bf16.gmra.mxu0 %v1960
        %v2239 = vpop.f32.mrf.mxu0
        %v2240 = vadd.f32 %v2071, %v2239
        %v2241 = vpop.f32.mrf.mxu0
        %v2242 = vadd.f32 %v2073, %v2241
        %2243 = vmatmul.bf16.gmra.mxu0 %v1962
        %v2244 = vpop.f32.mrf.mxu0
        %v2245 = vadd.f32 %v2076, %v2244
        %v2246 = vpop.f32.mrf.mxu0
        %v2247 = vadd.f32 %v2078, %v2246
        %2248 = vmatmul.bf16.gmra.mxu0 %v1964
        %v2249 = vpop.f32.mrf.mxu0
        %v2250 = vadd.f32 %v2081, %v2249
        %v2251 = vpop.f32.mrf.mxu0
        %v2252 = vadd.f32 %v2083, %v2251
        %2253 = vmatmul.bf16.gmra.mxu0 %v1966
        %v2254 = vpop.f32.mrf.mxu0
        %v2255 = vadd.f32 %v2086, %v2254
        %v2256 = vpop.f32.mrf.mxu0
        %v2257 = vadd.f32 %v2088, %v2256
        %2258 = vmatmul.bf16.gmra.mxu0 %v1968
        %v2259 = vpop.f32.mrf.mxu0
        %v2260 = vadd.f32 %v2091, %v2259
        %v2261 = vpop.f32.mrf.mxu0
        %v2262 = vadd.f32 %v2093, %v2261
        %2263 = vmatmul.bf16.gmra.mxu0 %v1970
        %v2264 = vpop.f32.mrf.mxu0
        %v2265 = vadd.f32 %v2096, %v2264
        %v2266 = vpop.f32.mrf.mxu0
        %v2267 = vadd.f32 %v2098, %v2266
        %2268 = vmatmul.bf16.gmra.mxu0 %v1972
        %v2269 = vpop.f32.mrf.mxu0
        %v2270 = vadd.f32 %v2101, %v2269
        %v2271 = vpop.f32.mrf.mxu0
        %v2272 = vadd.f32 %v2103, %v2271
        %2273 = vmatmul.bf16.gmra.mxu0 %v1974
        %v2274 = vpop.f32.mrf.mxu0
        %v2275 = vadd.f32 %v2106, %v2274
        %v2276 = vpop.f32.mrf.mxu0
        %v2277 = vadd.f32 %v2108, %v2276
        %2278 = vmatmul.bf16.gmra.mxu0 %v1976
        %v2279 = vpop.f32.mrf.mxu0
        %v2280 = vadd.f32 %v2111, %v2279
        %v2281 = vpop.f32.mrf.mxu0
        %v2282 = vadd.f32 %v2113, %v2281
        %2283 = vmatmul.bf16.gmra.mxu0 %v1978
        %v2284 = vpop.f32.mrf.mxu0
        %v2285 = vadd.f32 %v2116, %v2284
        %v2286 = vpop.f32.mrf.mxu0
        %v2287 = vadd.f32 %v2118, %v2286
        %2288 = vmatmul.bf16.gmra.mxu0 %v1980
        %v2289 = vpop.f32.mrf.mxu0
        %v2290 = vadd.f32 %v2121, %v2289
        %v2291 = vpop.f32.mrf.mxu0
        %v2292 = vadd.f32 %v2123, %v2291
        %2293 = vmatmul.bf16.gmra.mxu0 %v1982
        %v2294 = vpop.f32.mrf.mxu0
        %v2295 = vadd.f32 %v2126, %v2294
        %v2296 = vpop.f32.mrf.mxu0
        %v2297 = vadd.f32 %v2128, %v2296
        %2298 = vmatmul.bf16.gmra.mxu0 %v1984
        %v2299 = vpop.f32.mrf.mxu0
        %v2300 = vadd.f32 %v2131, %v2299
        %v2301 = vpop.f32.mrf.mxu0
        %v2302 = vadd.f32 %v2133, %v2301
        %2303 = vmatmul.bf16.gmra.mxu0 %v1986
        %v2304 = vpop.f32.mrf.mxu0
        %v2305 = vadd.f32 %v2136, %v2304
        %v2306 = vpop.f32.mrf.mxu0
        %v2307 = vadd.f32 %v2138, %v2306
        %2308 = vmatmul.bf16.gmra.mxu0 %v1988
        %v2309 = vpop.f32.mrf.mxu0
        %v2310 = vadd.f32 %v2141, %v2309
        %v2311 = vpop.f32.mrf.mxu0
        %v2312 = vadd.f32 %v2143, %v2311
        %2313 = vmatmul.bf16.gmra.mxu0 %v1990
        %v2314 = vpop.f32.mrf.mxu0
        %v2315 = vadd.f32 %v2146, %v2314
        %v2316 = vpop.f32.mrf.mxu0
        %v2317 = vadd.f32 %v2148, %v2316
        %2318 = vmatmul.bf16.gmra.mxu0 %v1992
        %v2319 = vpop.f32.mrf.mxu0
        %v2320 = vadd.f32 %v2151, %v2319
        %v2321 = vpop.f32.mrf.mxu0
        %v2322 = vadd.f32 %v2153, %v2321
        %2323 = vmatmul.bf16.gmra.mxu0 %v1995
        %v2324 = vpop.f32.mrf.mxu0
        %v2325 = vadd.f32 %v2156, %v2324
        %v2326 = vpop.f32.mrf.mxu0
        %v2327 = vadd.f32 %v2158, %v2326
        %2328 = vmatmul.bf16.gmra.mxu0 %v1998
        %v2329 = vpop.f32.mrf.mxu0
        %v2330 = vadd.f32 %v2161, %v2329
        %v2331 = vpop.f32.mrf.mxu0
        %v2332 = vadd.f32 %v2163, %v2331
        %2333 = vmatmul.bf16.gmra.mxu0 %v2001
        %v2334 = vpop.f32.mrf.mxu0
        %v2335 = vadd.f32 %v2166, %v2334
        %v2336 = vpop.f32.mrf.mxu0
        %v2337 = vadd.f32 %v2168, %v2336
        %2338 = vmatmul.bf16.gmra.mxu0 %v2004
        %v2339 = vpop.f32.mrf.mxu0
        %v2340 = vadd.f32 %v2171, %v2339
        %v2341 = vpop.f32.mrf.mxu0
        %v2342 = vadd.f32 %v2173, %v2341
        %2343 = vdwg.mxu0
        %2344 = vmatpush.bf16.msra.mxu0 %v1905
        %2345 = vmatpush.bf16.msra.mxu0 %v1903
        %2346 = vmatpush.bf16.msra.mxu0 %v1901
        %2347 = vmatpush.bf16.msra.mxu0 %v1899
        %2348 = vmatpush.bf16.msra.mxu0 %v1897
        %2349 = vmatpush.bf16.msra.mxu0 %v1895
        %2350 = vmatpush.bf16.msra.mxu0 %v1893
        %2351 = vmatpush.bf16.msra.mxu0 %v1891
        %2352 = vmatmul.bf16.gmra.mxu0 %v1665
        %v2353 = vpop.f32.mrf.mxu0
        %v2354 = vadd.f32 0.0, %v2353
        %v2355 = vpop.f32.mrf.mxu0
        %v2356 = vadd.f32 0.0, %v2355
        %2357 = vmatmul.bf16.gmra.mxu0 %v1669
        %v2358 = vpop.f32.mrf.mxu0
        %v2359 = vadd.f32 0.0, %v2358
        %v2360 = vpop.f32.mrf.mxu0
        %v2361 = vadd.f32 0.0, %v2360
        %2362 = vmatmul.bf16.gmra.mxu0 %v1673
        %v2363 = vpop.f32.mrf.mxu0
        %v2364 = vadd.f32 0.0, %v2363
        %v2365 = vpop.f32.mrf.mxu0
        %v2366 = vadd.f32 0.0, %v2365
        %2367 = vmatmul.bf16.gmra.mxu0 %v1677
        %v2368 = vpop.f32.mrf.mxu0
        %v2369 = vadd.f32 0.0, %v2368
        %v2370 = vpop.f32.mrf.mxu0
        %v2371 = vadd.f32 0.0, %v2370
        %2372 = vmatmul.bf16.gmra.mxu0 %v1681
        %v2373 = vpop.f32.mrf.mxu0
        %v2374 = vadd.f32 0.0, %v2373
        %v2375 = vpop.f32.mrf.mxu0
        %v2376 = vadd.f32 0.0, %v2375
        %2377 = vmatmul.bf16.gmra.mxu0 %v1685
        %v2378 = vpop.f32.mrf.mxu0
        %v2379 = vadd.f32 0.0, %v2378
        %v2380 = vpop.f32.mrf.mxu0
        %v2381 = vadd.f32 0.0, %v2380
        %2382 = vmatmul.bf16.gmra.mxu0 %v1689
        %v2383 = vpop.f32.mrf.mxu0
        %v2384 = vadd.f32 0.0, %v2383
        %v2385 = vpop.f32.mrf.mxu0
        %v2386 = vadd.f32 0.0, %v2385
        %2387 = vmatmul.bf16.gmra.mxu0 %v1693
        %v2388 = vpop.f32.mrf.mxu0
        %v2389 = vadd.f32 0.0, %v2388
        %v2390 = vpop.f32.mrf.mxu0
        %v2391 = vadd.f32 0.0, %v2390
        %2392 = vmatmul.bf16.gmra.mxu0 %v1697
        %v2393 = vpop.f32.mrf.mxu0
        %v2394 = vadd.f32 0.0, %v2393
        %v2395 = vpop.f32.mrf.mxu0
        %v2396 = vadd.f32 0.0, %v2395
        %2397 = vmatmul.bf16.gmra.mxu0 %v1701
        %v2398 = vpop.f32.mrf.mxu0
        %v2399 = vadd.f32 0.0, %v2398
        %v2400 = vpop.f32.mrf.mxu0
        %v2401 = vadd.f32 0.0, %v2400
        %2402 = vmatmul.bf16.gmra.mxu0 %v1705
        %v2403 = vpop.f32.mrf.mxu0
        %v2404 = vadd.f32 0.0, %v2403
        %v2405 = vpop.f32.mrf.mxu0
        %v2406 = vadd.f32 0.0, %v2405
        %2407 = vmatmul.bf16.gmra.mxu0 %v1709
        %v2408 = vpop.f32.mrf.mxu0
        %v2409 = vadd.f32 0.0, %v2408
        %v2410 = vpop.f32.mrf.mxu0
        %v2411 = vadd.f32 0.0, %v2410
        %2412 = vmatmul.bf16.gmra.mxu0 %v1713
        %v2413 = vpop.f32.mrf.mxu0
        %v2414 = vadd.f32 0.0, %v2413
        %v2415 = vpop.f32.mrf.mxu0
        %v2416 = vadd.f32 0.0, %v2415
        %2417 = vmatmul.bf16.gmra.mxu0 %v1717
        %v2418 = vpop.f32.mrf.mxu0
        %v2419 = vadd.f32 0.0, %v2418
        %v2420 = vpop.f32.mrf.mxu0
        %v2421 = vadd.f32 0.0, %v2420
        %2422 = vmatmul.bf16.gmra.mxu0 %v1721
        %v2423 = vpop.f32.mrf.mxu0
        %v2424 = vadd.f32 0.0, %v2423
        %v2425 = vpop.f32.mrf.mxu0
        %v2426 = vadd.f32 0.0, %v2425
        %2427 = vmatmul.bf16.gmra.mxu0 %v1725
        %v2428 = vpop.f32.mrf.mxu0
        %v2429 = vadd.f32 0.0, %v2428
        %v2430 = vpop.f32.mrf.mxu0
        %v2431 = vadd.f32 0.0, %v2430
        %2432 = vmatmul.bf16.gmra.mxu0 %v1729
        %v2433 = vpop.f32.mrf.mxu0
        %v2434 = vadd.f32 0.0, %v2433
        %v2435 = vpop.f32.mrf.mxu0
        %v2436 = vadd.f32 0.0, %v2435
        %2437 = vmatmul.bf16.gmra.mxu0 %v1733
        %v2438 = vpop.f32.mrf.mxu0
        %v2439 = vadd.f32 0.0, %v2438
        %v2440 = vpop.f32.mrf.mxu0
        %v2441 = vadd.f32 0.0, %v2440
        %2442 = vmatmul.bf16.gmra.mxu0 %v1737
        %v2443 = vpop.f32.mrf.mxu0
        %v2444 = vadd.f32 0.0, %v2443
        %v2445 = vpop.f32.mrf.mxu0
        %v2446 = vadd.f32 0.0, %v2445
        %2447 = vmatmul.bf16.gmra.mxu0 %v1741
        %v2448 = vpop.f32.mrf.mxu0
        %v2449 = vadd.f32 0.0, %v2448
        %v2450 = vpop.f32.mrf.mxu0
        %v2451 = vadd.f32 0.0, %v2450
        %2452 = vmatmul.bf16.gmra.mxu0 %v1745
        %v2453 = vpop.f32.mrf.mxu0
        %v2454 = vadd.f32 0.0, %v2453
        %v2455 = vpop.f32.mrf.mxu0
        %v2456 = vadd.f32 0.0, %v2455
        %2457 = vmatmul.bf16.gmra.mxu0 %v1749
        %v2458 = vpop.f32.mrf.mxu0
        %v2459 = vadd.f32 0.0, %v2458
        %v2460 = vpop.f32.mrf.mxu0
        %v2461 = vadd.f32 0.0, %v2460
        %2462 = vmatmul.bf16.gmra.mxu0 %v1753
        %v2463 = vpop.f32.mrf.mxu0
        %v2464 = vadd.f32 0.0, %v2463
        %v2465 = vpop.f32.mrf.mxu0
        %v2466 = vadd.f32 0.0, %v2465
        %2467 = vmatmul.bf16.gmra.mxu0 %v1757
        %v2468 = vpop.f32.mrf.mxu0
        %v2469 = vadd.f32 0.0, %v2468
        %v2470 = vpop.f32.mrf.mxu0
        %v2471 = vadd.f32 0.0, %v2470
        %2472 = vmatmul.bf16.gmra.mxu0 %v1761
        %v2473 = vpop.f32.mrf.mxu0
        %v2474 = vadd.f32 0.0, %v2473
        %v2475 = vpop.f32.mrf.mxu0
        %v2476 = vadd.f32 0.0, %v2475
        %2477 = vmatmul.bf16.gmra.mxu0 %v1765
        %v2478 = vpop.f32.mrf.mxu0
        %v2479 = vadd.f32 0.0, %v2478
        %v2480 = vpop.f32.mrf.mxu0
        %v2481 = vadd.f32 0.0, %v2480
        %2482 = vmatmul.bf16.gmra.mxu0 %v1769
        %v2483 = vpop.f32.mrf.mxu0
        %v2484 = vadd.f32 0.0, %v2483
        %v2485 = vpop.f32.mrf.mxu0
        %v2486 = vadd.f32 0.0, %v2485
        %2487 = vmatmul.bf16.gmra.mxu0 %v1773
        %v2488 = vpop.f32.mrf.mxu0
        %v2489 = vadd.f32 0.0, %v2488
        %v2490 = vpop.f32.mrf.mxu0
        %v2491 = vadd.f32 0.0, %v2490
        %2492 = vmatmul.bf16.gmra.mxu0 %v1777
        %v2493 = vpop.f32.mrf.mxu0
        %v2494 = vadd.f32 0.0, %v2493
        %v2495 = vpop.f32.mrf.mxu0
        %v2496 = vadd.f32 0.0, %v2495
        %2497 = vmatmul.bf16.gmra.mxu0 %v1781
        %v2498 = vpop.f32.mrf.mxu0
        %v2499 = vadd.f32 0.0, %v2498
        %v2500 = vpop.f32.mrf.mxu0
        %v2501 = vadd.f32 0.0, %v2500
        %2502 = vmatmul.bf16.gmra.mxu0 %v1785
        %v2503 = vpop.f32.mrf.mxu0
        %v2504 = vadd.f32 0.0, %v2503
        %v2505 = vpop.f32.mrf.mxu0
        %v2506 = vadd.f32 0.0, %v2505
        %2507 = vmatmul.bf16.gmra.mxu0 %v1789
        %v2508 = vpop.f32.mrf.mxu0
        %v2509 = vadd.f32 0.0, %v2508
        %v2510 = vpop.f32.mrf.mxu0
        %v2511 = vadd.f32 0.0, %v2510
        %2512 = vdwg.mxu0
        %2513 = vmatpush.bf16.msra.mxu0 0
        %2514 = vmatpush.bf16.msra.mxu0 0
        %2515 = vmatpush.bf16.msra.mxu0 0
        %2516 = vmatpush.bf16.msra.mxu0 0
        %2517 = vmatpush.bf16.msra.mxu0 %v1913
        %2518 = vmatpush.bf16.msra.mxu0 %v1911
        %2519 = vmatpush.bf16.msra.mxu0 %v1909
        %2520 = vmatpush.bf16.msra.mxu0 %v1907
        %2521 = vmatmul.bf16.gmra.mxu0 %v1938
        %v2522 = vpop.f32.mrf.mxu0
        %v2523 = vadd.f32 %v2354, %v2522
        %v2524 = vpop.f32.mrf.mxu0
        %v2525 = vadd.f32 %v2356, %v2524
        %2526 = vmatmul.bf16.gmra.mxu0 %v1940
        %v2527 = vpop.f32.mrf.mxu0
        %v2528 = vadd.f32 %v2359, %v2527
        %v2529 = vpop.f32.mrf.mxu0
        %v2530 = vadd.f32 %v2361, %v2529
        %2531 = vmatmul.bf16.gmra.mxu0 %v1942
        %v2532 = vpop.f32.mrf.mxu0
        %v2533 = vadd.f32 %v2364, %v2532
        %v2534 = vpop.f32.mrf.mxu0
        %v2535 = vadd.f32 %v2366, %v2534
        %2536 = vmatmul.bf16.gmra.mxu0 %v1944
        %v2537 = vpop.f32.mrf.mxu0
        %v2538 = vadd.f32 %v2369, %v2537
        %v2539 = vpop.f32.mrf.mxu0
        %v2540 = vadd.f32 %v2371, %v2539
        %2541 = vmatmul.bf16.gmra.mxu0 %v1946
        %v2542 = vpop.f32.mrf.mxu0
        %v2543 = vadd.f32 %v2374, %v2542
        %v2544 = vpop.f32.mrf.mxu0
        %v2545 = vadd.f32 %v2376, %v2544
        %2546 = vmatmul.bf16.gmra.mxu0 %v1948
        %v2547 = vpop.f32.mrf.mxu0
        %v2548 = vadd.f32 %v2379, %v2547
        %v2549 = vpop.f32.mrf.mxu0
        %v2550 = vadd.f32 %v2381, %v2549
        %2551 = vmatmul.bf16.gmra.mxu0 %v1950
        %v2552 = vpop.f32.mrf.mxu0
        %v2553 = vadd.f32 %v2384, %v2552
        %v2554 = vpop.f32.mrf.mxu0
        %v2555 = vadd.f32 %v2386, %v2554
        %2556 = vmatmul.bf16.gmra.mxu0 %v1952
        %v2557 = vpop.f32.mrf.mxu0
        %v2558 = vadd.f32 %v2389, %v2557
        %v2559 = vpop.f32.mrf.mxu0
        %v2560 = vadd.f32 %v2391, %v2559
        %2561 = vmatmul.bf16.gmra.mxu0 %v1954
        %v2562 = vpop.f32.mrf.mxu0
        %v2563 = vadd.f32 %v2394, %v2562
        %v2564 = vpop.f32.mrf.mxu0
        %v2565 = vadd.f32 %v2396, %v2564
        %2566 = vmatmul.bf16.gmra.mxu0 %v1956
        %v2567 = vpop.f32.mrf.mxu0
        %v2568 = vadd.f32 %v2399, %v2567
        %v2569 = vpop.f32.mrf.mxu0
        %v2570 = vadd.f32 %v2401, %v2569
        %2571 = vmatmul.bf16.gmra.mxu0 %v1958
        %v2572 = vpop.f32.mrf.mxu0
        %v2573 = vadd.f32 %v2404, %v2572
        %v2574 = vpop.f32.mrf.mxu0
        %v2575 = vadd.f32 %v2406, %v2574
        %2576 = vmatmul.bf16.gmra.mxu0 %v1960
        %v2577 = vpop.f32.mrf.mxu0
        %v2578 = vadd.f32 %v2409, %v2577
        %v2579 = vpop.f32.mrf.mxu0
        %v2580 = vadd.f32 %v2411, %v2579
        %2581 = vmatmul.bf16.gmra.mxu0 %v1962
        %v2582 = vpop.f32.mrf.mxu0
        %v2583 = vadd.f32 %v2414, %v2582
        %v2584 = vpop.f32.mrf.mxu0
        %v2585 = vadd.f32 %v2416, %v2584
        %2586 = vmatmul.bf16.gmra.mxu0 %v1964
        %v2587 = vpop.f32.mrf.mxu0
        %v2588 = vadd.f32 %v2419, %v2587
        %v2589 = vpop.f32.mrf.mxu0
        %v2590 = vadd.f32 %v2421, %v2589
        %2591 = vmatmul.bf16.gmra.mxu0 %v1966
        %v2592 = vpop.f32.mrf.mxu0
        %v2593 = vadd.f32 %v2424, %v2592
        %v2594 = vpop.f32.mrf.mxu0
        %v2595 = vadd.f32 %v2426, %v2594
        %2596 = vmatmul.bf16.gmra.mxu0 %v1968
        %v2597 = vpop.f32.mrf.mxu0
        %v2598 = vadd.f32 %v2429, %v2597
        %v2599 = vpop.f32.mrf.mxu0
        %v2600 = vadd.f32 %v2431, %v2599
        %2601 = vmatmul.bf16.gmra.mxu0 %v1970
        %v2602 = vpop.f32.mrf.mxu0
        %v2603 = vadd.f32 %v2434, %v2602
        %v2604 = vpop.f32.mrf.mxu0
        %v2605 = vadd.f32 %v2436, %v2604
        %2606 = vmatmul.bf16.gmra.mxu0 %v1972
        %v2607 = vpop.f32.mrf.mxu0
        %v2608 = vadd.f32 %v2439, %v2607
        %v2609 = vpop.f32.mrf.mxu0
        %v2610 = vadd.f32 %v2441, %v2609
        %2611 = vmatmul.bf16.gmra.mxu0 %v1974
        %v2612 = vpop.f32.mrf.mxu0
        %v2613 = vadd.f32 %v2444, %v2612
        %v2614 = vpop.f32.mrf.mxu0
        %v2615 = vadd.f32 %v2446, %v2614
        %2616 = vmatmul.bf16.gmra.mxu0 %v1976
        %v2617 = vpop.f32.mrf.mxu0
        %v2618 = vadd.f32 %v2449, %v2617
        %v2619 = vpop.f32.mrf.mxu0
        %v2620 = vadd.f32 %v2451, %v2619
        %2621 = vmatmul.bf16.gmra.mxu0 %v1978
        %v2622 = vpop.f32.mrf.mxu0
        %v2623 = vadd.f32 %v2454, %v2622
        %v2624 = vpop.f32.mrf.mxu0
        %v2625 = vadd.f32 %v2456, %v2624
        %2626 = vmatmul.bf16.gmra.mxu0 %v1980
        %v2627 = vpop.f32.mrf.mxu0
        %v2628 = vadd.f32 %v2459, %v2627
        %v2629 = vpop.f32.mrf.mxu0
        %v2630 = vadd.f32 %v2461, %v2629
        %2631 = vmatmul.bf16.gmra.mxu0 %v1982
        %v2632 = vpop.f32.mrf.mxu0
        %v2633 = vadd.f32 %v2464, %v2632
        %v2634 = vpop.f32.mrf.mxu0
        %v2635 = vadd.f32 %v2466, %v2634
        %2636 = vmatmul.bf16.gmra.mxu0 %v1984
        %v2637 = vpop.f32.mrf.mxu0
        %v2638 = vadd.f32 %v2469, %v2637
        %v2639 = vpop.f32.mrf.mxu0
        %v2640 = vadd.f32 %v2471, %v2639
        %2641 = vmatmul.bf16.gmra.mxu0 %v1986
        %v2642 = vpop.f32.mrf.mxu0
        %v2643 = vadd.f32 %v2474, %v2642
        %v2644 = vpop.f32.mrf.mxu0
        %v2645 = vadd.f32 %v2476, %v2644
        %2646 = vmatmul.bf16.gmra.mxu0 %v1988
        %v2647 = vpop.f32.mrf.mxu0
        %v2648 = vadd.f32 %v2479, %v2647
        %v2649 = vpop.f32.mrf.mxu0
        %v2650 = vadd.f32 %v2481, %v2649
        %2651 = vmatmul.bf16.gmra.mxu0 %v1990
        %v2652 = vpop.f32.mrf.mxu0
        %v2653 = vadd.f32 %v2484, %v2652
        %v2654 = vpop.f32.mrf.mxu0
        %v2655 = vadd.f32 %v2486, %v2654
        %2656 = vmatmul.bf16.gmra.mxu0 %v1992
        %v2657 = vpop.f32.mrf.mxu0
        %v2658 = vadd.f32 %v2489, %v2657
        %v2659 = vpop.f32.mrf.mxu0
        %v2660 = vadd.f32 %v2491, %v2659
        %2661 = vmatmul.bf16.gmra.mxu0 %v1995
        %v2662 = vpop.f32.mrf.mxu0
        %v2663 = vadd.f32 %v2494, %v2662
        %v2664 = vpop.f32.mrf.mxu0
        %v2665 = vadd.f32 %v2496, %v2664
        %2666 = vmatmul.bf16.gmra.mxu0 %v1998
        %v2667 = vpop.f32.mrf.mxu0
        %v2668 = vadd.f32 %v2499, %v2667
        %v2669 = vpop.f32.mrf.mxu0
        %v2670 = vadd.f32 %v2501, %v2669
        %2671 = vmatmul.bf16.gmra.mxu0 %v2001
        %v2672 = vpop.f32.mrf.mxu0
        %v2673 = vadd.f32 %v2504, %v2672
        %v2674 = vpop.f32.mrf.mxu0
        %v2675 = vadd.f32 %v2506, %v2674
        %2676 = vmatmul.bf16.gmra.mxu0 %v2004
        %v2677 = vpop.f32.mrf.mxu0
        %v2678 = vadd.f32 %v2509, %v2677
        %v2679 = vpop.f32.mrf.mxu0
        %v2680 = vadd.f32 %v2511, %v2679
        %2681 = vdwg.mxu0
        %v2682 = vrot.slane %v2185, 7
        %v2683 = vrot.slane %v2187, 7
        %v2684 = vrot.slane %v2190, 7
        %v2685 = vrot.slane %v2192, 7
        %v2686 = vrot.slane %v2195, 7
        %v2687 = vrot.slane %v2197, 7
        %v2688 = vrot.slane %v2200, 7
        %v2689 = vrot.slane %v2202, 7
        %v2690 = vrot.slane %v2205, 7
        %v2691 = vrot.slane %v2207, 7
        %v2692 = vrot.slane %v2210, 7
        %v2693 = vrot.slane %v2212, 7
        %v2694 = vrot.slane %v2215, 7
        %v2695 = vrot.slane %v2217, 7
        %v2696 = vrot.slane %v2220, 7
        %v2697 = vrot.slane %v2222, 7
        %v2698 = vrot.slane %v2225, 7
        %v2699 = vrot.slane %v2227, 7
        %v2700 = vrot.slane %v2230, 7
        %v2701 = vrot.slane %v2232, 7
        %v2702 = vrot.slane %v2235, 7
        %v2703 = vrot.slane %v2237, 7
        %v2704 = vrot.slane %v2240, 7
        %v2705 = vrot.slane %v2242, 7
        %v2706 = vrot.slane %v2245, 7
        %v2707 = vrot.slane %v2247, 7
        %v2708 = vrot.slane %v2250, 7
        %v2709 = vrot.slane %v2252, 7
        %v2710 = vrot.slane %v2255, 7
        %v2711 = vrot.slane %v2257, 7
        %v2712 = vrot.slane %v2260, 7
        %v2713 = vrot.slane %v2262, 7
        %v2714 = vrot.slane %v2265, 7
        %v2715 = vrot.slane %v2267, 7
        %v2716 = vrot.slane %v2270, 7
        %v2717 = vrot.slane %v2272, 7
        %v2718 = vrot.slane %v2275, 7
        %v2719 = vrot.slane %v2277, 7
        %v2720 = vrot.slane %v2280, 7
        %v2721 = vrot.slane %v2282, 7
        %v2722 = vrot.slane %v2285, 7
        %v2723 = vrot.slane %v2287, 7
        %v2724 = vrot.slane %v2290, 7
        %v2725 = vrot.slane %v2292, 7
        %v2726 = vrot.slane %v2295, 7
        %v2727 = vrot.slane %v2297, 7
        %v2728 = vrot.slane %v2300, 7
        %v2729 = vrot.slane %v2302, 7
        %v2730 = vrot.slane %v2305, 7
        %v2731 = vrot.slane %v2307, 7
        %v2732 = vrot.slane %v2310, 7
        %v2733 = vrot.slane %v2312, 7
        %v2734 = vrot.slane %v2315, 7
        %v2735 = vrot.slane %v2317, 7
        %v2736 = vrot.slane %v2320, 7
        %v2737 = vrot.slane %v2322, 7
        %v2738 = vrot.slane %v2325, 7
        %v2739 = vrot.slane %v2327, 7
        %v2740 = vrot.slane %v2330, 7
        %v2741 = vrot.slane %v2332, 7
        %v2742 = vrot.slane %v2335, 7
        %v2743 = vrot.slane %v2337, 7
        %v2744 = vrot.slane %v2340, 7
        %v2745 = vrot.slane %v2342, 7
        %vm2746 = vcmp.lt.s32.totalorder %v300, 1
        %v2747 = vsel %vm2746, %v2744, %v2745
        %v2748 = vsel %vm2746, %v2743, %v2744
        %v2749 = vsel %vm2746, %v2742, %v2743
        %v2750 = vsel %vm2746, %v2741, %v2742
        %v2751 = vsel %vm2746, %v2740, %v2741
        %v2752 = vsel %vm2746, %v2739, %v2740
        %v2753 = vsel %vm2746, %v2738, %v2739
        %v2754 = vsel %vm2746, %v2737, %v2738
        %v2755 = vsel %vm2746, %v2736, %v2737
        %v2756 = vsel %vm2746, %v2735, %v2736
        %v2757 = vsel %vm2746, %v2734, %v2735
        %v2758 = vsel %vm2746, %v2733, %v2734
        %v2759 = vsel %vm2746, %v2732, %v2733
        %v2760 = vsel %vm2746, %v2731, %v2732
        %v2761 = vsel %vm2746, %v2730, %v2731
        %v2762 = vsel %vm2746, %v2729, %v2730
        %v2763 = vsel %vm2746, %v2728, %v2729
        %v2764 = vsel %vm2746, %v2727, %v2728
        %v2765 = vsel %vm2746, %v2726, %v2727
        %v2766 = vsel %vm2746, %v2725, %v2726
        %v2767 = vsel %vm2746, %v2724, %v2725
        %v2768 = vsel %vm2746, %v2723, %v2724
        %v2769 = vsel %vm2746, %v2722, %v2723
        %v2770 = vsel %vm2746, %v2721, %v2722
        %v2771 = vsel %vm2746, %v2720, %v2721
        %v2772 = vsel %vm2746, %v2719, %v2720
        %v2773 = vsel %vm2746, %v2718, %v2719
        %v2774 = vsel %vm2746, %v2717, %v2718
        %v2775 = vsel %vm2746, %v2716, %v2717
        %v2776 = vsel %vm2746, %v2715, %v2716
        %v2777 = vsel %vm2746, %v2714, %v2715
        %v2778 = vsel %vm2746, %v2713, %v2714
        %v2779 = vsel %vm2746, %v2712, %v2713
        %v2780 = vsel %vm2746, %v2711, %v2712
        %v2781 = vsel %vm2746, %v2710, %v2711
        %v2782 = vsel %vm2746, %v2709, %v2710
        %v2783 = vsel %vm2746, %v2708, %v2709
        %v2784 = vsel %vm2746, %v2707, %v2708
        %v2785 = vsel %vm2746, %v2706, %v2707
        %v2786 = vsel %vm2746, %v2705, %v2706
        %v2787 = vsel %vm2746, %v2704, %v2705
        %v2788 = vsel %vm2746, %v2703, %v2704
        %v2789 = vsel %vm2746, %v2702, %v2703
        %v2790 = vsel %vm2746, %v2701, %v2702
        %v2791 = vsel %vm2746, %v2700, %v2701
        %v2792 = vsel %vm2746, %v2699, %v2700
        %v2793 = vsel %vm2746, %v2698, %v2699
        %v2794 = vsel %vm2746, %v2697, %v2698
        %v2795 = vsel %vm2746, %v2696, %v2697
        %v2796 = vsel %vm2746, %v2695, %v2696
        %v2797 = vsel %vm2746, %v2694, %v2695
        %v2798 = vsel %vm2746, %v2693, %v2694
        %v2799 = vsel %vm2746, %v2692, %v2693
        %v2800 = vsel %vm2746, %v2691, %v2692
        %v2801 = vsel %vm2746, %v2690, %v2691
        %v2802 = vsel %vm2746, %v2689, %v2690
        %v2803 = vsel %vm2746, %v2688, %v2689
        %v2804 = vsel %vm2746, %v2687, %v2688
        %v2805 = vsel %vm2746, %v2686, %v2687
        %v2806 = vsel %vm2746, %v2685, %v2686
        %v2807 = vsel %vm2746, %v2684, %v2685
        %v2808 = vsel %vm2746, %v2683, %v2684
        %v2809 = vsel %vm2746, %v2682, %v2683
        %v2810 = vsel %vm2746, %v2745, %v2682
        %2875 = vrot.lane.b32.xlu0 %v2185, 64
        %v2876 = vpop.permute.xlu0 %2875
        %2877 = vrot.lane.b32.xlu0 %v2187, 64
        %v2878 = vpop.permute.xlu0 %2877
        %2879 = vrot.lane.b32.xlu0 %v2190, 64
        %v2880 = vpop.permute.xlu0 %2879
        %2881 = vrot.lane.b32.xlu0 %v2192, 64
        %v2882 = vpop.permute.xlu0 %2881
        %2883 = vrot.lane.b32.xlu0 %v2195, 64
        %v2884 = vpop.permute.xlu0 %2883
        %2885 = vrot.lane.b32.xlu0 %v2197, 64
        %v2886 = vpop.permute.xlu0 %2885
        %2887 = vrot.lane.b32.xlu0 %v2200, 64
        %v2888 = vpop.permute.xlu0 %2887
        %2889 = vrot.lane.b32.xlu0 %v2202, 64
        %v2890 = vpop.permute.xlu0 %2889
        %2891 = vrot.lane.b32.xlu0 %v2205, 64
        %v2892 = vpop.permute.xlu0 %2891
        %2893 = vrot.lane.b32.xlu0 %v2207, 64
        %v2894 = vpop.permute.xlu0 %2893
        %2895 = vrot.lane.b32.xlu0 %v2210, 64
        %v2896 = vpop.permute.xlu0 %2895
        %2897 = vrot.lane.b32.xlu0 %v2212, 64
        %v2898 = vpop.permute.xlu0 %2897
        %2899 = vrot.lane.b32.xlu0 %v2215, 64
        %v2900 = vpop.permute.xlu0 %2899
        %2901 = vrot.lane.b32.xlu0 %v2217, 64
        %v2902 = vpop.permute.xlu0 %2901
        %2903 = vrot.lane.b32.xlu0 %v2220, 64
        %v2904 = vpop.permute.xlu0 %2903
        %2905 = vrot.lane.b32.xlu0 %v2222, 64
        %v2906 = vpop.permute.xlu0 %2905
        %2907 = vrot.lane.b32.xlu0 %v2225, 64
        %v2908 = vpop.permute.xlu0 %2907
        %2909 = vrot.lane.b32.xlu0 %v2227, 64
        %v2910 = vpop.permute.xlu0 %2909
        %2911 = vrot.lane.b32.xlu0 %v2230, 64
        %v2912 = vpop.permute.xlu0 %2911
        %2913 = vrot.lane.b32.xlu0 %v2232, 64
        %v2914 = vpop.permute.xlu0 %2913
        %2915 = vrot.lane.b32.xlu0 %v2235, 64
        %v2916 = vpop.permute.xlu0 %2915
        %2917 = vrot.lane.b32.xlu0 %v2237, 64
        %v2918 = vpop.permute.xlu0 %2917
        %2919 = vrot.lane.b32.xlu0 %v2240, 64
        %v2920 = vpop.permute.xlu0 %2919
        %2921 = vrot.lane.b32.xlu0 %v2242, 64
        %v2922 = vpop.permute.xlu0 %2921
        %2923 = vrot.lane.b32.xlu0 %v2245, 64
        %v2924 = vpop.permute.xlu0 %2923
        %2925 = vrot.lane.b32.xlu0 %v2247, 64
        %v2926 = vpop.permute.xlu0 %2925
        %2927 = vrot.lane.b32.xlu0 %v2250, 64
        %v2928 = vpop.permute.xlu0 %2927
        %2929 = vrot.lane.b32.xlu0 %v2252, 64
        %v2930 = vpop.permute.xlu0 %2929
        %2931 = vrot.lane.b32.xlu0 %v2255, 64
        %v2932 = vpop.permute.xlu0 %2931
        %2933 = vrot.lane.b32.xlu0 %v2257, 64
        %v2934 = vpop.permute.xlu0 %2933
        %2935 = vrot.lane.b32.xlu0 %v2260, 64
        %v2936 = vpop.permute.xlu0 %2935
        %2937 = vrot.lane.b32.xlu0 %v2262, 64
        %v2938 = vpop.permute.xlu0 %2937
        %2939 = vrot.lane.b32.xlu0 %v2265, 64
        %v2940 = vpop.permute.xlu0 %2939
        %2941 = vrot.lane.b32.xlu0 %v2267, 64
        %v2942 = vpop.permute.xlu0 %2941
        %2943 = vrot.lane.b32.xlu0 %v2270, 64
        %v2944 = vpop.permute.xlu0 %2943
        %2945 = vrot.lane.b32.xlu0 %v2272, 64
        %v2946 = vpop.permute.xlu0 %2945
        %2947 = vrot.lane.b32.xlu0 %v2275, 64
        %v2948 = vpop.permute.xlu0 %2947
        %2949 = vrot.lane.b32.xlu0 %v2277, 64
        %v2950 = vpop.permute.xlu0 %2949
        %2951 = vrot.lane.b32.xlu0 %v2280, 64
        %v2952 = vpop.permute.xlu0 %2951
        %2953 = vrot.lane.b32.xlu0 %v2282, 64
        %v2954 = vpop.permute.xlu0 %2953
        %2955 = vrot.lane.b32.xlu0 %v2285, 64
        %v2956 = vpop.permute.xlu0 %2955
        %2957 = vrot.lane.b32.xlu0 %v2287, 64
        %v2958 = vpop.permute.xlu0 %2957
        %2959 = vrot.lane.b32.xlu0 %v2290, 64
        %v2960 = vpop.permute.xlu0 %2959
        %2961 = vrot.lane.b32.xlu0 %v2292, 64
        %v2962 = vpop.permute.xlu0 %2961
        %2963 = vrot.lane.b32.xlu0 %v2295, 64
        %v2964 = vpop.permute.xlu0 %2963
        %2965 = vrot.lane.b32.xlu0 %v2297, 64
        %v2966 = vpop.permute.xlu0 %2965
        %2967 = vrot.lane.b32.xlu0 %v2300, 64
        %v2968 = vpop.permute.xlu0 %2967
        %2969 = vrot.lane.b32.xlu0 %v2302, 64
        %v2970 = vpop.permute.xlu0 %2969
        %2971 = vrot.lane.b32.xlu0 %v2305, 64
        %v2972 = vpop.permute.xlu0 %2971
        %2973 = vrot.lane.b32.xlu0 %v2307, 64
        %v2974 = vpop.permute.xlu0 %2973
        %2975 = vrot.lane.b32.xlu0 %v2310, 64
        %v2976 = vpop.permute.xlu0 %2975
        %2977 = vrot.lane.b32.xlu0 %v2312, 64
        %v2978 = vpop.permute.xlu0 %2977
        %2979 = vrot.lane.b32.xlu0 %v2315, 64
        %v2980 = vpop.permute.xlu0 %2979
        %2981 = vrot.lane.b32.xlu0 %v2317, 64
        %v2982 = vpop.permute.xlu0 %2981
        %2983 = vrot.lane.b32.xlu0 %v2320, 64
        %v2984 = vpop.permute.xlu0 %2983
        %2985 = vrot.lane.b32.xlu0 %v2322, 64
        %v2986 = vpop.permute.xlu0 %2985
        %2987 = vrot.lane.b32.xlu0 %v2325, 64
        %v2988 = vpop.permute.xlu0 %2987
        %2989 = vrot.lane.b32.xlu0 %v2327, 64
        %v2990 = vpop.permute.xlu0 %2989
        %2991 = vrot.lane.b32.xlu0 %v2330, 64
        %v2992 = vpop.permute.xlu0 %2991
        %2993 = vrot.lane.b32.xlu0 %v2332, 64
        %v2994 = vpop.permute.xlu0 %2993
        %2995 = vrot.lane.b32.xlu0 %v2335, 64
        %v2996 = vpop.permute.xlu0 %2995
        %2997 = vrot.lane.b32.xlu0 %v2337, 64
        %v2998 = vpop.permute.xlu0 %2997
        %2999 = vrot.lane.b32.xlu0 %v2340, 64
        %v3000 = vpop.permute.xlu0 %2999
        %3001 = vrot.lane.b32.xlu0 %v2342, 64
        %v3002 = vpop.permute.xlu0 %3001
        %v3067 = vadd.f32 %v2810, %v2876
        %v3068 = vadd.f32 %v2809, %v2878
        %v3069 = vadd.f32 %v2808, %v2880
        %v3070 = vadd.f32 %v2807, %v2882
        %v3071 = vadd.f32 %v2806, %v2884
        %v3072 = vadd.f32 %v2805, %v2886
        %v3073 = vadd.f32 %v2804, %v2888
        %v3074 = vadd.f32 %v2803, %v2890
        %v3075 = vadd.f32 %v2802, %v2892
        %v3076 = vadd.f32 %v2801, %v2894
        %v3077 = vadd.f32 %v2800, %v2896
        %v3078 = vadd.f32 %v2799, %v2898
        %v3079 = vadd.f32 %v2798, %v2900
        %v3080 = vadd.f32 %v2797, %v2902
        %v3081 = vadd.f32 %v2796, %v2904
        %v3082 = vadd.f32 %v2795, %v2906
        %v3083 = vadd.f32 %v2794, %v2908
        %v3084 = vadd.f32 %v2793, %v2910
        %v3085 = vadd.f32 %v2792, %v2912
        %v3086 = vadd.f32 %v2791, %v2914
        %v3087 = vadd.f32 %v2790, %v2916
        %v3088 = vadd.f32 %v2789, %v2918
        %v3089 = vadd.f32 %v2788, %v2920
        %v3090 = vadd.f32 %v2787, %v2922
        %v3091 = vadd.f32 %v2786, %v2924
        %v3092 = vadd.f32 %v2785, %v2926
        %v3093 = vadd.f32 %v2784, %v2928
        %v3094 = vadd.f32 %v2783, %v2930
        %v3095 = vadd.f32 %v2782, %v2932
        %v3096 = vadd.f32 %v2781, %v2934
        %v3097 = vadd.f32 %v2780, %v2936
        %v3098 = vadd.f32 %v2779, %v2938
        %v3099 = vadd.f32 %v2778, %v2940
        %v3100 = vadd.f32 %v2777, %v2942
        %v3101 = vadd.f32 %v2776, %v2944
        %v3102 = vadd.f32 %v2775, %v2946
        %v3103 = vadd.f32 %v2774, %v2948
        %v3104 = vadd.f32 %v2773, %v2950
        %v3105 = vadd.f32 %v2772, %v2952
        %v3106 = vadd.f32 %v2771, %v2954
        %v3107 = vadd.f32 %v2770, %v2956
        %v3108 = vadd.f32 %v2769, %v2958
        %v3109 = vadd.f32 %v2768, %v2960
        %v3110 = vadd.f32 %v2767, %v2962
        %v3111 = vadd.f32 %v2766, %v2964
        %v3112 = vadd.f32 %v2765, %v2966
        %v3113 = vadd.f32 %v2764, %v2968
        %v3114 = vadd.f32 %v2763, %v2970
        %v3115 = vadd.f32 %v2762, %v2972
        %v3116 = vadd.f32 %v2761, %v2974
        %v3117 = vadd.f32 %v2760, %v2976
        %v3118 = vadd.f32 %v2759, %v2978
        %v3119 = vadd.f32 %v2758, %v2980
        %v3120 = vadd.f32 %v2757, %v2982
        %v3121 = vadd.f32 %v2756, %v2984
        %v3122 = vadd.f32 %v2755, %v2986
        %v3123 = vadd.f32 %v2754, %v2988
        %v3124 = vadd.f32 %v2753, %v2990
        %v3125 = vadd.f32 %v2752, %v2992
        %v3126 = vadd.f32 %v2751, %v2994
        %v3127 = vadd.f32 %v2750, %v2996
        %v3128 = vadd.f32 %v2749, %v2998
        %v3129 = vadd.f32 %v2748, %v3000
        %v3130 = vadd.f32 %v2747, %v3002
        %v3131 = vrot.slane %v2523, 1
        %v3132 = vrot.slane %v2525, 1
        %v3133 = vrot.slane %v2528, 1
        %v3134 = vrot.slane %v2530, 1
        %v3135 = vrot.slane %v2533, 1
        %v3136 = vrot.slane %v2535, 1
        %v3137 = vrot.slane %v2538, 1
        %v3138 = vrot.slane %v2540, 1
        %v3139 = vrot.slane %v2543, 1
        %v3140 = vrot.slane %v2545, 1
        %v3141 = vrot.slane %v2548, 1
        %v3142 = vrot.slane %v2550, 1
        %v3143 = vrot.slane %v2553, 1
        %v3144 = vrot.slane %v2555, 1
        %v3145 = vrot.slane %v2558, 1
        %v3146 = vrot.slane %v2560, 1
        %v3147 = vrot.slane %v2563, 1
        %v3148 = vrot.slane %v2565, 1
        %v3149 = vrot.slane %v2568, 1
        %v3150 = vrot.slane %v2570, 1
        %v3151 = vrot.slane %v2573, 1
        %v3152 = vrot.slane %v2575, 1
        %v3153 = vrot.slane %v2578, 1
        %v3154 = vrot.slane %v2580, 1
        %v3155 = vrot.slane %v2583, 1
        %v3156 = vrot.slane %v2585, 1
        %v3157 = vrot.slane %v2588, 1
        %v3158 = vrot.slane %v2590, 1
        %v3159 = vrot.slane %v2593, 1
        %v3160 = vrot.slane %v2595, 1
        %v3161 = vrot.slane %v2598, 1
        %v3162 = vrot.slane %v2600, 1
        %v3163 = vrot.slane %v2603, 1
        %v3164 = vrot.slane %v2605, 1
        %v3165 = vrot.slane %v2608, 1
        %v3166 = vrot.slane %v2610, 1
        %v3167 = vrot.slane %v2613, 1
        %v3168 = vrot.slane %v2615, 1
        %v3169 = vrot.slane %v2618, 1
        %v3170 = vrot.slane %v2620, 1
        %v3171 = vrot.slane %v2623, 1
        %v3172 = vrot.slane %v2625, 1
        %v3173 = vrot.slane %v2628, 1
        %v3174 = vrot.slane %v2630, 1
        %v3175 = vrot.slane %v2633, 1
        %v3176 = vrot.slane %v2635, 1
        %v3177 = vrot.slane %v2638, 1
        %v3178 = vrot.slane %v2640, 1
        %v3179 = vrot.slane %v2643, 1
        %v3180 = vrot.slane %v2645, 1
        %v3181 = vrot.slane %v2648, 1
        %v3182 = vrot.slane %v2650, 1
        %v3183 = vrot.slane %v2653, 1
        %v3184 = vrot.slane %v2655, 1
        %v3185 = vrot.slane %v2658, 1
        %v3186 = vrot.slane %v2660, 1
        %v3187 = vrot.slane %v2663, 1
        %v3188 = vrot.slane %v2665, 1
        %v3189 = vrot.slane %v2668, 1
        %v3190 = vrot.slane %v2670, 1
        %v3191 = vrot.slane %v2673, 1
        %v3192 = vrot.slane %v2675, 1
        %v3193 = vrot.slane %v2678, 1
        %v3194 = vrot.slane %v2680, 1
        %vm3195 = vcmp.lt.s32.totalorder %v300, 7
        %v3196 = vsel %vm3195, %v3193, %v3194
        %v3197 = vsel %vm3195, %v3192, %v3193
        %v3198 = vsel %vm3195, %v3191, %v3192
        %v3199 = vsel %vm3195, %v3190, %v3191
        %v3200 = vsel %vm3195, %v3189, %v3190
        %v3201 = vsel %vm3195, %v3188, %v3189
        %v3202 = vsel %vm3195, %v3187, %v3188
        %v3203 = vsel %vm3195, %v3186, %v3187
        %v3204 = vsel %vm3195, %v3185, %v3186
        %v3205 = vsel %vm3195, %v3184, %v3185
        %v3206 = vsel %vm3195, %v3183, %v3184
        %v3207 = vsel %vm3195, %v3182, %v3183
        %v3208 = vsel %vm3195, %v3181, %v3182
        %v3209 = vsel %vm3195, %v3180, %v3181
        %v3210 = vsel %vm3195, %v3179, %v3180
        %v3211 = vsel %vm3195, %v3178, %v3179
        %v3212 = vsel %vm3195, %v3177, %v3178
        %v3213 = vsel %vm3195, %v3176, %v3177
        %v3214 = vsel %vm3195, %v3175, %v3176
        %v3215 = vsel %vm3195, %v3174, %v3175
        %v3216 = vsel %vm3195, %v3173, %v3174
        %v3217 = vsel %vm3195, %v3172, %v3173
        %v3218 = vsel %vm3195, %v3171, %v3172
        %v3219 = vsel %vm3195, %v3170, %v3171
        %v3220 = vsel %vm3195, %v3169, %v3170
        %v3221 = vsel %vm3195, %v3168, %v3169
        %v3222 = vsel %vm3195, %v3167, %v3168
        %v3223 = vsel %vm3195, %v3166, %v3167
        %v3224 = vsel %vm3195, %v3165, %v3166
        %v3225 = vsel %vm3195, %v3164, %v3165
        %v3226 = vsel %vm3195, %v3163, %v3164
        %v3227 = vsel %vm3195, %v3162, %v3163
        %v3228 = vsel %vm3195, %v3161, %v3162
        %v3229 = vsel %vm3195, %v3160, %v3161
        %v3230 = vsel %vm3195, %v3159, %v3160
        %v3231 = vsel %vm3195, %v3158, %v3159
        %v3232 = vsel %vm3195, %v3157, %v3158
        %v3233 = vsel %vm3195, %v3156, %v3157
        %v3234 = vsel %vm3195, %v3155, %v3156
        %v3235 = vsel %vm3195, %v3154, %v3155
        %v3236 = vsel %vm3195, %v3153, %v3154
        %v3237 = vsel %vm3195, %v3152, %v3153
        %v3238 = vsel %vm3195, %v3151, %v3152
        %v3239 = vsel %vm3195, %v3150, %v3151
        %v3240 = vsel %vm3195, %v3149, %v3150
        %v3241 = vsel %vm3195, %v3148, %v3149
        %v3242 = vsel %vm3195, %v3147, %v3148
        %v3243 = vsel %vm3195, %v3146, %v3147
        %v3244 = vsel %vm3195, %v3145, %v3146
        %v3245 = vsel %vm3195, %v3144, %v3145
        %v3246 = vsel %vm3195, %v3143, %v3144
        %v3247 = vsel %vm3195, %v3142, %v3143
        %v3248 = vsel %vm3195, %v3141, %v3142
        %v3249 = vsel %vm3195, %v3140, %v3141
        %v3250 = vsel %vm3195, %v3139, %v3140
        %v3251 = vsel %vm3195, %v3138, %v3139
        %v3252 = vsel %vm3195, %v3137, %v3138
        %v3253 = vsel %vm3195, %v3136, %v3137
        %v3254 = vsel %vm3195, %v3135, %v3136
        %v3255 = vsel %vm3195, %v3134, %v3135
        %v3256 = vsel %vm3195, %v3133, %v3134
        %v3257 = vsel %vm3195, %v3132, %v3133
        %v3258 = vsel %vm3195, %v3131, %v3132
        %v3259 = vsel %vm3195, %v3194, %v3131
        %v3260 = vadd.f32 %v3067, %v3258
        %v3261 = vadd.f32 %v3068, %v3257
        %v3262 = vadd.f32 %v3069, %v3256
        %v3263 = vadd.f32 %v3070, %v3255
        %v3264 = vadd.f32 %v3071, %v3254
        %v3265 = vadd.f32 %v3072, %v3253
        %v3266 = vadd.f32 %v3073, %v3252
        %v3267 = vadd.f32 %v3074, %v3251
        %v3268 = vadd.f32 %v3075, %v3250
        %v3269 = vadd.f32 %v3076, %v3249
        %v3270 = vadd.f32 %v3077, %v3248
        %v3271 = vadd.f32 %v3078, %v3247
        %v3272 = vadd.f32 %v3079, %v3246
        %v3273 = vadd.f32 %v3080, %v3245
        %v3274 = vadd.f32 %v3081, %v3244
        %v3275 = vadd.f32 %v3082, %v3243
        %v3276 = vadd.f32 %v3083, %v3242
        %v3277 = vadd.f32 %v3084, %v3241
        %v3278 = vadd.f32 %v3085, %v3240
        %v3279 = vadd.f32 %v3086, %v3239
        %v3280 = vadd.f32 %v3087, %v3238
        %v3281 = vadd.f32 %v3088, %v3237
        %v3282 = vadd.f32 %v3089, %v3236
        %v3283 = vadd.f32 %v3090, %v3235
        %v3284 = vadd.f32 %v3091, %v3234
        %v3285 = vadd.f32 %v3092, %v3233
        %v3286 = vadd.f32 %v3093, %v3232
        %v3287 = vadd.f32 %v3094, %v3231
        %v3288 = vadd.f32 %v3095, %v3230
        %v3289 = vadd.f32 %v3096, %v3229
        %v3290 = vadd.f32 %v3097, %v3228
        %v3291 = vadd.f32 %v3098, %v3227
        %v3292 = vadd.f32 %v3099, %v3226
        %v3293 = vadd.f32 %v3100, %v3225
        %v3294 = vadd.f32 %v3101, %v3224
        %v3295 = vadd.f32 %v3102, %v3223
        %v3296 = vadd.f32 %v3103, %v3222
        %v3297 = vadd.f32 %v3104, %v3221
        %v3298 = vadd.f32 %v3105, %v3220
        %v3299 = vadd.f32 %v3106, %v3219
        %v3300 = vadd.f32 %v3107, %v3218
        %v3301 = vadd.f32 %v3108, %v3217
        %v3302 = vadd.f32 %v3109, %v3216
        %v3303 = vadd.f32 %v3110, %v3215
        %v3304 = vadd.f32 %v3111, %v3214
        %v3305 = vadd.f32 %v3112, %v3213
        %v3306 = vadd.f32 %v3113, %v3212
        %v3307 = vadd.f32 %v3114, %v3211
        %v3308 = vadd.f32 %v3115, %v3210
        %v3309 = vadd.f32 %v3116, %v3209
        %v3310 = vadd.f32 %v3117, %v3208
        %v3311 = vadd.f32 %v3118, %v3207
        %v3312 = vadd.f32 %v3119, %v3206
        %v3313 = vadd.f32 %v3120, %v3205
        %v3314 = vadd.f32 %v3121, %v3204
        %v3315 = vadd.f32 %v3122, %v3203
        %v3316 = vadd.f32 %v3123, %v3202
        %v3317 = vadd.f32 %v3124, %v3201
        %v3318 = vadd.f32 %v3125, %v3200
        %v3319 = vadd.f32 %v3126, %v3199
        %v3320 = vadd.f32 %v3127, %v3198
        %v3321 = vadd.f32 %v3128, %v3197
        %v3322 = vadd.f32 %v3129, %v3196
        %v3323 = vadd.f32 %v3130, %v3259
        %v3324 = vmax.f32 %v3260, 0.0
        %v3325 = vmax.f32 %v3261, 0.0
        %v3326 = vmax.f32 %v3262, 0.0
        %v3327 = vmax.f32 %v3263, 0.0
        %v3328 = vmax.f32 %v3264, 0.0
        %v3329 = vmax.f32 %v3265, 0.0
        %v3330 = vmax.f32 %v3266, 0.0
        %v3331 = vmax.f32 %v3267, 0.0
        %v3332 = vmax.f32 %v3268, 0.0
        %v3333 = vmax.f32 %v3269, 0.0
        %v3334 = vmax.f32 %v3270, 0.0
        %v3335 = vmax.f32 %v3271, 0.0
        %v3336 = vmax.f32 %v3272, 0.0
        %v3337 = vmax.f32 %v3273, 0.0
        %v3338 = vmax.f32 %v3274, 0.0
        %v3339 = vmax.f32 %v3275, 0.0
        %v3340 = vmax.f32 %v3276, 0.0
        %v3341 = vmax.f32 %v3277, 0.0
        %v3342 = vmax.f32 %v3278, 0.0
        %v3343 = vmax.f32 %v3279, 0.0
        %v3344 = vmax.f32 %v3280, 0.0
        %v3345 = vmax.f32 %v3281, 0.0
        %v3346 = vmax.f32 %v3282, 0.0
        %v3347 = vmax.f32 %v3283, 0.0
        %v3348 = vmax.f32 %v3284, 0.0
        %v3349 = vmax.f32 %v3285, 0.0
        %v3350 = vmax.f32 %v3286, 0.0
        %v3351 = vmax.f32 %v3287, 0.0
        %v3352 = vmax.f32 %v3288, 0.0
        %v3353 = vmax.f32 %v3289, 0.0
        %v3354 = vmax.f32 %v3290, 0.0
        %v3355 = vmax.f32 %v3291, 0.0
        %v3356 = vmax.f32 %v3292, 0.0
        %v3357 = vmax.f32 %v3293, 0.0
        %v3358 = vmax.f32 %v3294, 0.0
        %v3359 = vmax.f32 %v3295, 0.0
        %v3360 = vmax.f32 %v3296, 0.0
        %v3361 = vmax.f32 %v3297, 0.0
        %v3362 = vmax.f32 %v3298, 0.0
        %v3363 = vmax.f32 %v3299, 0.0
        %v3364 = vmax.f32 %v3300, 0.0
        %v3365 = vmax.f32 %v3301, 0.0
        %v3366 = vmax.f32 %v3302, 0.0
        %v3367 = vmax.f32 %v3303, 0.0
        %v3368 = vmax.f32 %v3304, 0.0
        %v3369 = vmax.f32 %v3305, 0.0
        %v3370 = vmax.f32 %v3306, 0.0
        %v3371 = vmax.f32 %v3307, 0.0
        %v3372 = vmax.f32 %v3308, 0.0
        %v3373 = vmax.f32 %v3309, 0.0
        %v3374 = vmax.f32 %v3310, 0.0
        %v3375 = vmax.f32 %v3311, 0.0
        %v3376 = vmax.f32 %v3312, 0.0
        %v3377 = vmax.f32 %v3313, 0.0
        %v3378 = vmax.f32 %v3314, 0.0
        %v3379 = vmax.f32 %v3315, 0.0
        %v3380 = vmax.f32 %v3316, 0.0
        %v3381 = vmax.f32 %v3317, 0.0
        %v3382 = vmax.f32 %v3318, 0.0
        %v3383 = vmax.f32 %v3319, 0.0
        %v3384 = vmax.f32 %v3320, 0.0
        %v3385 = vmax.f32 %v3321, 0.0
        %v3386 = vmax.f32 %v3322, 0.0
        %v3387 = vmax.f32 %v3323, 0.0
        %v3388 = vsel %vm1260, 1, 0
        %v3389 = vsel %vm1261, 1, 0
        %v3390 = vsel %vm1262, 1, 0
        %v3391 = vsel %vm1263, 1, 0
        %v3392 = vsel %vm1264, 1, 0
        %v3393 = vsel %vm1265, 1, 0
        %v3394 = vsel %vm1266, 1, 0
        %v3395 = vsel %vm1267, 1, 0
        %v3396 = vsel %vm1268, 1, 0
        %v3397 = vsel %vm1269, 1, 0
        %v3398 = vsel %vm1270, 1, 0
        %v3399 = vsel %vm1271, 1, 0
        %v3400 = vsel %vm1272, 1, 0
        %v3401 = vsel %vm1273, 1, 0
        %v3402 = vsel %vm1274, 1, 0
        %v3403 = vsel %vm1275, 1, 0
        %v3404 = vsel %vm1276, 1, 0
        %v3405 = vsel %vm1277, 1, 0
        %v3406 = vsel %vm1278, 1, 0
        %v3407 = vsel %vm1279, 1, 0
        %v3408 = vsel %vm1280, 1, 0
        %v3409 = vsel %vm1281, 1, 0
        %v3410 = vsel %vm1282, 1, 0
        %v3411 = vsel %vm1283, 1, 0
        %v3412 = vsel %vm1284, 1, 0
        %v3413 = vsel %vm1285, 1, 0
        %v3414 = vsel %vm1286, 1, 0
        %v3415 = vsel %vm1287, 1, 0
        %v3416 = vsel %vm1288, 1, 0
        %v3417 = vsel %vm1289, 1, 0
        %v3418 = vsel %vm1290, 1, 0
        %v3419 = vsel %vm1291, 1, 0
        %v3420 = vsel %vm1292, 1, 0
        %v3421 = vsel %vm1293, 1, 0
        %v3422 = vsel %vm1294, 1, 0
        %v3423 = vsel %vm1295, 1, 0
        %v3424 = vsel %vm1296, 1, 0
        %v3425 = vsel %vm1297, 1, 0
        %v3426 = vsel %vm1298, 1, 0
        %v3427 = vsel %vm1299, 1, 0
        %v3428 = vsel %vm1300, 1, 0
        %v3429 = vsel %vm1301, 1, 0
        %v3430 = vsel %vm1302, 1, 0
        %v3431 = vsel %vm1303, 1, 0
        %v3432 = vsel %vm1304, 1, 0
        %v3433 = vsel %vm1305, 1, 0
        %v3434 = vsel %vm1306, 1, 0
        %v3435 = vsel %vm1307, 1, 0
        %v3436 = vsel %vm1308, 1, 0
        %v3437 = vsel %vm1309, 1, 0
        %v3438 = vsel %vm1310, 1, 0
        %v3439 = vsel %vm1311, 1, 0
        %v3440 = vsel %vm1312, 1, 0
        %v3441 = vsel %vm1313, 1, 0
        %v3442 = vsel %vm1314, 1, 0
        %v3443 = vsel %vm1315, 1, 0
        %v3444 = vsel %vm1316, 1, 0
        %v3445 = vsel %vm1317, 1, 0
        %v3446 = vsel %vm1318, 1, 0
        %v3447 = vsel %vm1319, 1, 0
        %v3448 = vsel %vm1320, 1, 0
        %v3449 = vsel %vm1321, 1, 0
        %v3450 = vsel %vm1322, 1, 0
        %v3451 = vsel %vm1323, 1, 0
        %vm3452 = vcmp.eq.s32.totalorder %v3388, 1
        %vm3453 = vcmp.eq.s32.totalorder %v3389, 1
        %vm3454 = vcmp.eq.s32.totalorder %v3390, 1
        %vm3455 = vcmp.eq.s32.totalorder %v3391, 1
        %vm3456 = vcmp.eq.s32.totalorder %v3392, 1
        %vm3457 = vcmp.eq.s32.totalorder %v3393, 1
        %vm3458 = vcmp.eq.s32.totalorder %v3394, 1
        %vm3459 = vcmp.eq.s32.totalorder %v3395, 1
        %vm3460 = vcmp.eq.s32.totalorder %v3396, 1
        %vm3461 = vcmp.eq.s32.totalorder %v3397, 1
        %vm3462 = vcmp.eq.s32.totalorder %v3398, 1
        %vm3463 = vcmp.eq.s32.totalorder %v3399, 1
        %vm3464 = vcmp.eq.s32.totalorder %v3400, 1
        %vm3465 = vcmp.eq.s32.totalorder %v3401, 1
        %vm3466 = vcmp.eq.s32.totalorder %v3402, 1
        %vm3467 = vcmp.eq.s32.totalorder %v3403, 1
        %vm3468 = vcmp.eq.s32.totalorder %v3404, 1
        %vm3469 = vcmp.eq.s32.totalorder %v3405, 1
        %vm3470 = vcmp.eq.s32.totalorder %v3406, 1
        %vm3471 = vcmp.eq.s32.totalorder %v3407, 1
        %vm3472 = vcmp.eq.s32.totalorder %v3408, 1
        %vm3473 = vcmp.eq.s32.totalorder %v3409, 1
        %vm3474 = vcmp.eq.s32.totalorder %v3410, 1
        %vm3475 = vcmp.eq.s32.totalorder %v3411, 1
        %vm3476 = vcmp.eq.s32.totalorder %v3412, 1
        %vm3477 = vcmp.eq.s32.totalorder %v3413, 1
        %vm3478 = vcmp.eq.s32.totalorder %v3414, 1
        %vm3479 = vcmp.eq.s32.totalorder %v3415, 1
        %vm3480 = vcmp.eq.s32.totalorder %v3416, 1
        %vm3481 = vcmp.eq.s32.totalorder %v3417, 1
        %vm3482 = vcmp.eq.s32.totalorder %v3418, 1
        %vm3483 = vcmp.eq.s32.totalorder %v3419, 1
        %vm3484 = vcmp.eq.s32.totalorder %v3420, 1
        %vm3485 = vcmp.eq.s32.totalorder %v3421, 1
        %vm3486 = vcmp.eq.s32.totalorder %v3422, 1
        %vm3487 = vcmp.eq.s32.totalorder %v3423, 1
        %vm3488 = vcmp.eq.s32.totalorder %v3424, 1
        %vm3489 = vcmp.eq.s32.totalorder %v3425, 1
        %vm3490 = vcmp.eq.s32.totalorder %v3426, 1
        %vm3491 = vcmp.eq.s32.totalorder %v3427, 1
        %vm3492 = vcmp.eq.s32.totalorder %v3428, 1
        %vm3493 = vcmp.eq.s32.totalorder %v3429, 1
        %vm3494 = vcmp.eq.s32.totalorder %v3430, 1
        %vm3495 = vcmp.eq.s32.totalorder %v3431, 1
        %vm3496 = vcmp.eq.s32.totalorder %v3432, 1
        %vm3497 = vcmp.eq.s32.totalorder %v3433, 1
        %vm3498 = vcmp.eq.s32.totalorder %v3434, 1
        %vm3499 = vcmp.eq.s32.totalorder %v3435, 1
        %vm3500 = vcmp.eq.s32.totalorder %v3436, 1
        %vm3501 = vcmp.eq.s32.totalorder %v3437, 1
        %vm3502 = vcmp.eq.s32.totalorder %v3438, 1
        %vm3503 = vcmp.eq.s32.totalorder %v3439, 1
        %vm3504 = vcmp.eq.s32.totalorder %v3440, 1
        %vm3505 = vcmp.eq.s32.totalorder %v3441, 1
        %vm3506 = vcmp.eq.s32.totalorder %v3442, 1
        %vm3507 = vcmp.eq.s32.totalorder %v3443, 1
        %vm3508 = vcmp.eq.s32.totalorder %v3444, 1
        %vm3509 = vcmp.eq.s32.totalorder %v3445, 1
        %vm3510 = vcmp.eq.s32.totalorder %v3446, 1
        %vm3511 = vcmp.eq.s32.totalorder %v3447, 1
        %vm3512 = vcmp.eq.s32.totalorder %v3448, 1
        %vm3513 = vcmp.eq.s32.totalorder %v3449, 1
        %vm3514 = vcmp.eq.s32.totalorder %v3450, 1
        %vm3515 = vcmp.eq.s32.totalorder %v3451, 1
        %v3516 = vsel %vm3452, %v3324, 0.0
        %v3517 = vsel %vm3453, %v3325, 0.0
        %v3518 = vsel %vm3454, %v3326, 0.0
        %v3519 = vsel %vm3455, %v3327, 0.0
        %v3520 = vsel %vm3456, %v3328, 0.0
        %v3521 = vsel %vm3457, %v3329, 0.0
        %v3522 = vsel %vm3458, %v3330, 0.0
        %v3523 = vsel %vm3459, %v3331, 0.0
        %v3524 = vsel %vm3460, %v3332, 0.0
        %v3525 = vsel %vm3461, %v3333, 0.0
        %v3526 = vsel %vm3462, %v3334, 0.0
        %v3527 = vsel %vm3463, %v3335, 0.0
        %v3528 = vsel %vm3464, %v3336, 0.0
        %v3529 = vsel %vm3465, %v3337, 0.0
        %v3530 = vsel %vm3466, %v3338, 0.0
        %v3531 = vsel %vm3467, %v3339, 0.0
        %v3532 = vsel %vm3468, %v3340, 0.0
        %v3533 = vsel %vm3469, %v3341, 0.0
        %v3534 = vsel %vm3470, %v3342, 0.0
        %v3535 = vsel %vm3471, %v3343, 0.0
        %v3536 = vsel %vm3472, %v3344, 0.0
        %v3537 = vsel %vm3473, %v3345, 0.0
        %v3538 = vsel %vm3474, %v3346, 0.0
        %v3539 = vsel %vm3475, %v3347, 0.0
        %v3540 = vsel %vm3476, %v3348, 0.0
        %v3541 = vsel %vm3477, %v3349, 0.0
        %v3542 = vsel %vm3478, %v3350, 0.0
        %v3543 = vsel %vm3479, %v3351, 0.0
        %v3544 = vsel %vm3480, %v3352, 0.0
        %v3545 = vsel %vm3481, %v3353, 0.0
        %v3546 = vsel %vm3482, %v3354, 0.0
        %v3547 = vsel %vm3483, %v3355, 0.0
        %v3548 = vsel %vm3484, %v3356, 0.0
        %v3549 = vsel %vm3485, %v3357, 0.0
        %v3550 = vsel %vm3486, %v3358, 0.0
        %v3551 = vsel %vm3487, %v3359, 0.0
        %v3552 = vsel %vm3488, %v3360, 0.0
        %v3553 = vsel %vm3489, %v3361, 0.0
        %v3554 = vsel %vm3490, %v3362, 0.0
        %v3555 = vsel %vm3491, %v3363, 0.0
        %v3556 = vsel %vm3492, %v3364, 0.0
        %v3557 = vsel %vm3493, %v3365, 0.0
        %v3558 = vsel %vm3494, %v3366, 0.0
        %v3559 = vsel %vm3495, %v3367, 0.0
        %v3560 = vsel %vm3496, %v3368, 0.0
        %v3561 = vsel %vm3497, %v3369, 0.0
        %v3562 = vsel %vm3498, %v3370, 0.0
        %v3563 = vsel %vm3499, %v3371, 0.0
        %v3564 = vsel %vm3500, %v3372, 0.0
        %v3565 = vsel %vm3501, %v3373, 0.0
        %v3566 = vsel %vm3502, %v3374, 0.0
        %v3567 = vsel %vm3503, %v3375, 0.0
        %v3568 = vsel %vm3504, %v3376, 0.0
        %v3569 = vsel %vm3505, %v3377, 0.0
        %v3570 = vsel %vm3506, %v3378, 0.0
        %v3571 = vsel %vm3507, %v3379, 0.0
        %v3572 = vsel %vm3508, %v3380, 0.0
        %v3573 = vsel %vm3509, %v3381, 0.0
        %v3574 = vsel %vm3510, %v3382, 0.0
        %v3575 = vsel %vm3511, %v3383, 0.0
        %v3576 = vsel %vm3512, %v3384, 0.0
        %v3577 = vsel %vm3513, %v3385, 0.0
        %v3578 = vsel %vm3514, %v3386, 0.0
        %v3579 = vsel %vm3515, %v3387, 0.0
        %v3580 = vpack.c.bf16 %v3516, %v3516
        %v3581 = vpack.c.bf16 %v3517, %v3517
        %v3582 = vpack.c.bf16 %v3518, %v3518
        %v3583 = vpack.c.bf16 %v3519, %v3519
        %v3584 = vpack.c.bf16 %v3520, %v3520
        %v3585 = vpack.c.bf16 %v3521, %v3521
        %v3586 = vpack.c.bf16 %v3522, %v3522
        %v3587 = vpack.c.bf16 %v3523, %v3523
        %v3588 = vpack.c.bf16 %v3524, %v3524
        %v3589 = vpack.c.bf16 %v3525, %v3525
        %v3590 = vpack.c.bf16 %v3526, %v3526
        %v3591 = vpack.c.bf16 %v3527, %v3527
        %v3592 = vpack.c.bf16 %v3528, %v3528
        %v3593 = vpack.c.bf16 %v3529, %v3529
        %v3594 = vpack.c.bf16 %v3530, %v3530
        %v3595 = vpack.c.bf16 %v3531, %v3531
        %v3596 = vpack.c.bf16 %v3532, %v3532
        %v3597 = vpack.c.bf16 %v3533, %v3533
        %v3598 = vpack.c.bf16 %v3534, %v3534
        %v3599 = vpack.c.bf16 %v3535, %v3535
        %v3600 = vpack.c.bf16 %v3536, %v3536
        %v3601 = vpack.c.bf16 %v3537, %v3537
        %v3602 = vpack.c.bf16 %v3538, %v3538
        %v3603 = vpack.c.bf16 %v3539, %v3539
        %v3604 = vpack.c.bf16 %v3540, %v3540
        %v3605 = vpack.c.bf16 %v3541, %v3541
        %v3606 = vpack.c.bf16 %v3542, %v3542
        %v3607 = vpack.c.bf16 %v3543, %v3543
        %v3608 = vpack.c.bf16 %v3544, %v3544
        %v3609 = vpack.c.bf16 %v3545, %v3545
        %v3610 = vpack.c.bf16 %v3546, %v3546
        %v3611 = vpack.c.bf16 %v3547, %v3547
        %v3612 = vpack.c.bf16 %v3548, %v3548
        %v3613 = vpack.c.bf16 %v3549, %v3549
        %v3614 = vpack.c.bf16 %v3550, %v3550
        %v3615 = vpack.c.bf16 %v3551, %v3551
        %v3616 = vpack.c.bf16 %v3552, %v3552
        %v3617 = vpack.c.bf16 %v3553, %v3553
        %v3618 = vpack.c.bf16 %v3554, %v3554
        %v3619 = vpack.c.bf16 %v3555, %v3555
        %v3620 = vpack.c.bf16 %v3556, %v3556
        %v3621 = vpack.c.bf16 %v3557, %v3557
        %v3622 = vpack.c.bf16 %v3558, %v3558
        %v3623 = vpack.c.bf16 %v3559, %v3559
        %v3624 = vpack.c.bf16 %v3560, %v3560
        %v3625 = vpack.c.bf16 %v3561, %v3561
        %v3626 = vpack.c.bf16 %v3562, %v3562
        %v3627 = vpack.c.bf16 %v3563, %v3563
        %v3628 = vpack.c.bf16 %v3564, %v3564
        %v3629 = vpack.c.bf16 %v3565, %v3565
        %v3630 = vpack.c.bf16 %v3566, %v3566
        %v3631 = vpack.c.bf16 %v3567, %v3567
        %v3632 = vpack.c.bf16 %v3568, %v3568
        %v3633 = vpack.c.bf16 %v3569, %v3569
        %v3634 = vpack.c.bf16 %v3570, %v3570
        %v3635 = vpack.c.bf16 %v3571, %v3571
        %v3636 = vpack.c.bf16 %v3572, %v3572
        %v3637 = vpack.c.bf16 %v3573, %v3573
        %v3638 = vpack.c.bf16 %v3574, %v3574
        %v3639 = vpack.c.bf16 %v3575, %v3575
        %v3640 = vpack.c.bf16 %v3576, %v3576
        %v3641 = vpack.c.bf16 %v3577, %v3577
        %v3642 = vpack.c.bf16 %v3578, %v3578
        %v3643 = vpack.c.bf16 %v3579, %v3579
        %s3644 = smul.u32 %s1342, 72
        %s3645 = smul.addr %s3644, 4
        %s3646 = scalar_lea.vmem [#allocation2], %s3645
        %3647 = vst.msk [vmem:[%s3646 + $0x10] sm:$0xf] %vm217, %v3580
        %3648 = vst.msk [vmem:[%s3646 + $0x14] sm:$0xf] %vm217, %v3581
        %3649 = vst.msk [vmem:[%s3646 + $0x18] sm:$0xf] %vm217, %v3582
        %3650 = vst.msk [vmem:[%s3646 + $0x1c] sm:$0xf] %vm217, %v3583
        %3651 = vst.msk [vmem:[%s3646 + $0x20] sm:$0xf] %vm217, %v3584
        %3652 = vst.msk [vmem:[%s3646 + $0x24] sm:$0xf] %vm217, %v3585
        %3653 = vst.msk [vmem:[%s3646 + $0x28] sm:$0xf] %vm217, %v3586
        %3654 = vst.msk [vmem:[%s3646 + $0x2c] sm:$0xf] %vm217, %v3587
        %3655 = vst.msk [vmem:[%s3646 + $0x30] sm:$0xf] %vm217, %v3588
        %3656 = vst.msk [vmem:[%s3646 + $0x34] sm:$0xf] %vm217, %v3589
        %3657 = vst.msk [vmem:[%s3646 + $0x38] sm:$0xf] %vm217, %v3590
        %3658 = vst.msk [vmem:[%s3646 + $0x3c] sm:$0xf] %vm217, %v3591
        %3659 = vst.msk [vmem:[%s3646 + $0x40] sm:$0xf] %vm217, %v3592
        %3660 = vst.msk [vmem:[%s3646 + $0x44] sm:$0xf] %vm217, %v3593
        %3661 = vst.msk [vmem:[%s3646 + $0x48] sm:$0xf] %vm217, %v3594
        %3662 = vst.msk [vmem:[%s3646 + $0x4c] sm:$0xf] %vm217, %v3595
        %3663 = vst.msk [vmem:[%s3646 + $0x50] sm:$0xf] %vm217, %v3596
        %3664 = vst.msk [vmem:[%s3646 + $0x54] sm:$0xf] %vm217, %v3597
        %3665 = vst.msk [vmem:[%s3646 + $0x58] sm:$0xf] %vm217, %v3598
        %3666 = vst.msk [vmem:[%s3646 + $0x5c] sm:$0xf] %vm217, %v3599
        %3667 = vst.msk [vmem:[%s3646 + $0x60] sm:$0xf] %vm217, %v3600
        %3668 = vst.msk [vmem:[%s3646 + $0x64] sm:$0xf] %vm217, %v3601
        %3669 = vst.msk [vmem:[%s3646 + $0x68] sm:$0xf] %vm217, %v3602
        %3670 = vst.msk [vmem:[%s3646 + $0x6c] sm:$0xf] %vm217, %v3603
        %3671 = vst.msk [vmem:[%s3646 + $0x70] sm:$0xf] %vm217, %v3604
        %3672 = vst.msk [vmem:[%s3646 + $0x74] sm:$0xf] %vm217, %v3605
        %3673 = vst.msk [vmem:[%s3646 + $0x78] sm:$0xf] %vm217, %v3606
        %3674 = vst.msk [vmem:[%s3646 + $0x7c] sm:$0xf] %vm217, %v3607
        %3675 = vst.msk [vmem:[%s3646 + $0x80] sm:$0xf] %vm217, %v3608
        %3676 = vst.msk [vmem:[%s3646 + $0x84] sm:$0xf] %vm217, %v3609
        %3677 = vst.msk [vmem:[%s3646 + $0x88] sm:$0xf] %vm217, %v3610
        %3678 = vst.msk [vmem:[%s3646 + $0x8c] sm:$0xf] %vm217, %v3611
        %3679 = vst.msk [vmem:[%s3646 + $0x90] sm:$0xf] %vm217, %v3612
        %3680 = vst.msk [vmem:[%s3646 + $0x94] sm:$0xf] %vm217, %v3613
        %3681 = vst.msk [vmem:[%s3646 + $0x98] sm:$0xf] %vm217, %v3614
        %3682 = vst.msk [vmem:[%s3646 + $0x9c] sm:$0xf] %vm217, %v3615
        %3683 = vst.msk [vmem:[%s3646 + $0xa0] sm:$0xf] %vm217, %v3616
        %3684 = vst.msk [vmem:[%s3646 + $0xa4] sm:$0xf] %vm217, %v3617
        %3685 = vst.msk [vmem:[%s3646 + $0xa8] sm:$0xf] %vm217, %v3618
        %3686 = vst.msk [vmem:[%s3646 + $0xac] sm:$0xf] %vm217, %v3619
        %3687 = vst.msk [vmem:[%s3646 + $0xb0] sm:$0xf] %vm217, %v3620
        %3688 = vst.msk [vmem:[%s3646 + $0xb4] sm:$0xf] %vm217, %v3621
        %3689 = vst.msk [vmem:[%s3646 + $0xb8] sm:$0xf] %vm217, %v3622
        %3690 = vst.msk [vmem:[%s3646 + $0xbc] sm:$0xf] %vm217, %v3623
        %3691 = vst.msk [vmem:[%s3646 + $0xc0] sm:$0xf] %vm217, %v3624
        %3692 = vst.msk [vmem:[%s3646 + $0xc4] sm:$0xf] %vm217, %v3625
        %3693 = vst.msk [vmem:[%s3646 + $0xc8] sm:$0xf] %vm217, %v3626
        %3694 = vst.msk [vmem:[%s3646 + $0xcc] sm:$0xf] %vm217, %v3627
        %3695 = vst.msk [vmem:[%s3646 + $0xd0] sm:$0xf] %vm217, %v3628
        %3696 = vst.msk [vmem:[%s3646 + $0xd4] sm:$0xf] %vm217, %v3629
        %3697 = vst.msk [vmem:[%s3646 + $0xd8] sm:$0xf] %vm217, %v3630
        %3698 = vst.msk [vmem:[%s3646 + $0xdc] sm:$0xf] %vm217, %v3631
        %3699 = vst.msk [vmem:[%s3646 + $0xe0] sm:$0xf] %vm217, %v3632
        %3700 = vst.msk [vmem:[%s3646 + $0xe4] sm:$0xf] %vm217, %v3633
        %3701 = vst.msk [vmem:[%s3646 + $0xe8] sm:$0xf] %vm217, %v3634
        %3702 = vst.msk [vmem:[%s3646 + $0xec] sm:$0xf] %vm217, %v3635
        %3703 = vst.msk [vmem:[%s3646 + $0xf0] sm:$0xf] %vm217, %v3636
        %3704 = vst.msk [vmem:[%s3646 + $0xf4] sm:$0xf] %vm217, %v3637
        %3705 = vst.msk [vmem:[%s3646 + $0xf8] sm:$0xf] %vm217, %v3638
        %3706 = vst.msk [vmem:[%s3646 + $0xfc] sm:$0xf] %vm217, %v3639
        %3707 = vst.msk [vmem:[%s3646 + $0x100] sm:$0xf] %vm217, %v3640
        %3708 = vst.msk [vmem:[%s3646 + $0x104] sm:$0xf] %vm217, %v3641
        %3709 = vst.msk [vmem:[%s3646 + $0x108] sm:$0xf] %vm217, %v3642
        %3710 = vst.msk [vmem:[%s3646 + $0x10c] sm:$0xf] %vm217, %v3643
      $region33: #{dncnn_forward.1} parent=27 // loop_footer
        %s1329 = sadd.s32 1, %s1325
      $region34: #{dncnn_forward.1} parent=27 // loop_footer_branch
        %1324 = sbr.rel target = $region30
      $region35: #{dncnn_forward.1} parent=27 // loop_exit
        _
      %v3711 = vld [vmem:[#allocation2 + $0x10] sm:$0xf]
      %v3712 = vld [vmem:[#allocation2 + $0x14] sm:$0xf]
      %v3713 = vld [vmem:[#allocation2 + $0x18] sm:$0xf]
      %v3714 = vld [vmem:[#allocation2 + $0x1c] sm:$0xf]
      %v3715 = vld [vmem:[#allocation2 + $0x20] sm:$0xf]
      %v3716 = vld [vmem:[#allocation2 + $0x24] sm:$0xf]
      %v3717 = vld [vmem:[#allocation2 + $0x28] sm:$0xf]
      %v3718 = vld [vmem:[#allocation2 + $0x2c] sm:$0xf]
      %v3719 = vld [vmem:[#allocation2 + $0x30] sm:$0xf]
      %v3720 = vld [vmem:[#allocation2 + $0x34] sm:$0xf]
      %v3721 = vld [vmem:[#allocation2 + $0x38] sm:$0xf]
      %v3722 = vld [vmem:[#allocation2 + $0x3c] sm:$0xf]
      %v3723 = vld [vmem:[#allocation2 + $0x40] sm:$0xf]
      %v3724 = vld [vmem:[#allocation2 + $0x44] sm:$0xf]
      %v3725 = vld [vmem:[#allocation2 + $0x48] sm:$0xf]
      %v3726 = vld [vmem:[#allocation2 + $0x4c] sm:$0xf]
      %v3727 = vld [vmem:[#allocation2 + $0x50] sm:$0xf]
      %v3728 = vld [vmem:[#allocation2 + $0x54] sm:$0xf]
      %v3729 = vld [vmem:[#allocation2 + $0x58] sm:$0xf]
      %v3730 = vld [vmem:[#allocation2 + $0x5c] sm:$0xf]
      %v3731 = vld [vmem:[#allocation2 + $0x60] sm:$0xf]
      %v3732 = vld [vmem:[#allocation2 + $0x64] sm:$0xf]
      %v3733 = vld [vmem:[#allocation2 + $0x68] sm:$0xf]
      %v3734 = vld [vmem:[#allocation2 + $0x6c] sm:$0xf]
      %v3735 = vld [vmem:[#allocation2 + $0x70] sm:$0xf]
      %v3736 = vld [vmem:[#allocation2 + $0x74] sm:$0xf]
      %v3737 = vld [vmem:[#allocation2 + $0x78] sm:$0xf]
      %v3738 = vld [vmem:[#allocation2 + $0x7c] sm:$0xf]
      %v3739 = vld [vmem:[#allocation2 + $0x80] sm:$0xf]
      %v3740 = vld [vmem:[#allocation2 + $0x84] sm:$0xf]
      %v3741 = vld [vmem:[#allocation2 + $0x88] sm:$0xf]
      %v3742 = vld [vmem:[#allocation2 + $0x8c] sm:$0xf]
      %v3743 = vld [vmem:[#allocation2 + $0x90] sm:$0xf]
      %v3744 = vld [vmem:[#allocation2 + $0x94] sm:$0xf]
      %v3745 = vld [vmem:[#allocation2 + $0x98] sm:$0xf]
      %v3746 = vld [vmem:[#allocation2 + $0x9c] sm:$0xf]
      %v3747 = vld [vmem:[#allocation2 + $0xa0] sm:$0xf]
      %v3748 = vld [vmem:[#allocation2 + $0xa4] sm:$0xf]
      %v3749 = vld [vmem:[#allocation2 + $0xa8] sm:$0xf]
      %v3750 = vld [vmem:[#allocation2 + $0xac] sm:$0xf]
      %v3751 = vld [vmem:[#allocation2 + $0xb0] sm:$0xf]
      %v3752 = vld [vmem:[#allocation2 + $0xb4] sm:$0xf]
      %v3753 = vld [vmem:[#allocation2 + $0xb8] sm:$0xf]
      %v3754 = vld [vmem:[#allocation2 + $0xbc] sm:$0xf]
      %v3755 = vld [vmem:[#allocation2 + $0xc0] sm:$0xf]
      %v3756 = vld [vmem:[#allocation2 + $0xc4] sm:$0xf]
      %v3757 = vld [vmem:[#allocation2 + $0xc8] sm:$0xf]
      %v3758 = vld [vmem:[#allocation2 + $0xcc] sm:$0xf]
      %v3759 = vld [vmem:[#allocation2 + $0xd0] sm:$0xf]
      %v3760 = vld [vmem:[#allocation2 + $0xd4] sm:$0xf]
      %v3761 = vld [vmem:[#allocation2 + $0xd8] sm:$0xf]
      %v3762 = vld [vmem:[#allocation2 + $0xdc] sm:$0xf]
      %v3763 = vld [vmem:[#allocation2 + $0xe0] sm:$0xf]
      %v3764 = vld [vmem:[#allocation2 + $0xe4] sm:$0xf]
      %v3765 = vld [vmem:[#allocation2 + $0xe8] sm:$0xf]
      %v3766 = vld [vmem:[#allocation2 + $0xec] sm:$0xf]
      %v3767 = vld [vmem:[#allocation2 + $0xf0] sm:$0xf]
      %v3768 = vld [vmem:[#allocation2 + $0xf4] sm:$0xf]
      %v3769 = vld [vmem:[#allocation2 + $0xf8] sm:$0xf]
      %v3770 = vld [vmem:[#allocation2 + $0xfc] sm:$0xf]
      %v3771 = vld [vmem:[#allocation2 + $0x100] sm:$0xf]
      %v3772 = vld [vmem:[#allocation2 + $0x104] sm:$0xf]
      %v3773 = vld [vmem:[#allocation2 + $0x108] sm:$0xf]
      %v3774 = vld [vmem:[#allocation2 + $0x10c] sm:$0xf]
      %3775 = vst.msk [vmem:[%s143] sm:$0xf] %vm217, %v3711
      %3776 = vst.msk [vmem:[%s143 + $0x4] sm:$0xf] %vm217, %v3712
      %3777 = vst.msk [vmem:[%s143 + $0x8] sm:$0xf] %vm217, %v3713
      %3778 = vst.msk [vmem:[%s143 + $0xc] sm:$0xf] %vm217, %v3714
      %3779 = vst.msk [vmem:[%s143 + $0x10] sm:$0xf] %vm217, %v3715
      %3780 = vst.msk [vmem:[%s143 + $0x14] sm:$0xf] %vm217, %v3716
      %3781 = vst.msk [vmem:[%s143 + $0x18] sm:$0xf] %vm217, %v3717
      %3782 = vst.msk [vmem:[%s143 + $0x1c] sm:$0xf] %vm217, %v3718
      %3783 = vst.msk [vmem:[%s143 + $0x20] sm:$0xf] %vm217, %v3719
      %3784 = vst.msk [vmem:[%s143 + $0x24] sm:$0xf] %vm217, %v3720
      %3785 = vst.msk [vmem:[%s143 + $0x28] sm:$0xf] %vm217, %v3721
      %3786 = vst.msk [vmem:[%s143 + $0x2c] sm:$0xf] %vm217, %v3722
      %3787 = vst.msk [vmem:[%s143 + $0x30] sm:$0xf] %vm217, %v3723
      %3788 = vst.msk [vmem:[%s143 + $0x34] sm:$0xf] %vm217, %v3724
      %3789 = vst.msk [vmem:[%s143 + $0x38] sm:$0xf] %vm217, %v3725
      %3790 = vst.msk [vmem:[%s143 + $0x3c] sm:$0xf] %vm217, %v3726
      %3791 = vst.msk [vmem:[%s143 + $0x40] sm:$0xf] %vm217, %v3727
      %3792 = vst.msk [vmem:[%s143 + $0x44] sm:$0xf] %vm217, %v3728
      %3793 = vst.msk [vmem:[%s143 + $0x48] sm:$0xf] %vm217, %v3729
      %3794 = vst.msk [vmem:[%s143 + $0x4c] sm:$0xf] %vm217, %v3730
      %3795 = vst.msk [vmem:[%s143 + $0x50] sm:$0xf] %vm217, %v3731
      %3796 = vst.msk [vmem:[%s143 + $0x54] sm:$0xf] %vm217, %v3732
      %3797 = vst.msk [vmem:[%s143 + $0x58] sm:$0xf] %vm217, %v3733
      %3798 = vst.msk [vmem:[%s143 + $0x5c] sm:$0xf] %vm217, %v3734
      %3799 = vst.msk [vmem:[%s143 + $0x60] sm:$0xf] %vm217, %v3735
      %3800 = vst.msk [vmem:[%s143 + $0x64] sm:$0xf] %vm217, %v3736
      %3801 = vst.msk [vmem:[%s143 + $0x68] sm:$0xf] %vm217, %v3737
      %3802 = vst.msk [vmem:[%s143 + $0x6c] sm:$0xf] %vm217, %v3738
      %3803 = vst.msk [vmem:[%s143 + $0x70] sm:$0xf] %vm217, %v3739
      %3804 = vst.msk [vmem:[%s143 + $0x74] sm:$0xf] %vm217, %v3740
      %3805 = vst.msk [vmem:[%s143 + $0x78] sm:$0xf] %vm217, %v3741
      %3806 = vst.msk [vmem:[%s143 + $0x7c] sm:$0xf] %vm217, %v3742
      %3807 = vst.msk [vmem:[%s143 + $0x80] sm:$0xf] %vm217, %v3743
      %3808 = vst.msk [vmem:[%s143 + $0x84] sm:$0xf] %vm217, %v3744
      %3809 = vst.msk [vmem:[%s143 + $0x88] sm:$0xf] %vm217, %v3745
      %3810 = vst.msk [vmem:[%s143 + $0x8c] sm:$0xf] %vm217, %v3746
      %3811 = vst.msk [vmem:[%s143 + $0x90] sm:$0xf] %vm217, %v3747
      %3812 = vst.msk [vmem:[%s143 + $0x94] sm:$0xf] %vm217, %v3748
      %3813 = vst.msk [vmem:[%s143 + $0x98] sm:$0xf] %vm217, %v3749
      %3814 = vst.msk [vmem:[%s143 + $0x9c] sm:$0xf] %vm217, %v3750
      %3815 = vst.msk [vmem:[%s143 + $0xa0] sm:$0xf] %vm217, %v3751
      %3816 = vst.msk [vmem:[%s143 + $0xa4] sm:$0xf] %vm217, %v3752
      %3817 = vst.msk [vmem:[%s143 + $0xa8] sm:$0xf] %vm217, %v3753
      %3818 = vst.msk [vmem:[%s143 + $0xac] sm:$0xf] %vm217, %v3754
      %3819 = vst.msk [vmem:[%s143 + $0xb0] sm:$0xf] %vm217, %v3755
      %3820 = vst.msk [vmem:[%s143 + $0xb4] sm:$0xf] %vm217, %v3756
      %3821 = vst.msk [vmem:[%s143 + $0xb8] sm:$0xf] %vm217, %v3757
      %3822 = vst.msk [vmem:[%s143 + $0xbc] sm:$0xf] %vm217, %v3758
      %3823 = vst.msk [vmem:[%s143 + $0xc0] sm:$0xf] %vm217, %v3759
      %3824 = vst.msk [vmem:[%s143 + $0xc4] sm:$0xf] %vm217, %v3760
      %3825 = vst.msk [vmem:[%s143 + $0xc8] sm:$0xf] %vm217, %v3761
      %3826 = vst.msk [vmem:[%s143 + $0xcc] sm:$0xf] %vm217, %v3762
      %3827 = vst.msk [vmem:[%s143 + $0xd0] sm:$0xf] %vm217, %v3763
      %3828 = vst.msk [vmem:[%s143 + $0xd4] sm:$0xf] %vm217, %v3764
      %3829 = vst.msk [vmem:[%s143 + $0xd8] sm:$0xf] %vm217, %v3765
      %3830 = vst.msk [vmem:[%s143 + $0xdc] sm:$0xf] %vm217, %v3766
      %3831 = vst.msk [vmem:[%s143 + $0xe0] sm:$0xf] %vm217, %v3767
      %3832 = vst.msk [vmem:[%s143 + $0xe4] sm:$0xf] %vm217, %v3768
      %3833 = vst.msk [vmem:[%s143 + $0xe8] sm:$0xf] %vm217, %v3769
      %3834 = vst.msk [vmem:[%s143 + $0xec] sm:$0xf] %vm217, %v3770
      %3835 = vst.msk [vmem:[%s143 + $0xf0] sm:$0xf] %vm217, %v3771
      %3836 = vst.msk [vmem:[%s143 + $0xf4] sm:$0xf] %vm217, %v3772
      %3837 = vst.msk [vmem:[%s143 + $0xf8] sm:$0xf] %vm217, %v3773
      %3838 = vst.msk [vmem:[%s143 + $0xfc] sm:$0xf] %vm217, %v3774
      %p3839 = scmp.lt.s32.totalorder %s13, 1
      %s3840 = scalar_select %p3839, %s13, 1
      %s3841 = smul.addr %s3840, 64
      %s3842 = smul.addr %s3841, 4
      %s3843 = scalar_lea.vmem %s2, %s3842
      // Predicated region
      $region36: #{dncnn_forward.1} parent=27 // pred_check
        %p3844 = pneg %p78
      $region37: #{dncnn_forward.1} parent=27 // pred_check_branch
        %3846 = sbr.rel (%p3844) target = $region39
      $region38: #{dncnn_forward.1} parent=27 // pred_region
        _
      $region39: #{dncnn_forward.1} parent=27 // pred_fallthru
        _
    $region28: #{dncnn_forward.1} parent=5 // pred_fallthru
      _
    %p3847 = scmp.le.s32.totalorder 2, %s8
    // Predicated region
    $region40: #{dncnn_forward.1} parent=5 // pred_check
      %p3848 = pneg %p3847
    $region41: #{dncnn_forward.1} parent=5 // pred_check_branch
      %3850 = sbr.rel (%p3848) target = $region43
    $region42: #{dncnn_forward.1} parent=5 // pred_region
      %s3851 = ssub.s32 %s8, 2
      // Predicated region
      $region44: #{dncnn_forward.1} parent=42 // pred_check
        %p3852 = pneg %p84
      $region45: #{dncnn_forward.1} parent=42 // pred_check_branch
        %3854 = sbr.rel (%p3852) target = $region47
      $region46: #{dncnn_forward.1} parent=42 // pred_region
        %p3855 = scmp.lt.s32.totalorder %s14, 1
        %s3856 = scalar_select %p3855, %s14, 1
        %s3857 = smul.addr %s3856, 64
        %s3858 = smul.addr %s3857, 4
        %s3859 = scalar_lea.vmem %s2, %s3858
      $region47: #{dncnn_forward.1} parent=42 // pred_fallthru
        _
    $region43: #{dncnn_forward.1} parent=5 // pred_fallthru
      _
  $region6: #{dncnn_forward.1} parent=0 // loop_footer
    %s12 = sadd.s32 1, %s8
  $region7: #{dncnn_forward.1} parent=0 // loop_footer_branch
    %7 = sbr.rel target = $region3
  $region8: #{dncnn_forward.1} parent=0 // loop_exit
    _

</llo_original>
